<compile_context>
chip_gen: v5e
topology: v5e:2x2
jax: 0.10.0
libtpu: 0.0.40
codegen_flags: <defaults>
</compile_context>

<pallas_src>
import math

import jax
import jax.numpy as jnp
from jax.experimental import pallas as pl
from jax.experimental.pallas import tpu as pltpu


def _layer_norm(x, gamma, beta, eps=1e-5):
    mean = jnp.mean(x, axis=-1, keepdims=True)
    var = jnp.mean((x - mean) ** 2, axis=-1, keepdims=True)
    return (x - mean) * jax.lax.rsqrt(var + eps) * gamma + beta


def make_encoder_layer_kernel(Tq, Tk, D, n_heads):
    H = n_heads
    Dh = D // H
    scale = 1.0 / math.sqrt(Dh)

    def kernel(xq_ref, k_ref, v_ref,
               wq_ref, bq_ref, wo_ref, bo_ref,
               w1_ref, b1_ref, w2_ref, b2_ref,
               g1_ref, be1_ref, g2_ref, be2_ref,
               o_ref,
               q_sc, acc_sc, m_sc, l_sc):
        ki = pl.program_id(2)

        # ---- first KV tile: Q projection (single full-width matmul) + init state
        @pl.when(ki == 0)
        def _init():
            xq = xq_ref[...].astype(jnp.bfloat16)                       # (Tq, D)
            q_full = jnp.dot(xq, wq_ref[...],
                             preferred_element_type=jnp.float32) + bq_ref[...]
            q_full = q_full * scale          # fold softmax scale into q
            for h in range(H):               # static lane slices -> head-major scratch
                q_sc[h] = q_full[:, h * Dh:(h + 1) * Dh].astype(jnp.bfloat16)
            m_sc[...] = jnp.full((H, Tq, 1), -jnp.inf, dtype=jnp.float32)
            l_sc[...] = jnp.zeros((H, Tq, 1), dtype=jnp.float32)
            acc_sc[...] = jnp.zeros((H, Tq, Dh), dtype=jnp.float32)

        # ---- one KV tile: online softmax update (K/V are precomputed bf16) ----
        k_t = k_ref[...]                                                # (H, Tk, Dh)
        v_t = v_ref[...]                                                # (H, Tk, Dh)
        s = jnp.einsum("hqd,hkd->hqk", q_sc[...], k_t,
                       preferred_element_type=jnp.float32)              # (H, Tq, Tk)
        m_prev = m_sc[...]
        m_new = jnp.maximum(m_prev, jnp.max(s, axis=-1, keepdims=True))
        alpha = jnp.exp(m_prev - m_new)
        p = jnp.exp(s - m_new)
        l_sc[...] = alpha * l_sc[...] + jnp.sum(p, axis=-1, keepdims=True)
        acc_sc[...] = alpha * acc_sc[...] + jnp.einsum(
            "hqk,hkd->hqd", p.astype(jnp.bfloat16), v_t,
            preferred_element_type=jnp.float32)
        m_sc[...] = m_new

        # ---- last KV tile: out-proj, residual+LN1, FFN (1x1 conv), residual+LN2
        @pl.when(ki == pl.num_programs(2) - 1)
        def _finalize():
            # Out-projection: per-head full-width (Tq,Dh)@(Dh,D) dots accumulated
            # into one (Tq, D) f32 value -- no (H,Tq,D) intermediate.
            attn0 = (acc_sc[0] * pl.reciprocal(l_sc[0], approx=True)
                     ).astype(jnp.bfloat16)
            new_x = jnp.dot(attn0, wo_ref[0], preferred_element_type=jnp.float32)
            for h in range(1, H):
                attn_h = (acc_sc[h] * pl.reciprocal(l_sc[h], approx=True)
                          ).astype(jnp.bfloat16)
                new_x = new_x + jnp.dot(attn_h, wo_ref[h],
                                        preferred_element_type=jnp.float32)
            new_x = new_x + bo_ref[...]

            x1 = _layer_norm(xq_ref[...] + new_x, g1_ref[...], be1_ref[...])

            y = jnp.dot(x1.astype(jnp.bfloat16), w1_ref[...],
                        preferred_element_type=jnp.float32) + b1_ref[...]
            y = jnp.maximum(y, 0.0)                                     # relu
            y = jnp.dot(y.astype(jnp.bfloat16), w2_ref[...],
                        preferred_element_type=jnp.float32) + b2_ref[...]

            out = _layer_norm(x1 + y, g2_ref[...], be2_ref[...])
            o_ref[...] = out.astype(o_ref.dtype)

    return kernel


def encoder_layer(x, params, n_heads, *, tq=256, tk=256):
    """x: (B, L, D) float32.  Fused transformer encoder layer (eval mode)."""
    B, L, D = x.shape
    d_ff = params["w1"].shape[1]
    H = n_heads
    Dh = D // H
    tq, tk = min(tq, L), min(tk, L)
    assert L % tq == 0 and L % tk == 0 and D % H == 0

    bf16, f32 = jnp.bfloat16, jnp.float32
    x_bf = x.astype(bf16)

    # K/V projections hoisted out of the kernel (done once, not per query tile);
    # stored head-major (B, H, L, Dh) in bf16 to halve their HBM reload traffic.
    def project_heads(w, b):
        y = jnp.einsum("bld,df->blf", x_bf, w.astype(bf16),
                       preferred_element_type=f32) + b
        return y.reshape(B, L, H, Dh).transpose(0, 2, 1, 3).astype(bf16)

    k_heads = project_heads(params["wk"], params["bk"])
    v_heads = project_heads(params["wv"], params["bv"])

    weights = [
        params["wq"].astype(bf16), params["bq"].astype(f32),      # (D,D), (1,D)
        params["wo"].reshape(H, Dh, D).astype(bf16),              # per-head rows of wo
        params["bo"].astype(f32),
        params["w1"].astype(bf16), params["b1"].astype(f32),      # conv1 (1x1)
        params["w2"].astype(bf16), params["b2"].astype(f32),      # conv2 (1x1)
        params["g1"].astype(f32), params["be1"].astype(f32),
        params["g2"].astype(f32), params["be2"].astype(f32),
    ]

    kernel = make_encoder_layer_kernel(tq, tk, D, H)
    nq, nk = L // tq, L // tk

    # Weights: whole-array, resident in VMEM (constant index -> not pipelined /
    # not double-buffered).
    vmem_weight_spec = pl.BlockSpec(memory_space=pltpu.MemorySpace.VMEM)
    in_specs = [
        pl.BlockSpec((None, tq, D), lambda b, qi, ki: (b, qi, 0)),          # x query tile
        pl.BlockSpec((None, H, tk, Dh), lambda b, qi, ki: (b, 0, ki, 0)),   # K tile
        pl.BlockSpec((None, H, tk, Dh), lambda b, qi, ki: (b, 0, ki, 0)),   # V tile
    ] + [vmem_weight_spec] * len(weights)

    # --- explicit VMEM budget (resident weights + double-buffered tiles + scratch)
    weight_bytes = sum(int(w.size) * w.dtype.itemsize for w in weights)
    tile_bytes = (tq * D * 4                    # x query tile (f32)
                  + 2 * H * tk * Dh * 2         # K + V tiles (bf16)
                  + tq * D * 4)                 # output tile (f32)
    scratch_bytes = H * tq * Dh * (2 + 4) + 2 * H * tq * 4
    temp_bytes = tq * d_ff * 4 + 4 * tq * D * 4  # FFN intermediate + LN temporaries
    vmem_limit = int(1.5 * (weight_bytes + 2 * tile_bytes + scratch_bytes + temp_bytes))
    vmem_limit = max(32 << 20, min(vmem_limit, 100 << 20))
    # NOTE: on v7x (64 MiB VMEM) halve tq/tk (and chunk the FFN) if this budget
    # exceeds ~48 MiB at large D/d_ff.

    # Kernel-only cost (K/V projection now runs outside the kernel).
    flops = B * (4 * L * D * D + 4 * L * L * D + 4 * L * D * d_ff)
    transcendentals = B * H * L * L
    bytes_accessed = (x.size * x.dtype.itemsize          # x read
                      + 2 * nq * B * L * D * 2           # K/V bf16, re-read per query tile
                      + B * L * D * 4                    # output
                      + weight_bytes)

    return pl.pallas_call(
        kernel,
        out_shape=jax.ShapeDtypeStruct((B, L, D), x.dtype),
        grid_spec=pltpu.PrefetchScalarGridSpec(
            num_scalar_prefetch=0,
            grid=(B, nq, nk),
            in_specs=in_specs,
            out_specs=pl.BlockSpec((None, tq, D), lambda b, qi, ki: (b, qi, 0)),
            scratch_shapes=[
                pltpu.VMEM((H, tq, Dh), jnp.bfloat16),   # q (pre-scaled, head-major)
                pltpu.VMEM((H, tq, Dh), jnp.float32),    # output accumulator
                pltpu.VMEM((H, tq, 1), jnp.float32),     # running max
                pltpu.VMEM((H, tq, 1), jnp.float32),     # running denominator
            ]),
        compiler_params=pltpu.CompilerParams(
            dimension_semantics=("parallel", "parallel", "arbitrary"),
            vmem_limit_bytes=vmem_limit),
        cost_estimate=pl.CostEstimate(
            flops=flops, transcendentals=transcendentals,
            bytes_accessed=bytes_accessed),
    )(x, k_heads, v_heads, *weights)


def reference_encoder_layer(x, params, n_heads):
    """Pure-JAX f32 reference (mirrors PyTorch semantics, eval mode)."""
    B, L, D = x.shape
    Dh = D // n_heads
    scale = 1.0 / math.sqrt(Dh)

    q = x @ params["wq"] + params["bq"]
    k = x @ params["wk"] + params["bk"]
    v = x @ params["wv"] + params["bv"]

    def split(t):
        return t.reshape(B, L, n_heads, Dh).transpose(0, 2, 1, 3)   # (B,H,L,Dh)

    qh, kh, vh = split(q), split(k), split(v)
    s = jnp.einsum("bhld,bhmd->bhlm", qh, kh) * scale
    p = jax.nn.softmax(s, axis=-1)
    o = jnp.einsum("bhlm,bhmd->bhld", p, vh).transpose(0, 2, 1, 3).reshape(B, L, D)
    new_x = o @ params["wo"] + params["bo"]

    def ln(t, g, b, eps=1e-5):
        m = jnp.mean(t, axis=-1, keepdims=True)
        var = jnp.mean((t - m) ** 2, axis=-1, keepdims=True)
        return (t - m) / jnp.sqrt(var + eps) * g + b

    x1 = ln(x + new_x, params["g1"], params["be1"])
    y = jnp.maximum(x1 @ params["w1"] + params["b1"], 0.0)
    y = y @ params["w2"] + params["b2"]
    return ln(x1 + y, params["g2"], params["be2"])


def init_params(key, d_model, d_ff, dtype=jnp.float32):
    keys = jax.random.split(key, 8)
    s = 1.0 / math.sqrt(d_model)
    sf = 1.0 / math.sqrt(d_ff)
    return {
        "wq": jax.random.normal(keys[0], (d_model, d_model), dtype) * s,
        "bq": jnp.zeros((1, d_model), dtype),
        "wk": jax.random.normal(keys[1], (d_model, d_model), dtype) * s,
        "bk": jnp.zeros((1, d_model), dtype),
        "wv": jax.random.normal(keys[2], (d_model, d_model), dtype) * s,
        "bv": jnp.zeros((1, d_model), dtype),
        "wo": jax.random.normal(keys[3], (d_model, d_model), dtype) * s,
        "bo": jax.random.normal(keys[4], (1, d_model), dtype) * 0.01,
        # conv1: Conv1d(d_model -> d_ff, k=1) == per-position linear, stored (d_model, d_ff)
        "w1": jax.random.normal(keys[5], (d_model, d_ff), dtype) * s,
        "b1": jax.random.normal(keys[6], (1, d_ff), dtype) * 0.01,
        # conv2: Conv1d(d_ff -> d_model, k=1), stored (d_ff, d_model)
        "w2": jax.random.normal(keys[7], (d_ff, d_model), dtype) * sf,
        "b2": jnp.zeros((1, d_model), dtype),
        "g1": jnp.ones((1, d_model), dtype),
        "be1": jnp.zeros((1, d_model), dtype),
        "g2": jnp.ones((1, d_model), dtype),
        "be2": jnp.zeros((1, d_model), dtype),
    }


if __name__ == "__main__":
    # Small but tiling-friendly shapes: Dh = D/H = 128 (lane-native head dim),
    # D and d_ff multiples of 128, L split into 2 query tiles x 2 KV tiles
    # (exercises the online-softmax reduction and multi-tile grid).
    B, L, d_model, n_heads = 2, 64, 256, 2
    d_ff = 2 * d_model

    key = jax.random.PRNGKey(0)
    kx, kp = jax.random.split(key)
    x = jax.random.normal(kx, (B, L, d_model), jnp.float32)
    params = init_params(kp, d_model, d_ff)

    out = jax.block_until_ready(encoder_layer(x, params, n_heads, tq=32, tk=32))
    ref = reference_encoder_layer(x, params, n_heads)

    assert out.shape == (B, L, d_model)
    max_err = float(jnp.max(jnp.abs(out - ref)))
    mean_err = float(jnp.mean(jnp.abs(out - ref)))
    # bf16 MXU inputs with f32 accumulation vs. pure-f32 reference -> ~1e-2 level error.
    assert max_err < 1.5e-1 and mean_err < 2.5e-2, (max_err, mean_err)
    print("KERNEL_OK")
</pallas_src>

<mosaic_0001>
module attributes {stable_mosaic.version = 11 : i64} {
  func.func @kernel(%arg0: i32, %arg1: i32, %arg2: i32, %arg3: memref<1x32x256xf32, #tpu.memory_space<vmem>>, %arg4: memref<1x2x32x128xbf16, #tpu.memory_space<vmem>>, %arg5: memref<1x2x32x128xbf16, #tpu.memory_space<vmem>>, %arg6: memref<256x256xbf16, #tpu.memory_space<vmem>>, %arg7: memref<1x256xf32, #tpu.memory_space<vmem>>, %arg8: memref<2x128x256xbf16, #tpu.memory_space<vmem>>, %arg9: memref<1x256xf32, #tpu.memory_space<vmem>>, %arg10: memref<256x512xbf16, #tpu.memory_space<vmem>>, %arg11: memref<1x512xf32, #tpu.memory_space<vmem>>, %arg12: memref<512x256xbf16, #tpu.memory_space<vmem>>, %arg13: memref<1x256xf32, #tpu.memory_space<vmem>>, %arg14: memref<1x256xf32, #tpu.memory_space<vmem>>, %arg15: memref<1x256xf32, #tpu.memory_space<vmem>>, %arg16: memref<1x256xf32, #tpu.memory_space<vmem>>, %arg17: memref<1x256xf32, #tpu.memory_space<vmem>>, %arg18: memref<1x32x256xf32, #tpu.memory_space<vmem>>, %arg19: memref<2x32x128xbf16, #tpu.memory_space<vmem>>, %arg20: memref<2x32x128xf32, #tpu.memory_space<vmem>>, %arg21: memref<2x32x1xf32, #tpu.memory_space<vmem>>, %arg22: memref<2x32x1xf32, #tpu.memory_space<vmem>>) attributes {dimension_semantics = [#tpu.dimension_semantics<parallel>, #tpu.dimension_semantics<parallel>, #tpu.dimension_semantics<arbitrary>], iteration_bounds = array<i64: 2, 2, 2>, scalar_prefetch = 0 : i64, scratch_operands = 4 : i64, tpu.core_type = #tpu.core_type<tc>, window_params = [{transform_indices = @transform_0, window_bounds = array<i64: 1, 32, 256>}, {transform_indices = @transform_1, window_bounds = array<i64: 1, 2, 32, 128>}, {transform_indices = @transform_2, window_bounds = array<i64: 1, 2, 32, 128>}, {pipeline_mode = #tpu.pipeline_mode<synchronous>, transform_indices = @transform_3, window_bounds = array<i64: 256, 256>}, {pipeline_mode = #tpu.pipeline_mode<synchronous>, transform_indices = @transform_4, window_bounds = array<i64: 1, 256>}, {pipeline_mode = #tpu.pipeline_mode<synchronous>, transform_indices = @transform_5, window_bounds = array<i64: 2, 128, 256>}, {pipeline_mode = #tpu.pipeline_mode<synchronous>, transform_indices = @transform_6, window_bounds = array<i64: 1, 256>}, {pipeline_mode = #tpu.pipeline_mode<synchronous>, transform_indices = @transform_7, window_bounds = array<i64: 256, 512>}, {pipeline_mode = #tpu.pipeline_mode<synchronous>, transform_indices = @transform_8, window_bounds = array<i64: 1, 512>}, {pipeline_mode = #tpu.pipeline_mode<synchronous>, transform_indices = @transform_9, window_bounds = array<i64: 512, 256>}, {pipeline_mode = #tpu.pipeline_mode<synchronous>, transform_indices = @transform_10, window_bounds = array<i64: 1, 256>}, {pipeline_mode = #tpu.pipeline_mode<synchronous>, transform_indices = @transform_11, window_bounds = array<i64: 1, 256>}, {pipeline_mode = #tpu.pipeline_mode<synchronous>, transform_indices = @transform_12, window_bounds = array<i64: 1, 256>}, {pipeline_mode = #tpu.pipeline_mode<synchronous>, transform_indices = @transform_13, window_bounds = array<i64: 1, 256>}, {pipeline_mode = #tpu.pipeline_mode<synchronous>, transform_indices = @transform_14, window_bounds = array<i64: 1, 256>}, {transform_indices = @transform_15, window_bounds = array<i64: 1, 32, 256>}]} {
    %c0_i32 = arith.constant 0 : i32
    %0 = arith.cmpi eq, %arg2, %c0_i32 : i32
    %1 = arith.extui %0 : i1 to i32
    %c0_i32_0 = arith.constant 0 : i32
    %2 = arith.cmpi ne, %1, %c0_i32_0 : i32
    scf.if %2 {
      %c0_33 = arith.constant 0 : index
      %c0_34 = arith.constant 0 : index
      %c0_35 = arith.constant 0 : index
      %35 = vector.load %arg3[%c0_33, %c0_34, %c0_35] : memref<1x32x256xf32, #tpu.memory_space<vmem>>, vector<1x32x256xf32>
      %36 = vector.shape_cast %35 : vector<1x32x256xf32> to vector<32x256xf32>
      %37 = arith.truncf %36 : vector<32x256xf32> to vector<32x256xbf16>
      %c0_36 = arith.constant 0 : index
      %c0_37 = arith.constant 0 : index
      %38 = vector.load %arg6[%c0_36, %c0_37] : memref<256x256xbf16, #tpu.memory_space<vmem>>, vector<256x256xbf16>
      %cst_38 = arith.constant dense<0.000000e+00> : vector<32x256xf32>
      %39 = tpu.matmul %37, %38, %cst_38 {dimension_numbers = #tpu.dot_dimension_numbers<[1], [0], [0], [1], [0, 0, 1, 1], [], []>} : vector<32x256xbf16>, vector<256x256xbf16>, vector<32x256xf32> -> vector<32x256xf32>
      %c0_39 = arith.constant 0 : index
      %c0_40 = arith.constant 0 : index
      %40 = vector.load %arg7[%c0_39, %c0_40] : memref<1x256xf32, #tpu.memory_space<vmem>>, vector<1x256xf32>
      %41 = vector.broadcast %40 : vector<1x256xf32> to vector<32x256xf32>
      %42 = arith.addf %39, %41 : vector<32x256xf32>
      %cst_41 = arith.constant 0.0883883461 : f32
      %43 = vector.broadcast %cst_41 : f32 to vector<32x256xf32>
      %44 = arith.mulf %42, %43 : vector<32x256xf32>
      %45 = vector.extract_strided_slice %44 {offsets = [0, 0], sizes = [32, 128], strides = [1, 1]} : vector<32x256xf32> to vector<32x128xf32>
      %46 = arith.truncf %45 : vector<32x128xf32> to vector<32x128xbf16>
      %c0_42 = arith.constant 0 : index
      %c0_43 = arith.constant 0 : index
      %c0_44 = arith.constant 0 : index
      %47 = vector.load %arg19[%c0_42, %c0_43, %c0_44] : memref<2x32x128xbf16, #tpu.memory_space<vmem>>, vector<1x32x128xbf16>
      %48 = vector.shape_cast %47 : vector<1x32x128xbf16> to vector<32x128xbf16>
      %49 = vector.shape_cast %46 : vector<32x128xbf16> to vector<1x32x128xbf16>
      tpu.vector_store %arg19[%c0_42, %c0_43, %c0_44], %49 {strides = array<i32>} : memref<2x32x128xbf16, #tpu.memory_space<vmem>>, vector<1x32x128xbf16>,
      %50 = vector.extract_strided_slice %44 {offsets = [0, 128], sizes = [32, 128], strides = [1, 1]} : vector<32x256xf32> to vector<32x128xf32>
      %51 = arith.truncf %50 : vector<32x128xf32> to vector<32x128xbf16>
      %c1 = arith.constant 1 : index
      %c0_45 = arith.constant 0 : index
      %c0_46 = arith.constant 0 : index
      %52 = vector.load %arg19[%c1, %c0_45, %c0_46] : memref<2x32x128xbf16, #tpu.memory_space<vmem>>, vector<1x32x128xbf16>
      %53 = vector.shape_cast %52 : vector<1x32x128xbf16> to vector<32x128xbf16>
      %54 = vector.shape_cast %51 : vector<32x128xbf16> to vector<1x32x128xbf16>
      tpu.vector_store %arg19[%c1, %c0_45, %c0_46], %54 {strides = array<i32>} : memref<2x32x128xbf16, #tpu.memory_space<vmem>>, vector<1x32x128xbf16>,
      %cst_47 = arith.constant 0xFF800000 : f32
      %55 = vector.broadcast %cst_47 : f32 to vector<2x32x1xf32>
      %c0_48 = arith.constant 0 : index
      %c0_49 = arith.constant 0 : index
      %c0_50 = arith.constant 0 : index
      %56 = vector.load %arg21[%c0_48, %c0_49, %c0_50] : memref<2x32x1xf32, #tpu.memory_space<vmem>>, vector<2x32x1xf32>
      tpu.vector_store %arg21[%c0_48, %c0_49, %c0_50], %55 {strides = array<i32>} : memref<2x32x1xf32, #tpu.memory_space<vmem>>, vector<2x32x1xf32>,
      %cst_51 = arith.constant 0.000000e+00 : f32
      %57 = vector.broadcast %cst_51 : f32 to vector<2x32x1xf32>
      %c0_52 = arith.constant 0 : index
      %c0_53 = arith.constant 0 : index
      %c0_54 = arith.constant 0 : index
      %58 = vector.load %arg22[%c0_52, %c0_53, %c0_54] : memref<2x32x1xf32, #tpu.memory_space<vmem>>, vector<2x32x1xf32>
      tpu.vector_store %arg22[%c0_52, %c0_53, %c0_54], %57 {strides = array<i32>} : memref<2x32x1xf32, #tpu.memory_space<vmem>>, vector<2x32x1xf32>,
      %cst_55 = arith.constant 0.000000e+00 : f32
      %59 = vector.broadcast %cst_55 : f32 to vector<2x32x128xf32>
      %c0_56 = arith.constant 0 : index
      %c0_57 = arith.constant 0 : index
      %c0_58 = arith.constant 0 : index
      %60 = vector.load %arg20[%c0_56, %c0_57, %c0_58] : memref<2x32x128xf32, #tpu.memory_space<vmem>>, vector<2x32x128xf32>
      tpu.vector_store %arg20[%c0_56, %c0_57, %c0_58], %59 {strides = array<i32>} : memref<2x32x128xf32, #tpu.memory_space<vmem>>, vector<2x32x128xf32>,
    } else {
    }
    %c0 = arith.constant 0 : index
    %c0_1 = arith.constant 0 : index
    %c0_2 = arith.constant 0 : index
    %c0_3 = arith.constant 0 : index
    %3 = vector.load %arg4[%c0, %c0_1, %c0_2, %c0_3] : memref<1x2x32x128xbf16, #tpu.memory_space<vmem>>, vector<1x2x32x128xbf16>
    %4 = vector.shape_cast %3 : vector<1x2x32x128xbf16> to vector<2x32x128xbf16>
    %c0_4 = arith.constant 0 : index
    %c0_5 = arith.constant 0 : index
    %c0_6 = arith.constant 0 : index
    %c0_7 = arith.constant 0 : index
    %5 = vector.load %arg5[%c0_4, %c0_5, %c0_6, %c0_7] : memref<1x2x32x128xbf16, #tpu.memory_space<vmem>>, vector<1x2x32x128xbf16>
    %6 = vector.shape_cast %5 : vector<1x2x32x128xbf16> to vector<2x32x128xbf16>
    %c0_8 = arith.constant 0 : index
    %c0_9 = arith.constant 0 : index
    %c0_10 = arith.constant 0 : index
    %7 = vector.load %arg19[%c0_8, %c0_9, %c0_10] : memref<2x32x128xbf16, #tpu.memory_space<vmem>>, vector<2x32x128xbf16>
    "tpu.trace_start"() <{level = 10 : i32, message = "hqd,hkd->hqk"}> : () -> ()
    %cst = arith.constant dense<0.000000e+00> : vector<2x32x32xf32>
    %8 = tpu.matmul %7, %4, %cst {dimension_numbers = #tpu.dot_dimension_numbers<[2], [2], [1], [1], [0, 0, 0, 1, 1, 1], [0], [0]>} : vector<2x32x128xbf16>, vector<2x32x128xbf16>, vector<2x32x32xf32> -> vector<2x32x32xf32>
    "tpu.trace_stop"() : () -> ()
    %c0_11 = arith.constant 0 : index
    %c0_12 = arith.constant 0 : index
    %c0_13 = arith.constant 0 : index
    %9 = vector.load %arg21[%c0_11, %c0_12, %c0_13] : memref<2x32x1xf32, #tpu.memory_space<vmem>>, vector<2x32x1xf32>
    %cst_14 = arith.constant dense<0xFF800000> : vector<2x32xf32>
    %10 = vector.multi_reduction <maximumf>, %8, %cst_14 [2] : vector<2x32x32xf32> to vector<2x32xf32>
    %11 = vector.shape_cast %10 : vector<2x32xf32> to vector<2x32x1xf32>
    %12 = arith.maximumf %9, %11 : vector<2x32x1xf32>
    %13 = arith.subf %9, %12 : vector<2x32x1xf32>
    %14 = math.exp %13 : vector<2x32x1xf32>
    %15 = vector.broadcast %12 : vector<2x32x1xf32> to vector<2x32x32xf32>
    %16 = arith.subf %8, %15 : vector<2x32x32xf32>
    %17 = math.exp %16 : vector<2x32x32xf32>
    %c0_15 = arith.constant 0 : index
    %c0_16 = arith.constant 0 : index
    %c0_17 = arith.constant 0 : index
    %18 = vector.load %arg22[%c0_15, %c0_16, %c0_17] : memref<2x32x1xf32, #tpu.memory_space<vmem>>, vector<2x32x1xf32>
    %19 = arith.mulf %14, %18 : vector<2x32x1xf32>
    %cst_18 = arith.constant dense<0.000000e+00> : vector<2x32xf32>
    %20 = vector.multi_reduction <add>, %17, %cst_18 [2] : vector<2x32x32xf32> to vector<2x32xf32>
    %21 = vector.shape_cast %20 : vector<2x32xf32> to vector<2x32x1xf32>
    %22 = arith.addf %19, %21 : vector<2x32x1xf32>
    %c0_19 = arith.constant 0 : index
    %c0_20 = arith.constant 0 : index
    %c0_21 = arith.constant 0 : index
    %23 = vector.load %arg22[%c0_19, %c0_20, %c0_21] : memref<2x32x1xf32, #tpu.memory_space<vmem>>, vector<2x32x1xf32>
    tpu.vector_store %arg22[%c0_19, %c0_20, %c0_21], %22 {strides = array<i32>} : memref<2x32x1xf32, #tpu.memory_space<vmem>>, vector<2x32x1xf32>,
    %c0_22 = arith.constant 0 : index
    %c0_23 = arith.constant 0 : index
    %c0_24 = arith.constant 0 : index
    %24 = vector.load %arg20[%c0_22, %c0_23, %c0_24] : memref<2x32x128xf32, #tpu.memory_space<vmem>>, vector<2x32x128xf32>
    %25 = vector.broadcast %14 : vector<2x32x1xf32> to vector<2x32x128xf32>
    %26 = arith.mulf %25, %24 : vector<2x32x128xf32>
    %27 = arith.truncf %17 : vector<2x32x32xf32> to vector<2x32x32xbf16>
    "tpu.trace_start"() <{level = 10 : i32, message = "hqk,hkd->hqd"}> : () -> ()
    %cst_25 = arith.constant dense<0.000000e+00> : vector<2x32x128xf32>
    %28 = tpu.matmul %27, %6, %cst_25 {dimension_numbers = #tpu.dot_dimension_numbers<[2], [1], [1], [2], [0, 0, 0, 1, 1, 2], [0], [0]>} : vector<2x32x32xbf16>, vector<2x32x128xbf16>, vector<2x32x128xf32> -> vector<2x32x128xf32>
    "tpu.trace_stop"() : () -> ()
    %29 = arith.addf %26, %28 : vector<2x32x128xf32>
    %c0_26 = arith.constant 0 : index
    %c0_27 = arith.constant 0 : index
    %c0_28 = arith.constant 0 : index
    %30 = vector.load %arg20[%c0_26, %c0_27, %c0_28] : memref<2x32x128xf32, #tpu.memory_space<vmem>>, vector<2x32x128xf32>
    tpu.vector_store %arg20[%c0_26, %c0_27, %c0_28], %29 {strides = array<i32>} : memref<2x32x128xf32, #tpu.memory_space<vmem>>, vector<2x32x128xf32>,
    %c0_29 = arith.constant 0 : index
    %c0_30 = arith.constant 0 : index
    %c0_31 = arith.constant 0 : index
    %31 = vector.load %arg21[%c0_29, %c0_30, %c0_31] : memref<2x32x1xf32, #tpu.memory_space<vmem>>, vector<2x32x1xf32>
    tpu.vector_store %arg21[%c0_29, %c0_30, %c0_31], %12 {strides = array<i32>} : memref<2x32x1xf32, #tpu.memory_space<vmem>>, vector<2x32x1xf32>,
    %c1_i32 = arith.constant 1 : i32
    %32 = arith.cmpi eq, %arg2, %c1_i32 : i32
    %33 = arith.extui %32 : i1 to i32
    %c0_i32_32 = arith.constant 0 : i32
    %34 = arith.cmpi ne, %33, %c0_i32_32 : i32
    scf.if %34 {
      %c0_33 = arith.constant 0 : index
      %c0_34 = arith.constant 0 : index
      %c0_35 = arith.constant 0 : index
      %35 = vector.load %arg20[%c0_33, %c0_34, %c0_35] : memref<2x32x128xf32, #tpu.memory_space<vmem>>, vector<1x32x128xf32>
      %36 = vector.shape_cast %35 : vector<1x32x128xf32> to vector<32x128xf32>
      %c0_36 = arith.constant 0 : index
      %c0_37 = arith.constant 0 : index
      %c0_38 = arith.constant 0 : index
      %37 = vector.load %arg22[%c0_36, %c0_37, %c0_38] : memref<2x32x1xf32, #tpu.memory_space<vmem>>, vector<1x32x1xf32>
      %38 = vector.shape_cast %37 : vector<1x32x1xf32> to vector<32x1xf32>
      %39 = tpu.reciprocal %38 {approx = true} : vector<32x1xf32> -> vector<32x1xf32>
      %40 = vector.broadcast %39 : vector<32x1xf32> to vector<32x128xf32>
      %41 = arith.mulf %36, %40 : vector<32x128xf32>
      %42 = arith.truncf %41 : vector<32x128xf32> to vector<32x128xbf16>
      %c0_39 = arith.constant 0 : index
      %c0_40 = arith.constant 0 : index
      %c0_41 = arith.constant 0 : index
      %43 = vector.load %arg8[%c0_39, %c0_40, %c0_41] : memref<2x128x256xbf16, #tpu.memory_space<vmem>>, vector<1x128x256xbf16>
      %44 = vector.shape_cast %43 : vector<1x128x256xbf16> to vector<128x256xbf16>
      %cst_42 = arith.constant dense<0.000000e+00> : vector<32x256xf32>
      %45 = tpu.matmul %42, %44, %cst_42 {dimension_numbers = #tpu.dot_dimension_numbers<[1], [0], [0], [1], [0, 0, 1, 1], [], []>} : vector<32x128xbf16>, vector<128x256xbf16>, vector<32x256xf32> -> vector<32x256xf32>
      %c1 = arith.constant 1 : index
      %c0_43 = arith.constant 0 : index
      %c0_44 = arith.constant 0 : index
      %46 = vector.load %arg20[%c1, %c0_43, %c0_44] : memref<2x32x128xf32, #tpu.memory_space<vmem>>, vector<1x32x128xf32>
      %47 = vector.shape_cast %46 : vector<1x32x128xf32> to vector<32x128xf32>
      %c1_45 = arith.constant 1 : index
      %c0_46 = arith.constant 0 : index
      %c0_47 = arith.constant 0 : index
      %48 = vector.load %arg22[%c1_45, %c0_46, %c0_47] : memref<2x32x1xf32, #tpu.memory_space<vmem>>, vector<1x32x1xf32>
      %49 = vector.shape_cast %48 : vector<1x32x1xf32> to vector<32x1xf32>
      %50 = tpu.reciprocal %49 {approx = true} : vector<32x1xf32> -> vector<32x1xf32>
      %51 = vector.broadcast %50 : vector<32x1xf32> to vector<32x128xf32>
      %52 = arith.mulf %47, %51 : vector<32x128xf32>
      %53 = arith.truncf %52 : vector<32x128xf32> to vector<32x128xbf16>
      %c1_48 = arith.constant 1 : index
      %c0_49 = arith.constant 0 : index
      %c0_50 = arith.constant 0 : index
      %54 = vector.load %arg8[%c1_48, %c0_49, %c0_50] : memref<2x128x256xbf16, #tpu.memory_space<vmem>>, vector<1x128x256xbf16>
      %55 = vector.shape_cast %54 : vector<1x128x256xbf16> to vector<128x256xbf16>
      %cst_51 = arith.constant dense<0.000000e+00> : vector<32x256xf32>
      %56 = tpu.matmul %53, %55, %cst_51 {dimension_numbers = #tpu.dot_dimension_numbers<[1], [0], [0], [1], [0, 0, 1, 1], [], []>} : vector<32x128xbf16>, vector<128x256xbf16>, vector<32x256xf32> -> vector<32x256xf32>
      %57 = arith.addf %45, %56 : vector<32x256xf32>
      %c0_52 = arith.constant 0 : index
      %c0_53 = arith.constant 0 : index
      %58 = vector.load %arg9[%c0_52, %c0_53] : memref<1x256xf32, #tpu.memory_space<vmem>>, vector<1x256xf32>
      %59 = vector.broadcast %58 : vector<1x256xf32> to vector<32x256xf32>
      %60 = arith.addf %57, %59 : vector<32x256xf32>
      %c0_54 = arith.constant 0 : index
      %c0_55 = arith.constant 0 : index
      %c0_56 = arith.constant 0 : index
      %61 = vector.load %arg3[%c0_54, %c0_55, %c0_56] : memref<1x32x256xf32, #tpu.memory_space<vmem>>, vector<1x32x256xf32>
      %62 = vector.shape_cast %61 : vector<1x32x256xf32> to vector<32x256xf32>
      %63 = arith.addf %62, %60 : vector<32x256xf32>
      %c0_57 = arith.constant 0 : index
      %c0_58 = arith.constant 0 : index
      %64 = vector.load %arg14[%c0_57, %c0_58] : memref<1x256xf32, #tpu.memory_space<vmem>>, vector<1x256xf32>
      %c0_59 = arith.constant 0 : index
      %c0_60 = arith.constant 0 : index
      %65 = vector.load %arg15[%c0_59, %c0_60] : memref<1x256xf32, #tpu.memory_space<vmem>>, vector<1x256xf32>
      %cst_61 = arith.constant dense<0.000000e+00> : vector<32xf32>
      %66 = vector.multi_reduction <add>, %63, %cst_61 [1] : vector<32x256xf32> to vector<32xf32>
      %67 = vector.shape_cast %66 : vector<32xf32> to vector<32x1xf32>
      %cst_62 = arith.constant 2.560000e+02 : f32
      %68 = vector.broadcast %cst_62 : f32 to vector<32x1xf32>
      %69 = arith.divf %67, %68 : vector<32x1xf32>
      %70 = vector.broadcast %69 : vector<32x1xf32> to vector<32x256xf32>
      %71 = arith.subf %63, %70 : vector<32x256xf32>
      %72 = arith.mulf %71, %71 : vector<32x256xf32>
      %cst_63 = arith.constant dense<0.000000e+00> : vector<32xf32>
      %73 = vector.multi_reduction <add>, %72, %cst_63 [1] : vector<32x256xf32> to vector<32xf32>
      %74 = vector.shape_cast %73 : vector<32xf32> to vector<32x1xf32>
      %cst_64 = arith.constant 2.560000e+02 : f32
      %75 = vector.broadcast %cst_64 : f32 to vector<32x1xf32>
      %76 = arith.divf %74, %75 : vector<32x1xf32>
      %77 = vector.broadcast %69 : vector<32x1xf32> to vector<32x256xf32>
      %78 = arith.subf %63, %77 : vector<32x256xf32>
      %cst_65 = arith.constant 9.99999974E-6 : f32
      %79 = vector.broadcast %cst_65 : f32 to vector<32x1xf32>
      %80 = arith.addf %76, %79 : vector<32x1xf32>
      %81 = math.rsqrt %80 : vector<32x1xf32>
      %82 = vector.broadcast %81 : vector<32x1xf32> to vector<32x256xf32>
      %83 = arith.mulf %78, %82 : vector<32x256xf32>
      %84 = vector.broadcast %64 : vector<1x256xf32> to vector<32x256xf32>
      %85 = arith.mulf %83, %84 : vector<32x256xf32>
      %86 = vector.broadcast %65 : vector<1x256xf32> to vector<32x256xf32>
      %87 = arith.addf %85, %86 : vector<32x256xf32>
      %88 = arith.truncf %87 : vector<32x256xf32> to vector<32x256xbf16>
      %c0_66 = arith.constant 0 : index
      %c0_67 = arith.constant 0 : index
      %89 = vector.load %arg10[%c0_66, %c0_67] : memref<256x512xbf16, #tpu.memory_space<vmem>>, vector<256x512xbf16>
      %cst_68 = arith.constant dense<0.000000e+00> : vector<32x512xf32>
      %90 = tpu.matmul %88, %89, %cst_68 {dimension_numbers = #tpu.dot_dimension_numbers<[1], [0], [0], [1], [0, 0, 1, 1], [], []>} : vector<32x256xbf16>, vector<256x512xbf16>, vector<32x512xf32> -> vector<32x512xf32>
      %c0_69 = arith.constant 0 : index
      %c0_70 = arith.constant 0 : index
      %91 = vector.load %arg11[%c0_69, %c0_70] : memref<1x512xf32, #tpu.memory_space<vmem>>, vector<1x512xf32>
      %92 = vector.broadcast %91 : vector<1x512xf32> to vector<32x512xf32>
      %93 = arith.addf %90, %92 : vector<32x512xf32>
      %cst_71 = arith.constant 0.000000e+00 : f32
      %94 = vector.broadcast %cst_71 : f32 to vector<32x512xf32>
      %95 = arith.maximumf %93, %94 : vector<32x512xf32>
      %96 = arith.truncf %95 : vector<32x512xf32> to vector<32x512xbf16>
      %c0_72 = arith.constant 0 : index
      %c0_73 = arith.constant 0 : index
      %97 = vector.load %arg12[%c0_72, %c0_73] : memref<512x256xbf16, #tpu.memory_space<vmem>>, vector<512x256xbf16>
      %cst_74 = arith.constant dense<0.000000e+00> : vector<32x256xf32>
      %98 = tpu.matmul %96, %97, %cst_74 {dimension_numbers = #tpu.dot_dimension_numbers<[1], [0], [0], [1], [0, 0, 1, 1], [], []>} : vector<32x512xbf16>, vector<512x256xbf16>, vector<32x256xf32> -> vector<32x256xf32>
      %c0_75 = arith.constant 0 : index
      %c0_76 = arith.constant 0 : index
      %99 = vector.load %arg13[%c0_75, %c0_76] : memref<1x256xf32, #tpu.memory_space<vmem>>, vector<1x256xf32>
      %100 = vector.broadcast %99 : vector<1x256xf32> to vector<32x256xf32>
      %101 = arith.addf %98, %100 : vector<32x256xf32>
      %102 = arith.addf %87, %101 : vector<32x256xf32>
      %c0_77 = arith.constant 0 : index
      %c0_78 = arith.constant 0 : index
      %103 = vector.load %arg16[%c0_77, %c0_78] : memref<1x256xf32, #tpu.memory_space<vmem>>, vector<1x256xf32>
      %c0_79 = arith.constant 0 : index
      %c0_80 = arith.constant 0 : index
      %104 = vector.load %arg17[%c0_79, %c0_80] : memref<1x256xf32, #tpu.memory_space<vmem>>, vector<1x256xf32>
      %cst_81 = arith.constant dense<0.000000e+00> : vector<32xf32>
      %105 = vector.multi_reduction <add>, %102, %cst_81 [1] : vector<32x256xf32> to vector<32xf32>
      %106 = vector.shape_cast %105 : vector<32xf32> to vector<32x1xf32>
      %cst_82 = arith.constant 2.560000e+02 : f32
      %107 = vector.broadcast %cst_82 : f32 to vector<32x1xf32>
      %108 = arith.divf %106, %107 : vector<32x1xf32>
      %109 = vector.broadcast %108 : vector<32x1xf32> to vector<32x256xf32>
      %110 = arith.subf %102, %109 : vector<32x256xf32>
      %111 = arith.mulf %110, %110 : vector<32x256xf32>
      %cst_83 = arith.constant dense<0.000000e+00> : vector<32xf32>
      %112 = vector.multi_reduction <add>, %111, %cst_83 [1] : vector<32x256xf32> to vector<32xf32>
      %113 = vector.shape_cast %112 : vector<32xf32> to vector<32x1xf32>
      %cst_84 = arith.constant 2.560000e+02 : f32
      %114 = vector.broadcast %cst_84 : f32 to vector<32x1xf32>
      %115 = arith.divf %113, %114 : vector<32x1xf32>
      %116 = vector.broadcast %108 : vector<32x1xf32> to vector<32x256xf32>
      %117 = arith.subf %102, %116 : vector<32x256xf32>
      %cst_85 = arith.constant 9.99999974E-6 : f32
      %118 = vector.broadcast %cst_85 : f32 to vector<32x1xf32>
      %119 = arith.addf %115, %118 : vector<32x1xf32>
      %120 = math.rsqrt %119 : vector<32x1xf32>
      %121 = vector.broadcast %120 : vector<32x1xf32> to vector<32x256xf32>
      %122 = arith.mulf %117, %121 : vector<32x256xf32>
      %123 = vector.broadcast %103 : vector<1x256xf32> to vector<32x256xf32>
      %124 = arith.mulf %122, %123 : vector<32x256xf32>
      %125 = vector.broadcast %104 : vector<1x256xf32> to vector<32x256xf32>
      %126 = arith.addf %124, %125 : vector<32x256xf32>
      %c0_86 = arith.constant 0 : index
      %c0_87 = arith.constant 0 : index
      %c0_88 = arith.constant 0 : index
      %127 = vector.load %arg18[%c0_86, %c0_87, %c0_88] : memref<1x32x256xf32, #tpu.memory_space<vmem>>, vector<1x32x256xf32>
      %128 = vector.shape_cast %127 : vector<1x32x256xf32> to vector<32x256xf32>
      %129 = vector.shape_cast %126 : vector<32x256xf32> to vector<1x32x256xf32>
      tpu.vector_store %arg18[%c0_86, %c0_87, %c0_88], %129 {strides = array<i32>} : memref<1x32x256xf32, #tpu.memory_space<vmem>>, vector<1x32x256xf32>,
    } else {
    }
    return
  }
  func.func @transform_0(%arg0: i32, %arg1: i32, %arg2: i32) -> (i32, i32, i32) {
    %c0_i32 = arith.constant 0 : i32
    %c0_i32_0 = arith.constant 0 : i32
    return %arg0, %arg1, %c0_i32 : i32, i32, i32
  }
  func.func @transform_1(%arg0: i32, %arg1: i32, %arg2: i32) -> (i32, i32, i32, i32) {
    %c0_i32 = arith.constant 0 : i32
    %c0_i32_0 = arith.constant 0 : i32
    %c0_i32_1 = arith.constant 0 : i32
    return %arg0, %c0_i32, %arg2, %c0_i32_0 : i32, i32, i32, i32
  }
  func.func @transform_2(%arg0: i32, %arg1: i32, %arg2: i32) -> (i32, i32, i32, i32) {
    %c0_i32 = arith.constant 0 : i32
    %c0_i32_0 = arith.constant 0 : i32
    %c0_i32_1 = arith.constant 0 : i32
    return %arg0, %c0_i32, %arg2, %c0_i32_0 : i32, i32, i32, i32
  }
  func.func @transform_3(%arg0: i32, %arg1: i32, %arg2: i32) -> (i32, i32) {
    %c0_i32 = arith.constant 0 : i32
    %c0_i32_0 = arith.constant 0 : i32
    %c0_i32_1 = arith.constant 0 : i32
    return %c0_i32, %c0_i32_0 : i32, i32
  }
  func.func @transform_4(%arg0: i32, %arg1: i32, %arg2: i32) -> (i32, i32) {
    %c0_i32 = arith.constant 0 : i32
    %c0_i32_0 = arith.constant 0 : i32
    %c0_i32_1 = arith.constant 0 : i32
    return %c0_i32, %c0_i32_0 : i32, i32
  }
  func.func @transform_5(%arg0: i32, %arg1: i32, %arg2: i32) -> (i32, i32, i32) {
    %c0_i32 = arith.constant 0 : i32
    %c0_i32_0 = arith.constant 0 : i32
    %c0_i32_1 = arith.constant 0 : i32
    %c0_i32_2 = arith.constant 0 : i32
    return %c0_i32, %c0_i32_0, %c0_i32_1 : i32, i32, i32
  }
  func.func @transform_6(%arg0: i32, %arg1: i32, %arg2: i32) -> (i32, i32) {
    %c0_i32 = arith.constant 0 : i32
    %c0_i32_0 = arith.constant 0 : i32
    %c0_i32_1 = arith.constant 0 : i32
    return %c0_i32, %c0_i32_0 : i32, i32
  }
  func.func @transform_7(%arg0: i32, %arg1: i32, %arg2: i32) -> (i32, i32) {
    %c0_i32 = arith.constant 0 : i32
    %c0_i32_0 = arith.constant 0 : i32
    %c0_i32_1 = arith.constant 0 : i32
    return %c0_i32, %c0_i32_0 : i32, i32
  }
  func.func @transform_8(%arg0: i32, %arg1: i32, %arg2: i32) -> (i32, i32) {
    %c0_i32 = arith.constant 0 : i32
    %c0_i32_0 = arith.constant 0 : i32
    %c0_i32_1 = arith.constant 0 : i32
    return %c0_i32, %c0_i32_0 : i32, i32
  }
  func.func @transform_9(%arg0: i32, %arg1: i32, %arg2: i32) -> (i32, i32) {
    %c0_i32 = arith.constant 0 : i32
    %c0_i32_0 = arith.constant 0 : i32
    %c0_i32_1 = arith.constant 0 : i32
    return %c0_i32, %c0_i32_0 : i32, i32
  }
  func.func @transform_10(%arg0: i32, %arg1: i32, %arg2: i32) -> (i32, i32) {
    %c0_i32 = arith.constant 0 : i32
    %c0_i32_0 = arith.constant 0 : i32
    %c0_i32_1 = arith.constant 0 : i32
    return %c0_i32, %c0_i32_0 : i32, i32
  }
  func.func @transform_11(%arg0: i32, %arg1: i32, %arg2: i32) -> (i32, i32) {
    %c0_i32 = arith.constant 0 : i32
    %c0_i32_0 = arith.constant 0 : i32
    %c0_i32_1 = arith.constant 0 : i32
    return %c0_i32, %c0_i32_0 : i32, i32
  }
  func.func @transform_12(%arg0: i32, %arg1: i32, %arg2: i32) -> (i32, i32) {
    %c0_i32 = arith.constant 0 : i32
    %c0_i32_0 = arith.constant 0 : i32
    %c0_i32_1 = arith.constant 0 : i32
    return %c0_i32, %c0_i32_0 : i32, i32
  }
  func.func @transform_13(%arg0: i32, %arg1: i32, %arg2: i32) -> (i32, i32) {
    %c0_i32 = arith.constant 0 : i32
    %c0_i32_0 = arith.constant 0 : i32
    %c0_i32_1 = arith.constant 0 : i32
    return %c0_i32, %c0_i32_0 : i32, i32
  }
  func.func @transform_14(%arg0: i32, %arg1: i32, %arg2: i32) -> (i32, i32) {
    %c0_i32 = arith.constant 0 : i32
    %c0_i32_0 = arith.constant 0 : i32
    %c0_i32_1 = arith.constant 0 : i32
    return %c0_i32, %c0_i32_0 : i32, i32
  }
  func.func @transform_15(%arg0: i32, %arg1: i32, %arg2: i32) -> (i32, i32, i32) {
    %c0_i32 = arith.constant 0 : i32
    %c0_i32_0 = arith.constant 0 : i32
    return %arg0, %arg1, %c0_i32 : i32, i32, i32
  }
}

</mosaic_0001>

<llo_original>
// kernel: tpu_custom_call.1
$region0: #{tpu_custom_call.1}
  #allocation0 [shape = 'u32[]', space=smem, size = 0x4, offset = 0x4, fixed_abs, tag = 'smem constant byte address 0x4 - core index']
  #allocation1 [shape = 'u32[72,128]{1,0:T(1,128)}', space=vmem, size = 0x9000, scoped, tag = 'internal scratch']
  #allocation2 [shape = 'bf16[2,32,128]{2,1,0:T(8,128)(2,1)}', space=vmem, size = 0x4000, scoped, tag = 'scratch operand']
  #allocation3 [shape = 'f32[2,32,128]{2,1,0:T(8,128)}', space=vmem, size = 0x8000, scoped, tag = 'scratch operand']
  #allocation4 [shape = 'f32[2,32,1]{2,1,0:T(8,128)}', space=vmem, size = 0x8000, scoped, tag = 'scratch operand']
  #allocation5 [shape = 'f32[2,32,1]{2,1,0:T(8,128)}', space=vmem, size = 0x8000, scoped, tag = 'scratch operand']
  #allocation24 [shape = 's32[]', space=sflag, size = 0x4, offset = 0, fixed_abs, tag = 'sflag constant byte address 0x0 - dummy sync flag']
  #allocation26 [shape = 's32[]', space=sflag, size = 0x4, offset = 0, fixed_abs, tag = 'sflag constant byte address 0x0 - dummy sync flag']
  %s0 = inlined_call_operand.hbm [shape: f32[2,64,256], index: 0, kind: input, shape index: {}]
  %s1 = inlined_call_operand.hbm [shape: bf16[2,2,64,128], index: 1, kind: input, shape index: {}]
  %s2 = inlined_call_operand.hbm [shape: bf16[2,2,64,128], index: 2, kind: input, shape index: {}]
  %s3 = inlined_call_operand.hbm [shape: bf16[256,256], index: 3, kind: input, shape index: {}]
  %s4 = inlined_call_operand.vmem [shape: f32[1,256], index: 4, kind: input, shape index: {}]
  %s5 = inlined_call_operand.hbm [shape: bf16[2,128,256], index: 5, kind: input, shape index: {}]
  %s6 = inlined_call_operand.hbm [shape: f32[1,256], index: 6, kind: input, shape index: {}]
  %s7 = inlined_call_operand.hbm [shape: bf16[256,512], index: 7, kind: input, shape index: {}]
  %s8 = inlined_call_operand.vmem [shape: f32[1,512], index: 8, kind: input, shape index: {}]
  %s9 = inlined_call_operand.hbm [shape: bf16[512,256], index: 9, kind: input, shape index: {}]
  %s10 = inlined_call_operand.vmem [shape: f32[1,256], index: 10, kind: input, shape index: {}]
  %s11 = inlined_call_operand.vmem [shape: f32[1,256], index: 11, kind: input, shape index: {}]
  %s12 = inlined_call_operand.hbm [shape: f32[1,256], index: 12, kind: input, shape index: {}]
  %s13 = inlined_call_operand.vmem [shape: f32[1,256], index: 13, kind: input, shape index: {}]
  %s14 = inlined_call_operand.hbm [shape: f32[1,256], index: 14, kind: input, shape index: {}]
  %s15 = inlined_call_operand.hbm [shape: f32[2,64,256], index: 15, kind: output, shape index: {}]
  %s16 = sld [smem:[#allocation0]]
  $region141: #{tpu_custom_call.1} parent=0
    _
  %s18 = ssub.s32 1, %s16
  %s19 = scalar_select 0, %s18, %s16
  $region1: #{tpu_custom_call.1} parent=0
    #allocation6 [shape = 'u8[65536]{0}', space=vmem, size = 0x10000, scoped, tag = 'input window, operand 0']
    #allocation7 [shape = 's32[2]{0}', space=sflag, size = 0x8, scoped, tag = 'scoped memory for tpu_custom_call.1']
    #allocation8 [shape = 's32[2]{0}', space=sflag, size = 0x8, scoped, tag = 'scoped memory for tpu_custom_call.1']
    #allocation9 [shape = 'u8[32768]{0}', space=vmem, size = 0x8000, scoped, tag = 'input window, operand 1']
    #allocation10 [shape = 's32[2]{0}', space=sflag, size = 0x8, scoped, tag = 'scoped memory for tpu_custom_call.1']
    #allocation11 [shape = 'u8[32768]{0}', space=vmem, size = 0x8000, scoped, tag = 'input window, operand 2']
    #allocation12 [shape = 'u8[131072]{0}', space=vmem, size = 0x20000, scoped, tag = 'input window, operand 3, single buffered']
    #allocation13 [shape = 's32[1]{0}', space=sflag, size = 0x4, scoped, tag = 'scoped memory for tpu_custom_call.1']
    #allocation14 [shape = 'u8[131072]{0}', space=vmem, size = 0x20000, scoped, tag = 'input window, operand 5, single buffered']
    #allocation15 [shape = 'u8[1024]{0}', space=vmem, size = 0x400, scoped, tag = 'input window, operand 6, single buffered']
    #allocation16 [shape = 's32[1]{0}', space=sflag, size = 0x4, scoped, tag = 'scoped memory for tpu_custom_call.1']
    #allocation17 [shape = 'u8[262144]{0}', space=vmem, size = 0x40000, scoped, tag = 'input window, operand 7, single buffered']
    #allocation18 [shape = 'u8[262144]{0}', space=vmem, size = 0x40000, scoped, tag = 'input window, operand 9, single buffered']
    #allocation19 [shape = 's32[1]{0}', space=sflag, size = 0x4, scoped, tag = 'scoped memory for tpu_custom_call.1']
    #allocation20 [shape = 'u8[1024]{0}', space=vmem, size = 0x400, scoped, tag = 'input window, operand 12, single buffered']
    #allocation21 [shape = 'u8[1024]{0}', space=vmem, size = 0x400, scoped, tag = 'input window, operand 14, single buffered']
    #allocation22 [shape = 's32[1]{0}', space=sflag, size = 0x4, scoped, tag = 'scoped memory for tpu_custom_call.1']
    #allocation23 [shape = 'u8[65536]{0}', space=vmem, size = 0x10000, scoped, tag = 'output window, operand 0']
    %20 = vsyncpa [#allocation7], 0
    %s21 = scalar_lea.sflag [#allocation7], 1
    %22 = vsyncpa %s21, 0
    %23 = vsyncpa [#allocation10], 0
    %s24 = scalar_lea.sflag [#allocation10], 1
    %25 = vsyncpa %s24, 0
    %26 = vsyncpa [#allocation13], 0
    %27 = vsyncpa [#allocation16], 0
    %28 = vsyncpa [#allocation19], 0
    %29 = vsyncpa [#allocation22], 0
    %30 = vsyncpa [#allocation8], 0
    %s31 = scalar_lea.sflag [#allocation8], 1
    %32 = vsyncpa %s31, 0
    loop: start=0, step=1, limit=10
    $region2: #{tpu_custom_call.1} parent=1 // loop_pre_header
      _
    $region3: #{tpu_custom_call.1} parent=1 // loop_header
      %s34 = sphi 0, %s38
      %p35 = scmp.ge.s32.totalorder %s34, 10
      %s41 = sphi 0, %s60
      %s42 = sphi 0, %s56
      %s43 = sphi 0, %s52
      %s44 = sphi 0, %s41
      %s45 = sphi 0, %s42
      %s46 = sphi 0, %s43
      %s47 = sphi 0, %s44
      %s48 = sphi 0, %s45
      %s49 = sphi 0, %s46
      %s65 = sphi 0, %s67
      %s68 = sphi 0, %s65
      %s69 = sphi 0, %s68
      %s85 = sphi 0, %s69
      %s93 = sphi 0, %s95
      %s96 = sphi 0, %s93
      %s97 = sphi 0, %s96
      %s113 = sphi 0, %s97
      %s121 = sphi 0, %s123
      %s124 = sphi 0, %s121
      %s125 = sphi 0, %s124
      %s141 = sphi 0, %s125
      %s145 = sphi 0, %s145
      %s147 = sphi 0, %s145
      %s148 = sphi 0, %s147
      %s162 = sphi 0, %s148
      %s166 = sphi 0, %s166
      %s168 = sphi 0, %s166
      %s169 = sphi 0, %s168
      %s183 = sphi 0, %s169
      %s187 = sphi 0, %s187
      %s189 = sphi 0, %s187
      %s190 = sphi 0, %s189
      %s204 = sphi 0, %s190
      %s208 = sphi 0, %s208
      %s210 = sphi 0, %s208
      %s211 = sphi 0, %s210
      %s225 = sphi 0, %s211
      %s229 = sphi 0, %s229
      %s231 = sphi 0, %s229
      %s232 = sphi 0, %s231
      %s246 = sphi 0, %s232
      %s250 = sphi 0, %s250
      %s252 = sphi 0, %s250
      %s253 = sphi 0, %s252
      %s267 = sphi 0, %s253
      %s271 = sphi 0, %s271
      %s273 = sphi 0, %s271
      %s274 = sphi 0, %s273
      %s288 = sphi 0, %s274
      %s292 = sphi 0, %s292
      %s294 = sphi 0, %s292
      %s295 = sphi 0, %s294
      %s309 = sphi 0, %s295
      %s313 = sphi 0, %s313
      %s315 = sphi 0, %s313
      %s316 = sphi 0, %s315
      %s330 = sphi 0, %s316
      %s334 = sphi 0, %s334
      %s336 = sphi 0, %s334
      %s337 = sphi 0, %s336
      %s351 = sphi 0, %s337
      %s355 = sphi 0, %s355
      %s357 = sphi 0, %s355
      %s358 = sphi 0, %s357
      %s372 = sphi 0, %s358
      %s376 = sphi 0, %s376
      %s378 = sphi 0, %s376
      %s379 = sphi 0, %s378
      %s393 = sphi 0, %s379
      %s401 = sphi 0, %s403
      %s404 = sphi 0, %s401
      %s405 = sphi 0, %s404
      %s421 = sphi 0, %s405
    $region4: #{tpu_custom_call.1} parent=1 // loop_header_branch
      %37 = sbr.rel (%p35) target = $region8
    $region5: #{tpu_custom_call.1} parent=1 // loop_body
      %s39 = ssub.s32 %s34, 1
      %s40 = ssub.s32 %s34, 2
      %s50 = sadd.s32 1, %s43
      %p51 = scmp.ge.s32.totalorder %s50, 2
      %s52 = scalar_select %p51, 0, %s50
      %s53 = sadd.s32 1, %s42
      %s54 = scalar_select %p51, %s53, %s42
      %p55 = scmp.ge.s32.totalorder %s54, 2
      %s56 = scalar_select %p55, 0, %s54
      %s57 = sadd.s32 1, %s41
      %s58 = scalar_select %p55, %s57, %s41
      %p59 = scmp.ge.s32.totalorder %s58, 2
      %s60 = scalar_select %p59, 0, %s58
      %s61 = ssub.s32 %s41, %s60
      %s62 = ssub.s32 %s42, %s56
      %s63 = sor.u32 %s61, %s62
      %p64 = scmp.eq.s32.totalorder %s63, 0
      %s66 = sadd.s32 %s65, 1
      %s67 = scalar_select %p64, %s65, %s66
      %p70 = pneg %p64
      %p71 = scmp.eq.s32.totalorder %s34, 7
      %p72 = por %p70, %p71
      %p73 = scmp.ne.s32.totalorder %s65, %s68
      %p74 = scmp.eq.s32.totalorder %s34, 0
      %p75 = por %p73, %p74
      %p76 = scmp.ne.s32.totalorder %s65, %s68
      %p77 = scmp.eq.s32.totalorder %s39, 7
      %p78 = por %p76, %p77
      %p79 = scmp.ne.s32.totalorder %s68, %s69
      %p80 = scmp.eq.s32.totalorder %s39, 0
      %p81 = por %p79, %p80
      %p82 = scmp.ne.s32.totalorder %s68, %s69
      %p83 = scmp.eq.s32.totalorder %s40, 7
      %p84 = por %p82, %p83
      %p86 = scmp.ne.s32.totalorder %s69, %s85
      %p87 = scmp.eq.s32.totalorder %s40, 0
      %p88 = por %p86, %p87
      %s89 = ssub.s32 %s41, %s60
      %s90 = ssub.s32 %s43, %s52
      %s91 = sor.u32 %s89, %s90
      %p92 = scmp.eq.s32.totalorder %s91, 0
      %s94 = sadd.s32 %s93, 1
      %s95 = scalar_select %p92, %s93, %s94
      %p98 = pneg %p92
      %p99 = scmp.eq.s32.totalorder %s34, 7
      %p100 = por %p98, %p99
      %p101 = scmp.ne.s32.totalorder %s93, %s96
      %p102 = scmp.eq.s32.totalorder %s34, 0
      %p103 = por %p101, %p102
      %p104 = scmp.ne.s32.totalorder %s93, %s96
      %p105 = scmp.eq.s32.totalorder %s39, 7
      %p106 = por %p104, %p105
      %p107 = scmp.ne.s32.totalorder %s96, %s97
      %p108 = scmp.eq.s32.totalorder %s39, 0
      %p109 = por %p107, %p108
      %p110 = scmp.ne.s32.totalorder %s96, %s97
      %p111 = scmp.eq.s32.totalorder %s40, 7
      %p112 = por %p110, %p111
      %p114 = scmp.ne.s32.totalorder %s97, %s113
      %p115 = scmp.eq.s32.totalorder %s40, 0
      %p116 = por %p114, %p115
      %s117 = ssub.s32 %s41, %s60
      %s118 = ssub.s32 %s43, %s52
      %s119 = sor.u32 %s117, %s118
      %p120 = scmp.eq.s32.totalorder %s119, 0
      %s122 = sadd.s32 %s121, 1
      %s123 = scalar_select %p120, %s121, %s122
      %p126 = pneg %p120
      %p127 = scmp.eq.s32.totalorder %s34, 7
      %p128 = por %p126, %p127
      %p129 = scmp.ne.s32.totalorder %s121, %s124
      %p130 = scmp.eq.s32.totalorder %s34, 0
      %p131 = por %p129, %p130
      %p132 = scmp.ne.s32.totalorder %s121, %s124
      %p133 = scmp.eq.s32.totalorder %s39, 7
      %p134 = por %p132, %p133
      %p135 = scmp.ne.s32.totalorder %s124, %s125
      %p136 = scmp.eq.s32.totalorder %s39, 0
      %p137 = por %p135, %p136
      %p138 = scmp.ne.s32.totalorder %s124, %s125
      %p139 = scmp.eq.s32.totalorder %s40, 7
      %p140 = por %p138, %p139
      %p142 = scmp.ne.s32.totalorder %s125, %s141
      %p143 = scmp.eq.s32.totalorder %s40, 0
      %p144 = por %p142, %p143
      %s146 = sadd.s32 %s145, 1
      %p149 = scmp.eq.s32.totalorder %s34, 7
      %p150 = scmp.ne.s32.totalorder %s145, %s147
      %p151 = scmp.eq.s32.totalorder %s34, 0
      %p152 = por %p150, %p151
      %p153 = scmp.ne.s32.totalorder %s145, %s147
      %p154 = scmp.eq.s32.totalorder %s39, 7
      %p155 = por %p153, %p154
      %p156 = scmp.ne.s32.totalorder %s147, %s148
      %p157 = scmp.eq.s32.totalorder %s39, 0
      %p158 = por %p156, %p157
      %p159 = scmp.ne.s32.totalorder %s147, %s148
      %p160 = scmp.eq.s32.totalorder %s40, 7
      %p161 = por %p159, %p160
      %p163 = scmp.ne.s32.totalorder %s148, %s162
      %p164 = scmp.eq.s32.totalorder %s40, 0
      %p165 = por %p163, %p164
      %s167 = sadd.s32 %s166, 1
      %p170 = scmp.eq.s32.totalorder %s34, 7
      %p171 = scmp.ne.s32.totalorder %s166, %s168
      %p172 = scmp.eq.s32.totalorder %s34, 0
      %p173 = por %p171, %p172
      %p174 = scmp.ne.s32.totalorder %s166, %s168
      %p175 = scmp.eq.s32.totalorder %s39, 7
      %p176 = por %p174, %p175
      %p177 = scmp.ne.s32.totalorder %s168, %s169
      %p178 = scmp.eq.s32.totalorder %s39, 0
      %p179 = por %p177, %p178
      %p180 = scmp.ne.s32.totalorder %s168, %s169
      %p181 = scmp.eq.s32.totalorder %s40, 7
      %p182 = por %p180, %p181
      %p184 = scmp.ne.s32.totalorder %s169, %s183
      %p185 = scmp.eq.s32.totalorder %s40, 0
      %p186 = por %p184, %p185
      %s188 = sadd.s32 %s187, 1
      %p191 = scmp.eq.s32.totalorder %s34, 7
      %p192 = scmp.ne.s32.totalorder %s187, %s189
      %p193 = scmp.eq.s32.totalorder %s34, 0
      %p194 = por %p192, %p193
      %p195 = scmp.ne.s32.totalorder %s187, %s189
      %p196 = scmp.eq.s32.totalorder %s39, 7
      %p197 = por %p195, %p196
      %p198 = scmp.ne.s32.totalorder %s189, %s190
      %p199 = scmp.eq.s32.totalorder %s39, 0
      %p200 = por %p198, %p199
      %p201 = scmp.ne.s32.totalorder %s189, %s190
      %p202 = scmp.eq.s32.totalorder %s40, 7
      %p203 = por %p201, %p202
      %p205 = scmp.ne.s32.totalorder %s190, %s204
      %p206 = scmp.eq.s32.totalorder %s40, 0
      %p207 = por %p205, %p206
      %s209 = sadd.s32 %s208, 1
      %p212 = scmp.eq.s32.totalorder %s34, 7
      %p213 = scmp.ne.s32.totalorder %s208, %s210
      %p214 = scmp.eq.s32.totalorder %s34, 0
      %p215 = por %p213, %p214
      %p216 = scmp.ne.s32.totalorder %s208, %s210
      %p217 = scmp.eq.s32.totalorder %s39, 7
      %p218 = por %p216, %p217
      %p219 = scmp.ne.s32.totalorder %s210, %s211
      %p220 = scmp.eq.s32.totalorder %s39, 0
      %p221 = por %p219, %p220
      %p222 = scmp.ne.s32.totalorder %s210, %s211
      %p223 = scmp.eq.s32.totalorder %s40, 7
      %p224 = por %p222, %p223
      %p226 = scmp.ne.s32.totalorder %s211, %s225
      %p227 = scmp.eq.s32.totalorder %s40, 0
      %p228 = por %p226, %p227
      %s230 = sadd.s32 %s229, 1
      %p233 = scmp.eq.s32.totalorder %s34, 7
      %p234 = scmp.ne.s32.totalorder %s229, %s231
      %p235 = scmp.eq.s32.totalorder %s34, 0
      %p236 = por %p234, %p235
      %p237 = scmp.ne.s32.totalorder %s229, %s231
      %p238 = scmp.eq.s32.totalorder %s39, 7
      %p239 = por %p237, %p238
      %p240 = scmp.ne.s32.totalorder %s231, %s232
      %p241 = scmp.eq.s32.totalorder %s39, 0
      %p242 = por %p240, %p241
      %p243 = scmp.ne.s32.totalorder %s231, %s232
      %p244 = scmp.eq.s32.totalorder %s40, 7
      %p245 = por %p243, %p244
      %p247 = scmp.ne.s32.totalorder %s232, %s246
      %p248 = scmp.eq.s32.totalorder %s40, 0
      %p249 = por %p247, %p248
      %s251 = sadd.s32 %s250, 1
      %p254 = scmp.eq.s32.totalorder %s34, 7
      %p255 = scmp.ne.s32.totalorder %s250, %s252
      %p256 = scmp.eq.s32.totalorder %s34, 0
      %p257 = por %p255, %p256
      %p258 = scmp.ne.s32.totalorder %s250, %s252
      %p259 = scmp.eq.s32.totalorder %s39, 7
      %p260 = por %p258, %p259
      %p261 = scmp.ne.s32.totalorder %s252, %s253
      %p262 = scmp.eq.s32.totalorder %s39, 0
      %p263 = por %p261, %p262
      %p264 = scmp.ne.s32.totalorder %s252, %s253
      %p265 = scmp.eq.s32.totalorder %s40, 7
      %p266 = por %p264, %p265
      %p268 = scmp.ne.s32.totalorder %s253, %s267
      %p269 = scmp.eq.s32.totalorder %s40, 0
      %p270 = por %p268, %p269
      %s272 = sadd.s32 %s271, 1
      %p275 = scmp.eq.s32.totalorder %s34, 7
      %p276 = scmp.ne.s32.totalorder %s271, %s273
      %p277 = scmp.eq.s32.totalorder %s34, 0
      %p278 = por %p276, %p277
      %p279 = scmp.ne.s32.totalorder %s271, %s273
      %p280 = scmp.eq.s32.totalorder %s39, 7
      %p281 = por %p279, %p280
      %p282 = scmp.ne.s32.totalorder %s273, %s274
      %p283 = scmp.eq.s32.totalorder %s39, 0
      %p284 = por %p282, %p283
      %p285 = scmp.ne.s32.totalorder %s273, %s274
      %p286 = scmp.eq.s32.totalorder %s40, 7
      %p287 = por %p285, %p286
      %p289 = scmp.ne.s32.totalorder %s274, %s288
      %p290 = scmp.eq.s32.totalorder %s40, 0
      %p291 = por %p289, %p290
      %s293 = sadd.s32 %s292, 1
      %p296 = scmp.eq.s32.totalorder %s34, 7
      %p297 = scmp.ne.s32.totalorder %s292, %s294
      %p298 = scmp.eq.s32.totalorder %s34, 0
      %p299 = por %p297, %p298
      %p300 = scmp.ne.s32.totalorder %s292, %s294
      %p301 = scmp.eq.s32.totalorder %s39, 7
      %p302 = por %p300, %p301
      %p303 = scmp.ne.s32.totalorder %s294, %s295
      %p304 = scmp.eq.s32.totalorder %s39, 0
      %p305 = por %p303, %p304
      %p306 = scmp.ne.s32.totalorder %s294, %s295
      %p307 = scmp.eq.s32.totalorder %s40, 7
      %p308 = por %p306, %p307
      %p310 = scmp.ne.s32.totalorder %s295, %s309
      %p311 = scmp.eq.s32.totalorder %s40, 0
      %p312 = por %p310, %p311
      %s314 = sadd.s32 %s313, 1
      %p317 = scmp.eq.s32.totalorder %s34, 7
      %p318 = scmp.ne.s32.totalorder %s313, %s315
      %p319 = scmp.eq.s32.totalorder %s34, 0
      %p320 = por %p318, %p319
      %p321 = scmp.ne.s32.totalorder %s313, %s315
      %p322 = scmp.eq.s32.totalorder %s39, 7
      %p323 = por %p321, %p322
      %p324 = scmp.ne.s32.totalorder %s315, %s316
      %p325 = scmp.eq.s32.totalorder %s39, 0
      %p326 = por %p324, %p325
      %p327 = scmp.ne.s32.totalorder %s315, %s316
      %p328 = scmp.eq.s32.totalorder %s40, 7
      %p329 = por %p327, %p328
      %p331 = scmp.ne.s32.totalorder %s316, %s330
      %p332 = scmp.eq.s32.totalorder %s40, 0
      %p333 = por %p331, %p332
      %s335 = sadd.s32 %s334, 1
      %p338 = scmp.eq.s32.totalorder %s34, 7
      %p339 = scmp.ne.s32.totalorder %s334, %s336
      %p340 = scmp.eq.s32.totalorder %s34, 0
      %p341 = por %p339, %p340
      %p342 = scmp.ne.s32.totalorder %s334, %s336
      %p343 = scmp.eq.s32.totalorder %s39, 7
      %p344 = por %p342, %p343
      %p345 = scmp.ne.s32.totalorder %s336, %s337
      %p346 = scmp.eq.s32.totalorder %s39, 0
      %p347 = por %p345, %p346
      %p348 = scmp.ne.s32.totalorder %s336, %s337
      %p349 = scmp.eq.s32.totalorder %s40, 7
      %p350 = por %p348, %p349
      %p352 = scmp.ne.s32.totalorder %s337, %s351
      %p353 = scmp.eq.s32.totalorder %s40, 0
      %p354 = por %p352, %p353
      %s356 = sadd.s32 %s355, 1
      %p359 = scmp.eq.s32.totalorder %s34, 7
      %p360 = scmp.ne.s32.totalorder %s355, %s357
      %p361 = scmp.eq.s32.totalorder %s34, 0
      %p362 = por %p360, %p361
      %p363 = scmp.ne.s32.totalorder %s355, %s357
      %p364 = scmp.eq.s32.totalorder %s39, 7
      %p365 = por %p363, %p364
      %p366 = scmp.ne.s32.totalorder %s357, %s358
      %p367 = scmp.eq.s32.totalorder %s39, 0
      %p368 = por %p366, %p367
      %p369 = scmp.ne.s32.totalorder %s357, %s358
      %p370 = scmp.eq.s32.totalorder %s40, 7
      %p371 = por %p369, %p370
      %p373 = scmp.ne.s32.totalorder %s358, %s372
      %p374 = scmp.eq.s32.totalorder %s40, 0
      %p375 = por %p373, %p374
      %s377 = sadd.s32 %s376, 1
      %p380 = scmp.eq.s32.totalorder %s34, 7
      %p381 = scmp.ne.s32.totalorder %s376, %s378
      %p382 = scmp.eq.s32.totalorder %s34, 0
      %p383 = por %p381, %p382
      %p384 = scmp.ne.s32.totalorder %s376, %s378
      %p385 = scmp.eq.s32.totalorder %s39, 7
      %p386 = por %p384, %p385
      %p387 = scmp.ne.s32.totalorder %s378, %s379
      %p388 = scmp.eq.s32.totalorder %s39, 0
      %p389 = por %p387, %p388
      %p390 = scmp.ne.s32.totalorder %s378, %s379
      %p391 = scmp.eq.s32.totalorder %s40, 7
      %p392 = por %p390, %p391
      %p394 = scmp.ne.s32.totalorder %s379, %s393
      %p395 = scmp.eq.s32.totalorder %s40, 0
      %p396 = por %p394, %p395
      %s397 = ssub.s32 %s41, %s60
      %s398 = ssub.s32 %s42, %s56
      %s399 = sor.u32 %s397, %s398
      %p400 = scmp.eq.s32.totalorder %s399, 0
      %s402 = sadd.s32 %s401, 1
      %s403 = scalar_select %p400, %s401, %s402
      %p406 = pneg %p400
      %p407 = scmp.eq.s32.totalorder %s34, 7
      %p408 = por %p406, %p407
      %p409 = scmp.ne.s32.totalorder %s401, %s404
      %p410 = scmp.eq.s32.totalorder %s34, 0
      %p411 = por %p409, %p410
      %p412 = scmp.ne.s32.totalorder %s401, %s404
      %p413 = scmp.eq.s32.totalorder %s39, 7
      %p414 = por %p412, %p413
      %p415 = scmp.ne.s32.totalorder %s404, %s405
      %p416 = scmp.eq.s32.totalorder %s39, 0
      %p417 = por %p415, %p416
      %p418 = scmp.ne.s32.totalorder %s404, %s405
      %p419 = scmp.eq.s32.totalorder %s40, 7
      %p420 = por %p418, %p419
      %p422 = scmp.ne.s32.totalorder %s405, %s421
      %p423 = scmp.eq.s32.totalorder %s40, 0
      %p424 = por %p422, %p423
      %p425 = scmp.le.s32.totalorder 1, %s34
      %p426 = scmp.lt.s32.totalorder %s34, 9
      %p427 = pnand %p425, %p426
      %p428 = pneg %p427
      // Predicated region
      $region9: #{tpu_custom_call.1} parent=5 // pred_check
        _
      $region10: #{tpu_custom_call.1} parent=5 // pred_check_branch
        %430 = sbr.rel (%p427) target = $region12
      $region11: #{tpu_custom_call.1} parent=5 // pred_region
        %s431 = ssub.s32 %s34, 1
        // Predicated region
        $region13: #{tpu_custom_call.1} parent=11 // pred_check
          %p432 = pneg %p158
        $region14: #{tpu_custom_call.1} parent=11 // pred_check_branch
          %434 = sbr.rel (%p432) target = $region16
        $region15: #{tpu_custom_call.1} parent=11 // pred_region
          %436 = vsyncadd [#allocation13], 0
          %s437 = sshll.u32 %s3, 4
          %s438 = int_to_ptr.hbm [resolvable:$true] %s437
          %s439 = sshll.u32 [#allocation12], 4
          %s440 = int_to_ptr.vmem [resolvable:$true] %s439
          %445 = dma.hbm_to_vmem [thread:$0]  %s438, 4096, %s440, [#allocation13], 128, 128, 8
        $region16: #{tpu_custom_call.1} parent=11 // pred_fallthru
          _
        // Predicated region
        $region17: #{tpu_custom_call.1} parent=11 // pred_check
          %p446 = pneg %p179
        $region18: #{tpu_custom_call.1} parent=11 // pred_check_branch
          %448 = sbr.rel (%p446) target = $region20
        $region19: #{tpu_custom_call.1} parent=11 // pred_region
          _
        $region20: #{tpu_custom_call.1} parent=11 // pred_fallthru
          _
        // Predicated region
        $region21: #{tpu_custom_call.1} parent=11 // pred_check
          %p449 = pneg %p200
        $region22: #{tpu_custom_call.1} parent=11 // pred_check_branch
          %451 = sbr.rel (%p449) target = $region24
        $region23: #{tpu_custom_call.1} parent=11 // pred_region
          %453 = vsyncadd [#allocation13], 0
          %s454 = sshll.u32 %s5, 4
          %s455 = int_to_ptr.hbm [resolvable:$true] %s454
          %s456 = sshll.u32 [#allocation14], 4
          %s457 = int_to_ptr.vmem [resolvable:$true] %s456
          %462 = dma.hbm_to_vmem [thread:$0]  %s455, 4096, %s457, [#allocation13], 128, 128, 8
        $region24: #{tpu_custom_call.1} parent=11 // pred_fallthru
          _
        // Predicated region
        $region25: #{tpu_custom_call.1} parent=11 // pred_check
          %p463 = pneg %p221
        $region26: #{tpu_custom_call.1} parent=11 // pred_check_branch
          %465 = sbr.rel (%p463) target = $region28
        $region27: #{tpu_custom_call.1} parent=11 // pred_region
          %467 = vsyncadd [#allocation16], 0
          %s469 = sshll.u32 %s6, 4
          %s470 = int_to_ptr.hbm [resolvable:$true] %s469
          %s471 = sshll.u32 [#allocation15], 4
          %s472 = int_to_ptr.vmem [resolvable:$true] %s471
          %474 = dma.hbm_to_vmem [thread:$0]  %s470, 32, %s472, [#allocation16]
        $region28: #{tpu_custom_call.1} parent=11 // pred_fallthru
          _
        // Predicated region
        $region29: #{tpu_custom_call.1} parent=11 // pred_check
          %p475 = pneg %p242
        $region30: #{tpu_custom_call.1} parent=11 // pred_check_branch
          %477 = sbr.rel (%p475) target = $region32
        $region31: #{tpu_custom_call.1} parent=11 // pred_region
          %479 = vsyncadd [#allocation16], 0
          %s480 = sshll.u32 %s7, 4
          %s481 = int_to_ptr.hbm [resolvable:$true] %s480
          %s482 = sshll.u32 [#allocation17], 4
          %s483 = int_to_ptr.vmem [resolvable:$true] %s482
          %488 = dma.hbm_to_vmem [thread:$0]  %s481, 8192, %s483, [#allocation16], 256, 256, 16
        $region32: #{tpu_custom_call.1} parent=11 // pred_fallthru
          _
        // Predicated region
        $region33: #{tpu_custom_call.1} parent=11 // pred_check
          %p489 = pneg %p263
        $region34: #{tpu_custom_call.1} parent=11 // pred_check_branch
          %491 = sbr.rel (%p489) target = $region36
        $region35: #{tpu_custom_call.1} parent=11 // pred_region
          _
        $region36: #{tpu_custom_call.1} parent=11 // pred_fallthru
          _
        // Predicated region
        $region37: #{tpu_custom_call.1} parent=11 // pred_check
          %p492 = pneg %p284
        $region38: #{tpu_custom_call.1} parent=11 // pred_check_branch
          %494 = sbr.rel (%p492) target = $region40
        $region39: #{tpu_custom_call.1} parent=11 // pred_region
          %496 = vsyncadd [#allocation19], 0
          %s497 = sshll.u32 %s9, 4
          %s498 = int_to_ptr.hbm [resolvable:$true] %s497
          %s499 = sshll.u32 [#allocation18], 4
          %s500 = int_to_ptr.vmem [resolvable:$true] %s499
          %505 = dma.hbm_to_vmem [thread:$0]  %s498, 8192, %s500, [#allocation19], 128, 128, 8
        $region40: #{tpu_custom_call.1} parent=11 // pred_fallthru
          _
        // Predicated region
        $region41: #{tpu_custom_call.1} parent=11 // pred_check
          %p506 = pneg %p305
        $region42: #{tpu_custom_call.1} parent=11 // pred_check_branch
          %508 = sbr.rel (%p506) target = $region44
        $region43: #{tpu_custom_call.1} parent=11 // pred_region
          _
        $region44: #{tpu_custom_call.1} parent=11 // pred_fallthru
          _
        // Predicated region
        $region45: #{tpu_custom_call.1} parent=11 // pred_check
          %p509 = pneg %p326
        $region46: #{tpu_custom_call.1} parent=11 // pred_check_branch
          %511 = sbr.rel (%p509) target = $region48
        $region47: #{tpu_custom_call.1} parent=11 // pred_region
          _
        $region48: #{tpu_custom_call.1} parent=11 // pred_fallthru
          _
        // Predicated region
        $region49: #{tpu_custom_call.1} parent=11 // pred_check
          %p512 = pneg %p347
        $region50: #{tpu_custom_call.1} parent=11 // pred_check_branch
          %514 = sbr.rel (%p512) target = $region52
        $region51: #{tpu_custom_call.1} parent=11 // pred_region
          %516 = vsyncadd [#allocation19], 0
          %s518 = sshll.u32 %s12, 4
          %s519 = int_to_ptr.hbm [resolvable:$true] %s518
          %s520 = sshll.u32 [#allocation20], 4
          %s521 = int_to_ptr.vmem [resolvable:$true] %s520
          %523 = dma.hbm_to_vmem [thread:$0]  %s519, 32, %s521, [#allocation19]
        $region52: #{tpu_custom_call.1} parent=11 // pred_fallthru
          _
        // Predicated region
        $region53: #{tpu_custom_call.1} parent=11 // pred_check
          %p524 = pneg %p368
        $region54: #{tpu_custom_call.1} parent=11 // pred_check_branch
          %526 = sbr.rel (%p524) target = $region56
        $region55: #{tpu_custom_call.1} parent=11 // pred_region
          _
        $region56: #{tpu_custom_call.1} parent=11 // pred_fallthru
          _
        // Predicated region
        $region57: #{tpu_custom_call.1} parent=11 // pred_check
          %p527 = pneg %p389
        $region58: #{tpu_custom_call.1} parent=11 // pred_check_branch
          %529 = sbr.rel (%p527) target = $region60
        $region59: #{tpu_custom_call.1} parent=11 // pred_region
          %531 = vsyncadd [#allocation22], 0
          %s533 = sshll.u32 %s14, 4
          %s534 = int_to_ptr.hbm [resolvable:$true] %s533
          %s535 = sshll.u32 [#allocation21], 4
          %s536 = int_to_ptr.vmem [resolvable:$true] %s535
          %538 = dma.hbm_to_vmem [thread:$0]  %s534, 32, %s536, [#allocation22]
        $region60: #{tpu_custom_call.1} parent=11 // pred_fallthru
          _
      $region12: #{tpu_custom_call.1} parent=5 // pred_fallthru
        _
      %p539 = scmp.lt.s32.totalorder %s34, 8
      // Predicated region
      $region61: #{tpu_custom_call.1} parent=5 // pred_check
        %p540 = pneg %p539
      $region62: #{tpu_custom_call.1} parent=5 // pred_check_branch
        %542 = sbr.rel (%p540) target = $region64
      $region63: #{tpu_custom_call.1} parent=5 // pred_region
        // Predicated region
        $region65: #{tpu_custom_call.1} parent=63 // pred_check
          %p543 = pneg %p75
        $region66: #{tpu_custom_call.1} parent=63 // pred_check_branch
          %545 = sbr.rel (%p543) target = $region68
        $region67: #{tpu_custom_call.1} parent=63 // pred_region
          %s546 = sand.u32 %s65, 1
          %s547 = scalar_lea.sflag [#allocation7], %s546
          %s548 = sand.u32 %s65, 1
          %s549 = smul.addr %s548, 64
          %s550 = scalar_lea.vmem [#allocation6], %s549
          %s551 = smul.u32 4, %s42
          %553 = vsyncadd %s547, 0
          %s554 = smul.addr %s551, 2
          %s555 = smul.addr %s41, 16
          %s556 = sadd.s32 %s554, %s555
          %s557 = smul.addr %s556, 8
          %s558 = scalar_lea.hbm %s0, %s557
          %s559 = sshll.u32 %s558, 4
          %s560 = int_to_ptr.hbm [resolvable:$true] %s559
          %s561 = sshll.u32 %s550, 4
          %s562 = int_to_ptr.vmem [resolvable:$true] %s561
          %567 = dma.hbm_to_vmem [thread:$0]  %s560, 1024, %s562, %s547, 256, 256, 16
        $region68: #{tpu_custom_call.1} parent=63 // pred_fallthru
          _
        // Predicated region
        $region69: #{tpu_custom_call.1} parent=63 // pred_check
          %p568 = pneg %p103
        $region70: #{tpu_custom_call.1} parent=63 // pred_check_branch
          %570 = sbr.rel (%p568) target = $region72
        $region71: #{tpu_custom_call.1} parent=63 // pred_region
          #allocation25 [shape = 'u32[6]{0}', space=smem, size = 0x18, scoped, tag = 'DMA stride descriptor']
          %s571 = sand.u32 %s34, 1
          %s572 = scalar_lea.sflag [#allocation10], %s571
          %s573 = sand.u32 %s93, 1
          %s574 = smul.addr %s573, 32
          %s575 = scalar_lea.vmem [#allocation9], %s574
          %s576 = smul.u32 4, %s43
          %578 = vsyncadd %s572, 0
          %s579 = smul.addr %s41, 16
          %s580 = sadd.s32 %s576, %s579
          %s581 = smul.addr %s580, 4
          %s582 = scalar_lea.hbm %s1, %s581
          %s584 = sshll.u32 1, 14
          %s585 = sxor.u32 4294967295, %s584
          %s587 = sld [smem:[#allocation0]]
          %s588 = sadd.s32 2, %s587
          %s590 = sshll.u32 7, 26
          %s591 = sxor.u32 4294967295, %s590
          %s592 = sand.u32 0, %s591
          %s593 = sshll.u32 %s588, 26
          %s594 = sor.u32 %s592, %s593
          %s595 = sshll.u32 %s582, 4
          %s596 = int_to_ptr.hbm [resolvable:$true] %s595
          %s597 = sshll.u32 %s575, 4
          %s598 = int_to_ptr.vmem [resolvable:$true] %s597
          %604 = sst [smem:[#allocation25]] 512
          %s605 = scalar_lea.smem [#allocation25], 1
          %606 = sst [smem:[%s605]] 256
          %s607 = scalar_lea.smem [#allocation25], 2
          %608 = sst [smem:[%s607]] 4
          %s609 = scalar_lea.smem [#allocation25], 3
          %610 = sst [smem:[%s609]] 64
          %s611 = scalar_lea.smem [#allocation25], 4
          %612 = sst [smem:[%s611]] 64
          %s613 = scalar_lea.smem [#allocation25], 5
          %614 = sst [smem:[%s613]] 4
          %616 = dma.general %s596, 512, %s598, %s572, [#allocation24], [#allocation25], %s594, 0
        $region72: #{tpu_custom_call.1} parent=63 // pred_fallthru
          _
        // Predicated region
        $region73: #{tpu_custom_call.1} parent=63 // pred_check
          %p617 = pneg %p131
        $region74: #{tpu_custom_call.1} parent=63 // pred_check_branch
          %619 = sbr.rel (%p617) target = $region76
        $region75: #{tpu_custom_call.1} parent=63 // pred_region
          #allocation27 [shape = 'u32[6]{0}', space=smem, size = 0x18, scoped, tag = 'DMA stride descriptor']
          %s620 = sand.u32 %s34, 1
          %s621 = scalar_lea.sflag [#allocation10], %s620
          %s622 = sand.u32 %s121, 1
          %s623 = smul.addr %s622, 32
          %s624 = scalar_lea.vmem [#allocation11], %s623
          %s625 = smul.u32 4, %s43
          %627 = vsyncadd %s621, 0
          %s628 = smul.addr %s41, 16
          %s629 = sadd.s32 %s625, %s628
          %s630 = smul.addr %s629, 4
          %s631 = scalar_lea.hbm %s2, %s630
          %s633 = sshll.u32 1, 14
          %s634 = sxor.u32 4294967295, %s633
          %s636 = sld [smem:[#allocation0]]
          %s637 = sadd.s32 2, %s636
          %s639 = sshll.u32 7, 26
          %s640 = sxor.u32 4294967295, %s639
          %s641 = sand.u32 0, %s640
          %s642 = sshll.u32 %s637, 26
          %s643 = sor.u32 %s641, %s642
          %s644 = sshll.u32 %s631, 4
          %s645 = int_to_ptr.hbm [resolvable:$true] %s644
          %s646 = sshll.u32 %s624, 4
          %s647 = int_to_ptr.vmem [resolvable:$true] %s646
          %653 = sst [smem:[#allocation27]] 512
          %s654 = scalar_lea.smem [#allocation27], 1
          %655 = sst [smem:[%s654]] 256
          %s656 = scalar_lea.smem [#allocation27], 2
          %657 = sst [smem:[%s656]] 4
          %s658 = scalar_lea.smem [#allocation27], 3
          %659 = sst [smem:[%s658]] 64
          %s660 = scalar_lea.smem [#allocation27], 4
          %661 = sst [smem:[%s660]] 64
          %s662 = scalar_lea.smem [#allocation27], 5
          %663 = sst [smem:[%s662]] 4
          %665 = dma.general %s645, 512, %s647, %s621, [#allocation26], [#allocation27], %s643, 0
        $region76: #{tpu_custom_call.1} parent=63 // pred_fallthru
          _
      $region64: #{tpu_custom_call.1} parent=5 // pred_fallthru
        _
      %p666 = scmp.le.s32.totalorder 1, %s34
      %p667 = scmp.lt.s32.totalorder %s34, 9
      %p668 = pnand %p666, %p667
      %p669 = pneg %p668
      // Predicated region
      $region77: #{tpu_custom_call.1} parent=5 // pred_check
        _
      $region78: #{tpu_custom_call.1} parent=5 // pred_check_branch
        %671 = sbr.rel (%p668) target = $region80
      $region79: #{tpu_custom_call.1} parent=5 // pred_region
        %s672 = ssub.s32 %s34, 1
        %s673 = sand.u32 %s68, 1
        %s674 = scalar_lea.sflag [#allocation7], %s673
        %s675 = sand.u32 %s68, 1
        %s676 = smul.addr %s675, 64
        %s677 = scalar_lea.vmem [#allocation6], %s676
        // Predicated region
        $region81: #{tpu_custom_call.1} parent=79 // pred_check
          %p678 = pneg %p81
        $region82: #{tpu_custom_call.1} parent=79 // pred_check_branch
          %680 = sbr.rel (%p678) target = $region84
        $region83: #{tpu_custom_call.1} parent=79 // pred_region
          %682 = dma.done %s674, 1024
        $region84: #{tpu_custom_call.1} parent=79 // pred_fallthru
          _
        %s683 = sand.u32 %s39, 1
        %s684 = scalar_lea.sflag [#allocation10], %s683
        %s685 = sand.u32 %s96, 1
        %s686 = smul.addr %s685, 32
        %s687 = scalar_lea.vmem [#allocation9], %s686
        // Predicated region
        $region85: #{tpu_custom_call.1} parent=79 // pred_check
          %p688 = pneg %p109
        $region86: #{tpu_custom_call.1} parent=79 // pred_check_branch
          %690 = sbr.rel (%p688) target = $region88
        $region87: #{tpu_custom_call.1} parent=79 // pred_region
          %692 = dma.done %s684, 512
        $region88: #{tpu_custom_call.1} parent=79 // pred_fallthru
          _
        %s693 = sand.u32 %s39, 1
        %s694 = scalar_lea.sflag [#allocation10], %s693
        %s695 = sand.u32 %s124, 1
        %s696 = smul.addr %s695, 32
        %s697 = scalar_lea.vmem [#allocation11], %s696
        // Predicated region
        $region89: #{tpu_custom_call.1} parent=79 // pred_check
          %p698 = pneg %p137
        $region90: #{tpu_custom_call.1} parent=79 // pred_check_branch
          %700 = sbr.rel (%p698) target = $region92
        $region91: #{tpu_custom_call.1} parent=79 // pred_region
          %702 = dma.done %s694, 512
        $region92: #{tpu_custom_call.1} parent=79 // pred_fallthru
          _
        // Predicated region
        $region93: #{tpu_custom_call.1} parent=79 // pred_check
          %p703 = pneg %p158
        $region94: #{tpu_custom_call.1} parent=79 // pred_check_branch
          %705 = sbr.rel (%p703) target = $region96
        $region95: #{tpu_custom_call.1} parent=79 // pred_region
          %707 = dma.done [#allocation13], 4096
        $region96: #{tpu_custom_call.1} parent=79 // pred_fallthru
          _
        // Predicated region
        $region97: #{tpu_custom_call.1} parent=79 // pred_check
          %p708 = pneg %p200
        $region98: #{tpu_custom_call.1} parent=79 // pred_check_branch
          %710 = sbr.rel (%p708) target = $region100
        $region99: #{tpu_custom_call.1} parent=79 // pred_region
          %712 = dma.done [#allocation13], 4096
        $region100: #{tpu_custom_call.1} parent=79 // pred_fallthru
          _
        // Predicated region
        $region101: #{tpu_custom_call.1} parent=79 // pred_check
          %p713 = pneg %p221
        $region102: #{tpu_custom_call.1} parent=79 // pred_check_branch
          %715 = sbr.rel (%p713) target = $region104
        $region103: #{tpu_custom_call.1} parent=79 // pred_region
          %717 = dma.done [#allocation16], 32
        $region104: #{tpu_custom_call.1} parent=79 // pred_fallthru
          _
        // Predicated region
        $region105: #{tpu_custom_call.1} parent=79 // pred_check
          %p718 = pneg %p242
        $region106: #{tpu_custom_call.1} parent=79 // pred_check_branch
          %720 = sbr.rel (%p718) target = $region108
        $region107: #{tpu_custom_call.1} parent=79 // pred_region
          %722 = dma.done [#allocation16], 8192
        $region108: #{tpu_custom_call.1} parent=79 // pred_fallthru
          _
        // Predicated region
        $region109: #{tpu_custom_call.1} parent=79 // pred_check
          %p723 = pneg %p284
        $region110: #{tpu_custom_call.1} parent=79 // pred_check_branch
          %725 = sbr.rel (%p723) target = $region112
        $region111: #{tpu_custom_call.1} parent=79 // pred_region
          %727 = dma.done [#allocation19], 8192
        $region112: #{tpu_custom_call.1} parent=79 // pred_fallthru
          _
        // Predicated region
        $region113: #{tpu_custom_call.1} parent=79 // pred_check
          %p728 = pneg %p347
        $region114: #{tpu_custom_call.1} parent=79 // pred_check_branch
          %730 = sbr.rel (%p728) target = $region116
        $region115: #{tpu_custom_call.1} parent=79 // pred_region
          %732 = dma.done [#allocation19], 32
        $region116: #{tpu_custom_call.1} parent=79 // pred_fallthru
          _
        // Predicated region
        $region117: #{tpu_custom_call.1} parent=79 // pred_check
          %p733 = pneg %p389
        $region118: #{tpu_custom_call.1} parent=79 // pred_check_branch
          %735 = sbr.rel (%p733) target = $region120
        $region119: #{tpu_custom_call.1} parent=79 // pred_region
          %737 = dma.done [#allocation22], 32
        $region120: #{tpu_custom_call.1} parent=79 // pred_fallthru
          _
        %s738 = sand.u32 %s68, 1
        %s739 = scalar_lea.sflag [#allocation7], %s738
        %s740 = sand.u32 %s68, 1
        %s741 = smul.addr %s740, 64
        %s742 = scalar_lea.vmem [#allocation6], %s741
        %p743 = pneg %p81
        %p744 = pneg %p78
        %s745 = sand.u32 %s39, 1
        %s746 = scalar_lea.sflag [#allocation10], %s745
        %s747 = sand.u32 %s96, 1
        %s748 = smul.addr %s747, 32
        %s749 = scalar_lea.vmem [#allocation9], %s748
        %p750 = pneg %p109
        %p751 = pneg %p106
        %s752 = sand.u32 %s39, 1
        %s753 = scalar_lea.sflag [#allocation10], %s752
        %s754 = sand.u32 %s124, 1
        %s755 = smul.addr %s754, 32
        %s756 = scalar_lea.vmem [#allocation11], %s755
        %p757 = pneg %p137
        %p758 = pneg %p134
        %p759 = pneg %p158
        %p760 = pneg %p155
        %p761 = pneg %p179
        %p762 = pneg %p176
        %p763 = pneg %p200
        %p764 = pneg %p197
        %p765 = pneg %p221
        %p766 = pneg %p218
        %p767 = pneg %p242
        %p768 = pneg %p239
        %p769 = pneg %p263
        %p770 = pneg %p260
        %p771 = pneg %p284
        %p772 = pneg %p281
        %p773 = pneg %p305
        %p774 = pneg %p302
        %p775 = pneg %p326
        %p776 = pneg %p323
        %p777 = pneg %p347
        %p778 = pneg %p344
        %p779 = pneg %p368
        %p780 = pneg %p365
        %p781 = pneg %p389
        %p782 = pneg %p386
        %p783 = pneg %p417
        %p784 = pneg %p414
        %s785 = sand.u32 %s404, 1
        %s786 = scalar_lea.sflag [#allocation8], %s785
        %s787 = sand.u32 %s404, 1
        %s788 = smul.addr %s787, 64
        %s789 = scalar_lea.vmem [#allocation23], %s788
        %s790 = smul.u32 4, %s45
        %s791 = smul.u32 4, %s46
        %s792 = smul.u32 4, %s46
        %s793 = smul.u32 4, %s45
        %p795 = scmp.eq.s32.totalorder %s46, 0
        // Predicated region
        $region121: #{tpu_custom_call.1} parent=79 // pred_check
          %p796 = pneg %p795
        $region122: #{tpu_custom_call.1} parent=79 // pred_check_branch
          %798 = sbr.rel (%p796) target = $region124
        $region123: #{tpu_custom_call.1} parent=79 // pred_region
          %v799 = vld [vmem:[%s677] sm:$0xff]
          %v800 = vld [vmem:[%s677 + $0x8] sm:$0xff]
          %v801 = vld [vmem:[%s677 + $0x10] sm:$0xff]
          %v802 = vld [vmem:[%s677 + $0x18] sm:$0xff]
          %v803 = vld [vmem:[%s677 + $0x20] sm:$0xff]
          %v804 = vld [vmem:[%s677 + $0x28] sm:$0xff]
          %v805 = vld [vmem:[%s677 + $0x30] sm:$0xff]
          %v806 = vld [vmem:[%s677 + $0x38] sm:$0xff]
          %v807 = vpack.c.bf16 %v801, %v799
          %v808 = vpack.c.bf16 %v802, %v800
          %v809 = vpack.c.bf16 %v805, %v803
          %v810 = vpack.c.bf16 %v806, %v804
          %v811 = vld [vmem:[#allocation12] sm:$0xff]
          %v812 = vld [vmem:[#allocation12 + $0x8] sm:$0xff]
          %v813 = vld [vmem:[#allocation12 + $0x10] sm:$0xff]
          %v814 = vld [vmem:[#allocation12 + $0x18] sm:$0xff]
          %v815 = vld [vmem:[#allocation12 + $0x20] sm:$0xff]
          %v816 = vld [vmem:[#allocation12 + $0x28] sm:$0xff]
          %v817 = vld [vmem:[#allocation12 + $0x30] sm:$0xff]
          %v818 = vld [vmem:[#allocation12 + $0x38] sm:$0xff]
          %v819 = vld [vmem:[#allocation12 + $0x40] sm:$0xff]
          %v820 = vld [vmem:[#allocation12 + $0x48] sm:$0xff]
          %v821 = vld [vmem:[#allocation12 + $0x50] sm:$0xff]
          %v822 = vld [vmem:[#allocation12 + $0x58] sm:$0xff]
          %v823 = vld [vmem:[#allocation12 + $0x60] sm:$0xff]
          %v824 = vld [vmem:[#allocation12 + $0x68] sm:$0xff]
          %v825 = vld [vmem:[#allocation12 + $0x70] sm:$0xff]
          %v826 = vld [vmem:[#allocation12 + $0x78] sm:$0xff]
          %v827 = vld [vmem:[#allocation12 + $0x80] sm:$0xff]
          %v828 = vld [vmem:[#allocation12 + $0x88] sm:$0xff]
          %v829 = vld [vmem:[#allocation12 + $0x90] sm:$0xff]
          %v830 = vld [vmem:[#allocation12 + $0x98] sm:$0xff]
          %v831 = vld [vmem:[#allocation12 + $0xa0] sm:$0xff]
          %v832 = vld [vmem:[#allocation12 + $0xa8] sm:$0xff]
          %v833 = vld [vmem:[#allocation12 + $0xb0] sm:$0xff]
          %v834 = vld [vmem:[#allocation12 + $0xb8] sm:$0xff]
          %v835 = vld [vmem:[#allocation12 + $0xc0] sm:$0xff]
          %v836 = vld [vmem:[#allocation12 + $0xc8] sm:$0xff]
          %v837 = vld [vmem:[#allocation12 + $0xd0] sm:$0xff]
          %v838 = vld [vmem:[#allocation12 + $0xd8] sm:$0xff]
          %v839 = vld [vmem:[#allocation12 + $0xe0] sm:$0xff]
          %v840 = vld [vmem:[#allocation12 + $0xe8] sm:$0xff]
          %v841 = vld [vmem:[#allocation12 + $0xf0] sm:$0xff]
          %v842 = vld [vmem:[#allocation12 + $0xf8] sm:$0xff]
          %v843 = vld [vmem:[%s4] sm:$0x3]
          %v845 = vperm.slane %v843, 0
          %v846 = vperm.slane %v843, 1
          %v881 = vunpack.c.l.b16 %v811
          %v882 = vunpack.c.h.b16 %v811
          %v883 = vunpack.c.l.b16 %v812
          %v884 = vunpack.c.h.b16 %v812
          %v885 = vunpack.c.l.b16 %v813
          %v886 = vunpack.c.h.b16 %v813
          %v887 = vunpack.c.l.b16 %v814
          %v888 = vunpack.c.h.b16 %v814
          %v889 = vunpack.c.l.b16 %v815
          %v890 = vunpack.c.h.b16 %v815
          %v891 = vunpack.c.l.b16 %v816
          %v892 = vunpack.c.h.b16 %v816
          %v893 = vunpack.c.l.b16 %v817
          %v894 = vunpack.c.h.b16 %v817
          %v895 = vunpack.c.l.b16 %v818
          %v896 = vunpack.c.h.b16 %v818
          %v897 = vunpack.c.l.b16 %v819
          %v898 = vunpack.c.h.b16 %v819
          %v899 = vunpack.c.l.b16 %v820
          %v900 = vunpack.c.h.b16 %v820
          %v901 = vunpack.c.l.b16 %v821
          %v902 = vunpack.c.h.b16 %v821
          %v903 = vunpack.c.l.b16 %v822
          %v904 = vunpack.c.h.b16 %v822
          %v905 = vunpack.c.l.b16 %v823
          %v906 = vunpack.c.h.b16 %v823
          %v907 = vunpack.c.l.b16 %v824
          %v908 = vunpack.c.h.b16 %v824
          %v909 = vunpack.c.l.b16 %v825
          %v910 = vunpack.c.h.b16 %v825
          %v911 = vunpack.c.l.b16 %v826
          %v912 = vunpack.c.h.b16 %v826
          %v913 = vunpack.c.l.b16 %v827
          %v914 = vunpack.c.h.b16 %v827
          %v915 = vunpack.c.l.b16 %v828
          %v916 = vunpack.c.h.b16 %v828
          %v917 = vunpack.c.l.b16 %v829
          %v918 = vunpack.c.h.b16 %v829
          %v919 = vunpack.c.l.b16 %v830
          %v920 = vunpack.c.h.b16 %v830
          %v921 = vunpack.c.l.b16 %v831
          %v922 = vunpack.c.h.b16 %v831
          %v923 = vunpack.c.l.b16 %v832
          %v924 = vunpack.c.h.b16 %v832
          %v925 = vunpack.c.l.b16 %v833
          %v926 = vunpack.c.h.b16 %v833
          %v927 = vunpack.c.l.b16 %v834
          %v928 = vunpack.c.h.b16 %v834
          %v929 = vunpack.c.l.b16 %v835
          %v930 = vunpack.c.h.b16 %v835
          %v931 = vunpack.c.l.b16 %v836
          %v932 = vunpack.c.h.b16 %v836
          %v933 = vunpack.c.l.b16 %v837
          %v934 = vunpack.c.h.b16 %v837
          %v935 = vunpack.c.l.b16 %v838
          %v936 = vunpack.c.h.b16 %v838
          %v937 = vunpack.c.l.b16 %v839
          %v938 = vunpack.c.h.b16 %v839
          %v939 = vunpack.c.l.b16 %v840
          %v940 = vunpack.c.h.b16 %v840
          %v941 = vunpack.c.l.b16 %v841
          %v942 = vunpack.c.h.b16 %v841
          %v943 = vunpack.c.l.b16 %v842
          %v944 = vunpack.c.h.b16 %v842
          %v945 = vpack.c.b16 %v883, %v881
          %v946 = vpack.c.b16 %v884, %v882
          %v947 = vpack.c.b16 %v887, %v885
          %v948 = vpack.c.b16 %v888, %v886
          %v949 = vpack.c.b16 %v891, %v889
          %v950 = vpack.c.b16 %v892, %v890
          %v951 = vpack.c.b16 %v895, %v893
          %v952 = vpack.c.b16 %v896, %v894
          %v953 = vpack.c.b16 %v899, %v897
          %v954 = vpack.c.b16 %v900, %v898
          %v955 = vpack.c.b16 %v903, %v901
          %v956 = vpack.c.b16 %v904, %v902
          %v957 = vpack.c.b16 %v907, %v905
          %v958 = vpack.c.b16 %v908, %v906
          %v959 = vpack.c.b16 %v911, %v909
          %v960 = vpack.c.b16 %v912, %v910
          %v961 = vpack.c.b16 %v915, %v913
          %v962 = vpack.c.b16 %v916, %v914
          %v963 = vpack.c.b16 %v919, %v917
          %v964 = vpack.c.b16 %v920, %v918
          %v965 = vpack.c.b16 %v923, %v921
          %v966 = vpack.c.b16 %v924, %v922
          %v967 = vpack.c.b16 %v927, %v925
          %v968 = vpack.c.b16 %v928, %v926
          %v969 = vpack.c.b16 %v931, %v929
          %v970 = vpack.c.b16 %v932, %v930
          %v971 = vpack.c.b16 %v935, %v933
          %v972 = vpack.c.b16 %v936, %v934
          %v973 = vpack.c.b16 %v939, %v937
          %v974 = vpack.c.b16 %v940, %v938
          %v975 = vpack.c.b16 %v943, %v941
          %v976 = vpack.c.b16 %v944, %v942
          %1009 = vmatpush.bf16.msra.mxu0 %v959
          %1010 = vmatpush.bf16.msra.mxu0 %v957
          %1011 = vmatpush.bf16.msra.mxu0 %v955
          %1012 = vmatpush.bf16.msra.mxu0 %v953
          %1013 = vmatpush.bf16.msra.mxu0 %v951
          %1014 = vmatpush.bf16.msra.mxu0 %v949
          %1015 = vmatpush.bf16.msra.mxu0 %v947
          %1016 = vmatpush.bf16.msra.mxu0 %v945
          %1017 = vmatmul.bf16.gmra.mxu0 %v807
          %v1018 = vpop.f32.mrf.mxu0
          %v1019 = vadd.f32 %v845, %v1018
          %v1020 = vpop.f32.mrf.mxu0
          %v1021 = vadd.f32 %v845, %v1020
          %1022 = vmatmul.bf16.gmra.mxu0 %v809
          %v1023 = vpop.f32.mrf.mxu0
          %v1024 = vadd.f32 %v845, %v1023
          %v1025 = vpop.f32.mrf.mxu0
          %v1026 = vadd.f32 %v845, %v1025
          %1027 = vdwg.mxu0
          %1028 = vmatpush.bf16.msra.mxu0 %v975
          %1029 = vmatpush.bf16.msra.mxu0 %v973
          %1030 = vmatpush.bf16.msra.mxu0 %v971
          %1031 = vmatpush.bf16.msra.mxu0 %v969
          %1032 = vmatpush.bf16.msra.mxu0 %v967
          %1033 = vmatpush.bf16.msra.mxu0 %v965
          %1034 = vmatpush.bf16.msra.mxu0 %v963
          %1035 = vmatpush.bf16.msra.mxu0 %v961
          %1036 = vmatmul.bf16.gmra.mxu0 %v808
          %v1037 = vpop.f32.mrf.mxu0
          %v1038 = vadd.f32 %v1019, %v1037
          %v1039 = vpop.f32.mrf.mxu0
          %v1040 = vadd.f32 %v1021, %v1039
          %1041 = vmatmul.bf16.gmra.mxu0 %v810
          %v1042 = vpop.f32.mrf.mxu0
          %v1043 = vadd.f32 %v1024, %v1042
          %v1044 = vpop.f32.mrf.mxu0
          %v1045 = vadd.f32 %v1026, %v1044
          %1046 = vdwg.mxu0
          %1047 = vmatpush.bf16.msra.mxu0 %v960
          %1048 = vmatpush.bf16.msra.mxu0 %v958
          %1049 = vmatpush.bf16.msra.mxu0 %v956
          %1050 = vmatpush.bf16.msra.mxu0 %v954
          %1051 = vmatpush.bf16.msra.mxu0 %v952
          %1052 = vmatpush.bf16.msra.mxu0 %v950
          %1053 = vmatpush.bf16.msra.mxu0 %v948
          %1054 = vmatpush.bf16.msra.mxu0 %v946
          %1055 = vmatmul.bf16.gmra.mxu0 %v807
          %v1056 = vpop.f32.mrf.mxu0
          %v1057 = vadd.f32 %v846, %v1056
          %v1058 = vpop.f32.mrf.mxu0
          %v1059 = vadd.f32 %v846, %v1058
          %1060 = vmatmul.bf16.gmra.mxu0 %v809
          %v1061 = vpop.f32.mrf.mxu0
          %v1062 = vadd.f32 %v846, %v1061
          %v1063 = vpop.f32.mrf.mxu0
          %v1064 = vadd.f32 %v846, %v1063
          %1065 = vdwg.mxu0
          %1066 = vmatpush.bf16.msra.mxu0 %v976
          %1067 = vmatpush.bf16.msra.mxu0 %v974
          %1068 = vmatpush.bf16.msra.mxu0 %v972
          %1069 = vmatpush.bf16.msra.mxu0 %v970
          %1070 = vmatpush.bf16.msra.mxu0 %v968
          %1071 = vmatpush.bf16.msra.mxu0 %v966
          %1072 = vmatpush.bf16.msra.mxu0 %v964
          %1073 = vmatpush.bf16.msra.mxu0 %v962
          %1074 = vmatmul.bf16.gmra.mxu0 %v808
          %v1075 = vpop.f32.mrf.mxu0
          %v1076 = vadd.f32 %v1057, %v1075
          %v1077 = vpop.f32.mrf.mxu0
          %v1078 = vadd.f32 %v1059, %v1077
          %1079 = vmatmul.bf16.gmra.mxu0 %v810
          %v1080 = vpop.f32.mrf.mxu0
          %v1081 = vadd.f32 %v1062, %v1080
          %v1082 = vpop.f32.mrf.mxu0
          %v1083 = vadd.f32 %v1064, %v1082
          %1084 = vdwg.mxu0
          %v1085 = vmul.f32 %v1038, 0.088388346
          %v1086 = vmul.f32 %v1076, 0.088388346
          %v1087 = vmul.f32 %v1040, 0.088388346
          %v1088 = vmul.f32 %v1078, 0.088388346
          %v1089 = vmul.f32 %v1043, 0.088388346
          %v1090 = vmul.f32 %v1081, 0.088388346
          %v1091 = vmul.f32 %v1045, 0.088388346
          %v1092 = vmul.f32 %v1083, 0.088388346
          %v1093 = vpack.c.bf16 %v1085, %v1085
          %v1094 = vpack.c.bf16 %v1087, %v1087
          %v1095 = vpack.c.bf16 %v1089, %v1089
          %v1096 = vpack.c.bf16 %v1091, %v1091
          %1097 = vst [vmem:[#allocation2] sm:$0xf] %v1093
          %1098 = vst [vmem:[#allocation2 + $0x4] sm:$0xf] %v1094
          %1099 = vst [vmem:[#allocation2 + $0x8] sm:$0xf] %v1095
          %1100 = vst [vmem:[#allocation2 + $0xc] sm:$0xf] %v1096
          %v1101 = vpack.c.bf16 %v1086, %v1086
          %v1102 = vpack.c.bf16 %v1088, %v1088
          %v1103 = vpack.c.bf16 %v1090, %v1090
          %v1104 = vpack.c.bf16 %v1092, %v1092
          %s1105 = scalar_lea.vmem [#allocation2], 16
          %1106 = vst [vmem:[%s1105] sm:$0xf] %v1101
          %1107 = vst [vmem:[%s1105 + $0x4] sm:$0xf] %v1102
          %1108 = vst [vmem:[%s1105 + $0x8] sm:$0xf] %v1103
          %1109 = vst [vmem:[%s1105 + $0xc] sm:$0xf] %v1104
          %vm1110 = vcmask 7168
          %1111 = vst.msk [vmem:[#allocation4] sm:$0xff] %vm1110, -inf
          %1112 = vst.msk [vmem:[#allocation4 + $0x8] sm:$0xff] %vm1110, -inf
          %1113 = vst.msk [vmem:[#allocation4 + $0x10] sm:$0xff] %vm1110, -inf
          %1114 = vst.msk [vmem:[#allocation4 + $0x18] sm:$0xff] %vm1110, -inf
          %1115 = vst.msk [vmem:[#allocation4 + $0x20] sm:$0xff] %vm1110, -inf
          %1116 = vst.msk [vmem:[#allocation4 + $0x28] sm:$0xff] %vm1110, -inf
          %1117 = vst.msk [vmem:[#allocation4 + $0x30] sm:$0xff] %vm1110, -inf
          %1118 = vst.msk [vmem:[#allocation4 + $0x38] sm:$0xff] %vm1110, -inf
          %1119 = vst.msk [vmem:[#allocation5] sm:$0xff] %vm1110, 0.0
          %1120 = vst.msk [vmem:[#allocation5 + $0x8] sm:$0xff] %vm1110, 0.0
          %1121 = vst.msk [vmem:[#allocation5 + $0x10] sm:$0xff] %vm1110, 0.0
          %1122 = vst.msk [vmem:[#allocation5 + $0x18] sm:$0xff] %vm1110, 0.0
          %1123 = vst.msk [vmem:[#allocation5 + $0x20] sm:$0xff] %vm1110, 0.0
          %1124 = vst.msk [vmem:[#allocation5 + $0x28] sm:$0xff] %vm1110, 0.0
          %1125 = vst.msk [vmem:[#allocation5 + $0x30] sm:$0xff] %vm1110, 0.0
          %1126 = vst.msk [vmem:[#allocation5 + $0x38] sm:$0xff] %vm1110, 0.0
          %1127 = vst [vmem:[#allocation3] sm:$0xff] 0.0
          %1128 = vst [vmem:[#allocation3 + $0x8] sm:$0xff] 0.0
          %1129 = vst [vmem:[#allocation3 + $0x10] sm:$0xff] 0.0
          %1130 = vst [vmem:[#allocation3 + $0x18] sm:$0xff] 0.0
          %1131 = vst [vmem:[#allocation3 + $0x20] sm:$0xff] 0.0
          %1132 = vst [vmem:[#allocation3 + $0x28] sm:$0xff] 0.0
          %1133 = vst [vmem:[#allocation3 + $0x30] sm:$0xff] 0.0
          %1134 = vst [vmem:[#allocation3 + $0x38] sm:$0xff] 0.0
        $region124: #{tpu_custom_call.1} parent=79 // pred_fallthru
          _
        %v1135 = vld [vmem:[%s687] sm:$0xf]
        %v1136 = vld [vmem:[%s687 + $0x4] sm:$0xf]
        %v1137 = vld [vmem:[%s687 + $0x8] sm:$0xf]
        %v1138 = vld [vmem:[%s687 + $0xc] sm:$0xf]
        %v1139 = vld [vmem:[%s687 + $0x10] sm:$0xf]
        %v1140 = vld [vmem:[%s687 + $0x14] sm:$0xf]
        %v1141 = vld [vmem:[%s687 + $0x18] sm:$0xf]
        %v1142 = vld [vmem:[%s687 + $0x1c] sm:$0xf]
        %v1143 = vld [vmem:[%s697] sm:$0xf]
        %v1144 = vld [vmem:[%s697 + $0x4] sm:$0xf]
        %v1145 = vld [vmem:[%s697 + $0x8] sm:$0xf]
        %v1146 = vld [vmem:[%s697 + $0xc] sm:$0xf]
        %v1147 = vld [vmem:[%s697 + $0x10] sm:$0xf]
        %v1148 = vld [vmem:[%s697 + $0x14] sm:$0xf]
        %v1149 = vld [vmem:[%s697 + $0x18] sm:$0xf]
        %v1150 = vld [vmem:[%s697 + $0x1c] sm:$0xf]
        %v1151 = vld [vmem:[#allocation2] sm:$0xf]
        %v1152 = vld [vmem:[#allocation2 + $0x4] sm:$0xf]
        %v1153 = vld [vmem:[#allocation2 + $0x8] sm:$0xf]
        %v1154 = vld [vmem:[#allocation2 + $0xc] sm:$0xf]
        %v1155 = vld [vmem:[#allocation2 + $0x10] sm:$0xf]
        %v1156 = vld [vmem:[#allocation2 + $0x14] sm:$0xf]
        %v1157 = vld [vmem:[#allocation2 + $0x18] sm:$0xf]
        %v1158 = vld [vmem:[#allocation2 + $0x1c] sm:$0xf]
        %v1163 = vunpack.c.l.b16 %v1151
        %v1164 = vunpack.c.l.b16 %v1152
        %v1165 = vunpack.c.l.b16 %v1153
        %v1166 = vunpack.c.l.b16 %v1154
        %v1167 = vpack.c.b16 %v1164, %v1163
        %v1168 = vpack.c.b16 %v1166, %v1165
        %v1175 = vunpack.c.l.b16 %v1135
        %v1176 = vunpack.c.l.b16 %v1136
        %v1177 = vunpack.c.l.b16 %v1137
        %v1178 = vunpack.c.l.b16 %v1138
        %v1179 = vpack.c.b16 %v1176, %v1175
        %v1180 = vpack.c.b16 %v1178, %v1177
        %1183 = vmatpush.bf16.xpose.msra.mxu0 0
        %1184 = vmatpush.bf16.xpose.msra.mxu0 0
        %1185 = vmatpush.bf16.xpose.msra.mxu0 0
        %1186 = vmatpush.bf16.xpose.msra.mxu0 0
        %1187 = vmatpush.bf16.xpose.msra.mxu0 0
        %1188 = vmatpush.bf16.xpose.msra.mxu0 0
        %1189 = vmatpush.bf16.xpose.msra.mxu0 %v1180
        %1190 = vmatpush.bf16.xpose.msra.mxu0 %v1179
        %1191 = vmatmul.bf16.gmra.mxu0 %v1167
        %v1192 = vpop.f32.mrf.mxu0
        %v1193 = vadd.f32 0.0, %v1192
        %v1194 = vpop.f32.mrf.mxu0
        %v1195 = vadd.f32 0.0, %v1194
        %1196 = vmatmul.bf16.gmra.mxu0 %v1168
        %v1197 = vpop.f32.mrf.mxu0
        %v1198 = vadd.f32 0.0, %v1197
        %v1199 = vpop.f32.mrf.mxu0
        %v1200 = vadd.f32 0.0, %v1199
        %1201 = vdwg.mxu0
        %v1206 = vunpack.c.l.b16 %v1155
        %v1207 = vunpack.c.l.b16 %v1156
        %v1208 = vunpack.c.l.b16 %v1157
        %v1209 = vunpack.c.l.b16 %v1158
        %v1210 = vpack.c.b16 %v1207, %v1206
        %v1211 = vpack.c.b16 %v1209, %v1208
        %v1218 = vunpack.c.l.b16 %v1139
        %v1219 = vunpack.c.l.b16 %v1140
        %v1220 = vunpack.c.l.b16 %v1141
        %v1221 = vunpack.c.l.b16 %v1142
        %v1222 = vpack.c.b16 %v1219, %v1218
        %v1223 = vpack.c.b16 %v1221, %v1220
        %1226 = vmatpush.bf16.xpose.msra.mxu0 0
        %1227 = vmatpush.bf16.xpose.msra.mxu0 0
        %1228 = vmatpush.bf16.xpose.msra.mxu0 0
        %1229 = vmatpush.bf16.xpose.msra.mxu0 0
        %1230 = vmatpush.bf16.xpose.msra.mxu0 0
        %1231 = vmatpush.bf16.xpose.msra.mxu0 0
        %1232 = vmatpush.bf16.xpose.msra.mxu0 %v1223
        %1233 = vmatpush.bf16.xpose.msra.mxu0 %v1222
        %1234 = vmatmul.bf16.gmra.mxu0 %v1210
        %v1235 = vpop.f32.mrf.mxu0
        %v1236 = vadd.f32 0.0, %v1235
        %v1237 = vpop.f32.mrf.mxu0
        %v1238 = vadd.f32 0.0, %v1237
        %1239 = vmatmul.bf16.gmra.mxu0 %v1211
        %v1240 = vpop.f32.mrf.mxu0
        %v1241 = vadd.f32 0.0, %v1240
        %v1242 = vpop.f32.mrf.mxu0
        %v1243 = vadd.f32 0.0, %v1242
        %1244 = vdwg.mxu0
        %v1245 = vld [vmem:[#allocation4] sm:$0xff]
        %v1246 = vld [vmem:[#allocation4 + $0x8] sm:$0xff]
        %v1247 = vld [vmem:[#allocation4 + $0x10] sm:$0xff]
        %v1248 = vld [vmem:[#allocation4 + $0x18] sm:$0xff]
        %v1249 = vld [vmem:[#allocation4 + $0x20] sm:$0xff]
        %v1250 = vld [vmem:[#allocation4 + $0x28] sm:$0xff]
        %v1251 = vld [vmem:[#allocation4 + $0x30] sm:$0xff]
        %v1252 = vld [vmem:[#allocation4 + $0x38] sm:$0xff]
        %vm1253 = vcmask 261120
        %v1254 = vsel %vm1253, %v1193, -inf
        %1255 = vmax.xlane.f32.xlu0 %v1254
        %v1256 = vpop.xlane.xlu0 %1255
        %v1257 = vsel %vm1253, %v1195, -inf
        %1258 = vmax.xlane.f32.xlu0 %v1257
        %v1259 = vpop.xlane.xlu0 %1258
        %v1260 = vsel %vm1253, %v1198, -inf
        %1261 = vmax.xlane.f32.xlu0 %v1260
        %v1262 = vpop.xlane.xlu0 %1261
        %v1263 = vsel %vm1253, %v1200, -inf
        %1264 = vmax.xlane.f32.xlu0 %v1263
        %v1265 = vpop.xlane.xlu0 %1264
        %v1266 = vsel %vm1253, %v1236, -inf
        %1267 = vmax.xlane.f32.xlu0 %v1266
        %v1268 = vpop.xlane.xlu0 %1267
        %v1269 = vsel %vm1253, %v1238, -inf
        %1270 = vmax.xlane.f32.xlu0 %v1269
        %v1271 = vpop.xlane.xlu0 %1270
        %v1272 = vsel %vm1253, %v1241, -inf
        %1273 = vmax.xlane.f32.xlu0 %v1272
        %v1274 = vpop.xlane.xlu0 %1273
        %v1275 = vsel %vm1253, %v1243, -inf
        %1276 = vmax.xlane.f32.xlu0 %v1275
        %v1277 = vpop.xlane.xlu0 %1276
        %v1278 = vmax.f32 %v1245, %v1256
        %v1279 = vmax.f32 %v1246, %v1259
        %v1280 = vmax.f32 %v1247, %v1262
        %v1281 = vmax.f32 %v1248, %v1265
        %v1282 = vmax.f32 %v1249, %v1268
        %v1283 = vmax.f32 %v1250, %v1271
        %v1284 = vmax.f32 %v1251, %v1274
        %v1285 = vmax.f32 %v1252, %v1277
        %v1286 = vsub.f32 %v1245, %v1278
        %v1287 = vsub.f32 %v1246, %v1279
        %v1288 = vsub.f32 %v1247, %v1280
        %v1289 = vsub.f32 %v1248, %v1281
        %v1290 = vsub.f32 %v1249, %v1282
        %v1291 = vsub.f32 %v1250, %v1283
        %v1292 = vsub.f32 %v1251, %v1284
        %v1293 = vsub.f32 %v1252, %v1285
        %v1294 = vmul.f32 %v1286, 1.442695
        %v1295 = vpow.pop %v1294
        %v1296 = vmul.f32 %v1287, 1.442695
        %v1297 = vpow.pop %v1296
        %v1298 = vmul.f32 %v1288, 1.442695
        %v1299 = vpow.pop %v1298
        %v1300 = vmul.f32 %v1289, 1.442695
        %v1301 = vpow.pop %v1300
        %v1302 = vmul.f32 %v1290, 1.442695
        %v1303 = vpow.pop %v1302
        %v1304 = vmul.f32 %v1291, 1.442695
        %v1305 = vpow.pop %v1304
        %v1306 = vmul.f32 %v1292, 1.442695
        %v1307 = vpow.pop %v1306
        %v1308 = vmul.f32 %v1293, 1.442695
        %v1309 = vpow.pop %v1308
        %1311 = vset.pattern.permute.xlu0 0
        %1312 = vperm.xlu0 %1311, %v1278
        %v1313 = vpop.permute.xlu0 %1312
        %1316 = vset.pattern.permute.xlu0 0
        %1317 = vperm.xlu0 %1316, %v1279
        %v1318 = vpop.permute.xlu0 %1317
        %1321 = vset.pattern.permute.xlu0 0
        %1322 = vperm.xlu0 %1321, %v1280
        %v1323 = vpop.permute.xlu0 %1322
        %1326 = vset.pattern.permute.xlu0 0
        %1327 = vperm.xlu0 %1326, %v1281
        %v1328 = vpop.permute.xlu0 %1327
        %1331 = vset.pattern.permute.xlu0 0
        %1332 = vperm.xlu0 %1331, %v1282
        %v1333 = vpop.permute.xlu0 %1332
        %1336 = vset.pattern.permute.xlu0 0
        %1337 = vperm.xlu0 %1336, %v1283
        %v1338 = vpop.permute.xlu0 %1337
        %1341 = vset.pattern.permute.xlu0 0
        %1342 = vperm.xlu0 %1341, %v1284
        %v1343 = vpop.permute.xlu0 %1342
        %1346 = vset.pattern.permute.xlu0 0
        %1347 = vperm.xlu0 %1346, %v1285
        %v1348 = vpop.permute.xlu0 %1347
        %v1350 = vsub.f32 %v1193, %v1313
        %v1351 = vsub.f32 %v1195, %v1318
        %v1352 = vsub.f32 %v1198, %v1323
        %v1353 = vsub.f32 %v1200, %v1328
        %v1354 = vsub.f32 %v1236, %v1333
        %v1355 = vsub.f32 %v1238, %v1338
        %v1356 = vsub.f32 %v1241, %v1343
        %v1357 = vsub.f32 %v1243, %v1348
        %v1358 = vmul.f32 %v1350, 1.442695
        %v1359 = vpow.pop %v1358
        %v1360 = vmul.f32 %v1351, 1.442695
        %v1361 = vpow.pop %v1360
        %v1362 = vmul.f32 %v1352, 1.442695
        %v1363 = vpow.pop %v1362
        %v1364 = vmul.f32 %v1353, 1.442695
        %v1365 = vpow.pop %v1364
        %v1366 = vmul.f32 %v1354, 1.442695
        %v1367 = vpow.pop %v1366
        %v1368 = vmul.f32 %v1355, 1.442695
        %v1369 = vpow.pop %v1368
        %v1370 = vmul.f32 %v1356, 1.442695
        %v1371 = vpow.pop %v1370
        %v1372 = vmul.f32 %v1357, 1.442695
        %v1373 = vpow.pop %v1372
        %v1374 = vld [vmem:[#allocation5] sm:$0xff]
        %v1375 = vld [vmem:[#allocation5 + $0x8] sm:$0xff]
        %v1376 = vld [vmem:[#allocation5 + $0x10] sm:$0xff]
        %v1377 = vld [vmem:[#allocation5 + $0x18] sm:$0xff]
        %v1378 = vld [vmem:[#allocation5 + $0x20] sm:$0xff]
        %v1379 = vld [vmem:[#allocation5 + $0x28] sm:$0xff]
        %v1380 = vld [vmem:[#allocation5 + $0x30] sm:$0xff]
        %v1381 = vld [vmem:[#allocation5 + $0x38] sm:$0xff]
        %v1382 = vmul.f32 %v1295, %v1374
        %v1383 = vmul.f32 %v1297, %v1375
        %v1384 = vmul.f32 %v1299, %v1376
        %v1385 = vmul.f32 %v1301, %v1377
        %v1386 = vmul.f32 %v1303, %v1378
        %v1387 = vmul.f32 %v1305, %v1379
        %v1388 = vmul.f32 %v1307, %v1380
        %v1389 = vmul.f32 %v1309, %v1381
        %v1390 = vsel %vm1253, %v1359, 0.0
        %1391 = vadd.xlane.f32.xlu0 %v1390
        %v1392 = vpop.xlane.xlu0 %1391
        %v1393 = vsel %vm1253, %v1361, 0.0
        %1394 = vadd.xlane.f32.xlu0 %v1393
        %v1395 = vpop.xlane.xlu0 %1394
        %v1396 = vsel %vm1253, %v1363, 0.0
        %1397 = vadd.xlane.f32.xlu0 %v1396
        %v1398 = vpop.xlane.xlu0 %1397
        %v1399 = vsel %vm1253, %v1365, 0.0
        %1400 = vadd.xlane.f32.xlu0 %v1399
        %v1401 = vpop.xlane.xlu0 %1400
        %v1402 = vsel %vm1253, %v1367, 0.0
        %1403 = vadd.xlane.f32.xlu0 %v1402
        %v1404 = vpop.xlane.xlu0 %1403
        %v1405 = vsel %vm1253, %v1369, 0.0
        %1406 = vadd.xlane.f32.xlu0 %v1405
        %v1407 = vpop.xlane.xlu0 %1406
        %v1408 = vsel %vm1253, %v1371, 0.0
        %1409 = vadd.xlane.f32.xlu0 %v1408
        %v1410 = vpop.xlane.xlu0 %1409
        %v1411 = vsel %vm1253, %v1373, 0.0
        %1412 = vadd.xlane.f32.xlu0 %v1411
        %v1413 = vpop.xlane.xlu0 %1412
        %v1414 = vadd.f32 %v1382, %v1392
        %v1415 = vadd.f32 %v1383, %v1395
        %v1416 = vadd.f32 %v1384, %v1398
        %v1417 = vadd.f32 %v1385, %v1401
        %v1418 = vadd.f32 %v1386, %v1404
        %v1419 = vadd.f32 %v1387, %v1407
        %v1420 = vadd.f32 %v1388, %v1410
        %v1421 = vadd.f32 %v1389, %v1413
        %vm1422 = vcmask 7168
        %1423 = vst.msk [vmem:[#allocation5] sm:$0xff] %vm1422, %v1414
        %1424 = vst.msk [vmem:[#allocation5 + $0x8] sm:$0xff] %vm1422, %v1415
        %1425 = vst.msk [vmem:[#allocation5 + $0x10] sm:$0xff] %vm1422, %v1416
        %1426 = vst.msk [vmem:[#allocation5 + $0x18] sm:$0xff] %vm1422, %v1417
        %1427 = vst.msk [vmem:[#allocation5 + $0x20] sm:$0xff] %vm1422, %v1418
        %1428 = vst.msk [vmem:[#allocation5 + $0x28] sm:$0xff] %vm1422, %v1419
        %1429 = vst.msk [vmem:[#allocation5 + $0x30] sm:$0xff] %vm1422, %v1420
        %1430 = vst.msk [vmem:[#allocation5 + $0x38] sm:$0xff] %vm1422, %v1421
        %v1431 = vld [vmem:[#allocation3] sm:$0xff]
        %v1432 = vld [vmem:[#allocation3 + $0x8] sm:$0xff]
        %v1433 = vld [vmem:[#allocation3 + $0x10] sm:$0xff]
        %v1434 = vld [vmem:[#allocation3 + $0x18] sm:$0xff]
        %v1435 = vld [vmem:[#allocation3 + $0x20] sm:$0xff]
        %v1436 = vld [vmem:[#allocation3 + $0x28] sm:$0xff]
        %v1437 = vld [vmem:[#allocation3 + $0x30] sm:$0xff]
        %v1438 = vld [vmem:[#allocation3 + $0x38] sm:$0xff]
        %1440 = vset.pattern.permute.xlu0 0
        %1441 = vperm.xlu0 %1440, %v1295
        %v1442 = vpop.permute.xlu0 %1441
        %1445 = vset.pattern.permute.xlu0 0
        %1446 = vperm.xlu0 %1445, %v1297
        %v1447 = vpop.permute.xlu0 %1446
        %1450 = vset.pattern.permute.xlu0 0
        %1451 = vperm.xlu0 %1450, %v1299
        %v1452 = vpop.permute.xlu0 %1451
        %1455 = vset.pattern.permute.xlu0 0
        %1456 = vperm.xlu0 %1455, %v1301
        %v1457 = vpop.permute.xlu0 %1456
        %1460 = vset.pattern.permute.xlu0 0
        %1461 = vperm.xlu0 %1460, %v1303
        %v1462 = vpop.permute.xlu0 %1461
        %1465 = vset.pattern.permute.xlu0 0
        %1466 = vperm.xlu0 %1465, %v1305
        %v1467 = vpop.permute.xlu0 %1466
        %1470 = vset.pattern.permute.xlu0 0
        %1471 = vperm.xlu0 %1470, %v1307
        %v1472 = vpop.permute.xlu0 %1471
        %1475 = vset.pattern.permute.xlu0 0
        %1476 = vperm.xlu0 %1475, %v1309
        %v1477 = vpop.permute.xlu0 %1476
        %v1479 = vmul.f32 %v1442, %v1431
        %v1480 = vmul.f32 %v1447, %v1432
        %v1481 = vmul.f32 %v1452, %v1433
        %v1482 = vmul.f32 %v1457, %v1434
        %v1483 = vmul.f32 %v1462, %v1435
        %v1484 = vmul.f32 %v1467, %v1436
        %v1485 = vmul.f32 %v1472, %v1437
        %v1486 = vmul.f32 %v1477, %v1438
        %v1487 = vpack.c.bf16 %v1359, %v1359
        %v1488 = vpack.c.bf16 %v1361, %v1361
        %v1489 = vpack.c.bf16 %v1363, %v1363
        %v1490 = vpack.c.bf16 %v1365, %v1365
        %v1491 = vpack.c.bf16 %v1367, %v1367
        %v1492 = vpack.c.bf16 %v1369, %v1369
        %v1493 = vpack.c.bf16 %v1371, %v1371
        %v1494 = vpack.c.bf16 %v1373, %v1373
        %v1499 = vunpack.c.l.b16 %v1487
        %v1500 = vunpack.c.l.b16 %v1488
        %v1501 = vunpack.c.l.b16 %v1489
        %v1502 = vunpack.c.l.b16 %v1490
        %v1503 = vpack.c.b16 %v1500, %v1499
        %v1504 = vpack.c.b16 %v1502, %v1501
        %v1509 = vunpack.c.l.b16 %v1143
        %v1510 = vunpack.c.l.b16 %v1144
        %v1511 = vunpack.c.l.b16 %v1145
        %v1512 = vunpack.c.l.b16 %v1146
        %v1513 = vpack.c.b16 %v1510, %v1509
        %v1514 = vpack.c.b16 %v1512, %v1511
        %v1518 = vsel %vm1253, %v1503, 0
        %v1521 = vsel %vm1253, %v1504, 0
        %1523 = vmatpush.bf16.msra.mxu0 0
        %1524 = vmatpush.bf16.msra.mxu0 0
        %1525 = vmatpush.bf16.msra.mxu0 0
        %1526 = vmatpush.bf16.msra.mxu0 0
        %1527 = vmatpush.bf16.msra.mxu0 0
        %1528 = vmatpush.bf16.msra.mxu0 0
        %1529 = vmatpush.bf16.msra.mxu0 %v1514
        %1530 = vmatpush.bf16.msra.mxu0 %v1513
        %1531 = vmatmul.bf16.gmra.mxu0 %v1518
        %v1532 = vpop.f32.mrf.mxu0
        %v1533 = vadd.f32 0.0, %v1532
        %v1534 = vpop.f32.mrf.mxu0
        %v1535 = vadd.f32 0.0, %v1534
        %1536 = vmatmul.bf16.gmra.mxu0 %v1521
        %v1537 = vpop.f32.mrf.mxu0
        %v1538 = vadd.f32 0.0, %v1537
        %v1539 = vpop.f32.mrf.mxu0
        %v1540 = vadd.f32 0.0, %v1539
        %1541 = vdwg.mxu0
        %v1546 = vunpack.c.l.b16 %v1491
        %v1547 = vunpack.c.l.b16 %v1492
        %v1548 = vunpack.c.l.b16 %v1493
        %v1549 = vunpack.c.l.b16 %v1494
        %v1550 = vpack.c.b16 %v1547, %v1546
        %v1551 = vpack.c.b16 %v1549, %v1548
        %v1556 = vunpack.c.l.b16 %v1147
        %v1557 = vunpack.c.l.b16 %v1148
        %v1558 = vunpack.c.l.b16 %v1149
        %v1559 = vunpack.c.l.b16 %v1150
        %v1560 = vpack.c.b16 %v1557, %v1556
        %v1561 = vpack.c.b16 %v1559, %v1558
        %v1565 = vsel %vm1253, %v1550, 0
        %v1568 = vsel %vm1253, %v1551, 0
        %1570 = vmatpush.bf16.msra.mxu0 0
        %1571 = vmatpush.bf16.msra.mxu0 0
        %1572 = vmatpush.bf16.msra.mxu0 0
        %1573 = vmatpush.bf16.msra.mxu0 0
        %1574 = vmatpush.bf16.msra.mxu0 0
        %1575 = vmatpush.bf16.msra.mxu0 0
        %1576 = vmatpush.bf16.msra.mxu0 %v1561
        %1577 = vmatpush.bf16.msra.mxu0 %v1560
        %1578 = vmatmul.bf16.gmra.mxu0 %v1565
        %v1579 = vpop.f32.mrf.mxu0
        %v1580 = vadd.f32 0.0, %v1579
        %v1581 = vpop.f32.mrf.mxu0
        %v1582 = vadd.f32 0.0, %v1581
        %1583 = vmatmul.bf16.gmra.mxu0 %v1568
        %v1584 = vpop.f32.mrf.mxu0
        %v1585 = vadd.f32 0.0, %v1584
        %v1586 = vpop.f32.mrf.mxu0
        %v1587 = vadd.f32 0.0, %v1586
        %1588 = vdwg.mxu0
        %v1589 = vadd.f32 %v1479, %v1533
        %v1590 = vadd.f32 %v1480, %v1535
        %v1591 = vadd.f32 %v1481, %v1538
        %v1592 = vadd.f32 %v1482, %v1540
        %v1593 = vadd.f32 %v1483, %v1580
        %v1594 = vadd.f32 %v1484, %v1582
        %v1595 = vadd.f32 %v1485, %v1585
        %v1596 = vadd.f32 %v1486, %v1587
        %1597 = vst [vmem:[#allocation3] sm:$0xff] %v1589
        %1598 = vst [vmem:[#allocation3 + $0x8] sm:$0xff] %v1590
        %1599 = vst [vmem:[#allocation3 + $0x10] sm:$0xff] %v1591
        %1600 = vst [vmem:[#allocation3 + $0x18] sm:$0xff] %v1592
        %1601 = vst [vmem:[#allocation3 + $0x20] sm:$0xff] %v1593
        %1602 = vst [vmem:[#allocation3 + $0x28] sm:$0xff] %v1594
        %1603 = vst [vmem:[#allocation3 + $0x30] sm:$0xff] %v1595
        %1604 = vst [vmem:[#allocation3 + $0x38] sm:$0xff] %v1596
        %1605 = vst.msk [vmem:[#allocation4] sm:$0xff] %vm1422, %v1278
        %1606 = vst.msk [vmem:[#allocation4 + $0x8] sm:$0xff] %vm1422, %v1279
        %1607 = vst.msk [vmem:[#allocation4 + $0x10] sm:$0xff] %vm1422, %v1280
        %1608 = vst.msk [vmem:[#allocation4 + $0x18] sm:$0xff] %vm1422, %v1281
        %1609 = vst.msk [vmem:[#allocation4 + $0x20] sm:$0xff] %vm1422, %v1282
        %1610 = vst.msk [vmem:[#allocation4 + $0x28] sm:$0xff] %vm1422, %v1283
        %1611 = vst.msk [vmem:[#allocation4 + $0x30] sm:$0xff] %vm1422, %v1284
        %1612 = vst.msk [vmem:[#allocation4 + $0x38] sm:$0xff] %vm1422, %v1285
        %p1613 = scmp.eq.s32.totalorder %s46, 1
        // Predicated region
        $region125: #{tpu_custom_call.1} parent=79 // pred_check
          %p1614 = pneg %p1613
        $region126: #{tpu_custom_call.1} parent=79 // pred_check_branch
          %1616 = sbr.rel (%p1614) target = $region128
        $region127: #{tpu_custom_call.1} parent=79 // pred_region
          %v1617 = vld [vmem:[#allocation3] sm:$0xff]
          %v1618 = vld [vmem:[#allocation3 + $0x8] sm:$0xff]
          %v1619 = vld [vmem:[#allocation3 + $0x10] sm:$0xff]
          %v1620 = vld [vmem:[#allocation3 + $0x18] sm:$0xff]
          %v1621 = vld [vmem:[#allocation5] sm:$0xff]
          %v1622 = vld [vmem:[#allocation5 + $0x8] sm:$0xff]
          %v1623 = vld [vmem:[#allocation5 + $0x10] sm:$0xff]
          %v1624 = vld [vmem:[#allocation5 + $0x18] sm:$0xff]
          %v1625 = vrcp.pop %v1621
          %v1626 = vrcp.pop %v1622
          %v1627 = vrcp.pop %v1623
          %v1628 = vrcp.pop %v1624
          %1630 = vset.pattern.permute.xlu0 0
          %1631 = vperm.xlu0 %1630, %v1625
          %v1632 = vpop.permute.xlu0 %1631
          %1635 = vset.pattern.permute.xlu0 0
          %1636 = vperm.xlu0 %1635, %v1626
          %v1637 = vpop.permute.xlu0 %1636
          %1640 = vset.pattern.permute.xlu0 0
          %1641 = vperm.xlu0 %1640, %v1627
          %v1642 = vpop.permute.xlu0 %1641
          %1645 = vset.pattern.permute.xlu0 0
          %1646 = vperm.xlu0 %1645, %v1628
          %v1647 = vpop.permute.xlu0 %1646
          %v1649 = vmul.f32 %v1617, %v1632
          %v1650 = vmul.f32 %v1618, %v1637
          %v1651 = vmul.f32 %v1619, %v1642
          %v1652 = vmul.f32 %v1620, %v1647
          %v1653 = vpack.c.bf16 %v1650, %v1649
          %v1654 = vpack.c.bf16 %v1652, %v1651
          %v1655 = vld [vmem:[#allocation14] sm:$0xff]
          %v1656 = vld [vmem:[#allocation14 + $0x8] sm:$0xff]
          %v1657 = vld [vmem:[#allocation14 + $0x10] sm:$0xff]
          %v1658 = vld [vmem:[#allocation14 + $0x18] sm:$0xff]
          %v1659 = vld [vmem:[#allocation14 + $0x20] sm:$0xff]
          %v1660 = vld [vmem:[#allocation14 + $0x28] sm:$0xff]
          %v1661 = vld [vmem:[#allocation14 + $0x30] sm:$0xff]
          %v1662 = vld [vmem:[#allocation14 + $0x38] sm:$0xff]
          %v1663 = vld [vmem:[#allocation14 + $0x40] sm:$0xff]
          %v1664 = vld [vmem:[#allocation14 + $0x48] sm:$0xff]
          %v1665 = vld [vmem:[#allocation14 + $0x50] sm:$0xff]
          %v1666 = vld [vmem:[#allocation14 + $0x58] sm:$0xff]
          %v1667 = vld [vmem:[#allocation14 + $0x60] sm:$0xff]
          %v1668 = vld [vmem:[#allocation14 + $0x68] sm:$0xff]
          %v1669 = vld [vmem:[#allocation14 + $0x70] sm:$0xff]
          %v1670 = vld [vmem:[#allocation14 + $0x78] sm:$0xff]
          %s1671 = scalar_lea.vmem [#allocation3], 32
          %v1672 = vld [vmem:[%s1671] sm:$0xff]
          %v1673 = vld [vmem:[%s1671 + $0x8] sm:$0xff]
          %v1674 = vld [vmem:[%s1671 + $0x10] sm:$0xff]
          %v1675 = vld [vmem:[%s1671 + $0x18] sm:$0xff]
          %s1676 = scalar_lea.vmem [#allocation5], 32
          %v1677 = vld [vmem:[%s1676] sm:$0xff]
          %v1678 = vld [vmem:[%s1676 + $0x8] sm:$0xff]
          %v1679 = vld [vmem:[%s1676 + $0x10] sm:$0xff]
          %v1680 = vld [vmem:[%s1676 + $0x18] sm:$0xff]
          %v1681 = vrcp.pop %v1677
          %v1682 = vrcp.pop %v1678
          %v1683 = vrcp.pop %v1679
          %v1684 = vrcp.pop %v1680
          %1686 = vset.pattern.permute.xlu0 0
          %1687 = vperm.xlu0 %1686, %v1681
          %v1688 = vpop.permute.xlu0 %1687
          %1691 = vset.pattern.permute.xlu0 0
          %1692 = vperm.xlu0 %1691, %v1682
          %v1693 = vpop.permute.xlu0 %1692
          %1696 = vset.pattern.permute.xlu0 0
          %1697 = vperm.xlu0 %1696, %v1683
          %v1698 = vpop.permute.xlu0 %1697
          %1701 = vset.pattern.permute.xlu0 0
          %1702 = vperm.xlu0 %1701, %v1684
          %v1703 = vpop.permute.xlu0 %1702
          %v1705 = vmul.f32 %v1672, %v1688
          %v1706 = vmul.f32 %v1673, %v1693
          %v1707 = vmul.f32 %v1674, %v1698
          %v1708 = vmul.f32 %v1675, %v1703
          %v1709 = vpack.c.bf16 %v1706, %v1705
          %v1710 = vpack.c.bf16 %v1708, %v1707
          %s1711 = scalar_lea.vmem [#allocation14], 128
          %v1712 = vld [vmem:[%s1711] sm:$0xff]
          %v1713 = vld [vmem:[%s1711 + $0x8] sm:$0xff]
          %v1714 = vld [vmem:[%s1711 + $0x10] sm:$0xff]
          %v1715 = vld [vmem:[%s1711 + $0x18] sm:$0xff]
          %v1716 = vld [vmem:[%s1711 + $0x20] sm:$0xff]
          %v1717 = vld [vmem:[%s1711 + $0x28] sm:$0xff]
          %v1718 = vld [vmem:[%s1711 + $0x30] sm:$0xff]
          %v1719 = vld [vmem:[%s1711 + $0x38] sm:$0xff]
          %v1720 = vld [vmem:[%s1711 + $0x40] sm:$0xff]
          %v1721 = vld [vmem:[%s1711 + $0x48] sm:$0xff]
          %v1722 = vld [vmem:[%s1711 + $0x50] sm:$0xff]
          %v1723 = vld [vmem:[%s1711 + $0x58] sm:$0xff]
          %v1724 = vld [vmem:[%s1711 + $0x60] sm:$0xff]
          %v1725 = vld [vmem:[%s1711 + $0x68] sm:$0xff]
          %v1726 = vld [vmem:[%s1711 + $0x70] sm:$0xff]
          %v1727 = vld [vmem:[%s1711 + $0x78] sm:$0xff]
          %v1744 = vunpack.c.l.b16 %v1712
          %v1745 = vunpack.c.h.b16 %v1712
          %v1746 = vunpack.c.l.b16 %v1713
          %v1747 = vunpack.c.h.b16 %v1713
          %v1748 = vunpack.c.l.b16 %v1714
          %v1749 = vunpack.c.h.b16 %v1714
          %v1750 = vunpack.c.l.b16 %v1715
          %v1751 = vunpack.c.h.b16 %v1715
          %v1752 = vunpack.c.l.b16 %v1716
          %v1753 = vunpack.c.h.b16 %v1716
          %v1754 = vunpack.c.l.b16 %v1717
          %v1755 = vunpack.c.h.b16 %v1717
          %v1756 = vunpack.c.l.b16 %v1718
          %v1757 = vunpack.c.h.b16 %v1718
          %v1758 = vunpack.c.l.b16 %v1719
          %v1759 = vunpack.c.h.b16 %v1719
          %v1760 = vunpack.c.l.b16 %v1720
          %v1761 = vunpack.c.h.b16 %v1720
          %v1762 = vunpack.c.l.b16 %v1721
          %v1763 = vunpack.c.h.b16 %v1721
          %v1764 = vunpack.c.l.b16 %v1722
          %v1765 = vunpack.c.h.b16 %v1722
          %v1766 = vunpack.c.l.b16 %v1723
          %v1767 = vunpack.c.h.b16 %v1723
          %v1768 = vunpack.c.l.b16 %v1724
          %v1769 = vunpack.c.h.b16 %v1724
          %v1770 = vunpack.c.l.b16 %v1725
          %v1771 = vunpack.c.h.b16 %v1725
          %v1772 = vunpack.c.l.b16 %v1726
          %v1773 = vunpack.c.h.b16 %v1726
          %v1774 = vunpack.c.l.b16 %v1727
          %v1775 = vunpack.c.h.b16 %v1727
          %v1776 = vpack.c.b16 %v1746, %v1744
          %v1777 = vpack.c.b16 %v1747, %v1745
          %v1778 = vpack.c.b16 %v1750, %v1748
          %v1779 = vpack.c.b16 %v1751, %v1749
          %v1780 = vpack.c.b16 %v1754, %v1752
          %v1781 = vpack.c.b16 %v1755, %v1753
          %v1782 = vpack.c.b16 %v1758, %v1756
          %v1783 = vpack.c.b16 %v1759, %v1757
          %v1784 = vpack.c.b16 %v1762, %v1760
          %v1785 = vpack.c.b16 %v1763, %v1761
          %v1786 = vpack.c.b16 %v1766, %v1764
          %v1787 = vpack.c.b16 %v1767, %v1765
          %v1788 = vpack.c.b16 %v1770, %v1768
          %v1789 = vpack.c.b16 %v1771, %v1769
          %v1790 = vpack.c.b16 %v1774, %v1772
          %v1791 = vpack.c.b16 %v1775, %v1773
          %1808 = vmatpush.bf16.msra.mxu0 %v1790
          %1809 = vmatpush.bf16.msra.mxu0 %v1788
          %1810 = vmatpush.bf16.msra.mxu0 %v1786
          %1811 = vmatpush.bf16.msra.mxu0 %v1784
          %1812 = vmatpush.bf16.msra.mxu0 %v1782
          %1813 = vmatpush.bf16.msra.mxu0 %v1780
          %1814 = vmatpush.bf16.msra.mxu0 %v1778
          %1815 = vmatpush.bf16.msra.mxu0 %v1776
          %1816 = vmatmul.bf16.gmra.mxu0 %v1709
          %v1817 = vpop.f32.mrf.mxu0
          %v1818 = vadd.f32 0.0, %v1817
          %v1819 = vpop.f32.mrf.mxu0
          %v1820 = vadd.f32 0.0, %v1819
          %1821 = vmatmul.bf16.gmra.mxu0 %v1710
          %v1822 = vpop.f32.mrf.mxu0
          %v1823 = vadd.f32 0.0, %v1822
          %v1824 = vpop.f32.mrf.mxu0
          %v1825 = vadd.f32 0.0, %v1824
          %1826 = vdwg.mxu0
          %1827 = vmatpush.bf16.msra.mxu0 %v1791
          %1828 = vmatpush.bf16.msra.mxu0 %v1789
          %1829 = vmatpush.bf16.msra.mxu0 %v1787
          %1830 = vmatpush.bf16.msra.mxu0 %v1785
          %1831 = vmatpush.bf16.msra.mxu0 %v1783
          %1832 = vmatpush.bf16.msra.mxu0 %v1781
          %1833 = vmatpush.bf16.msra.mxu0 %v1779
          %1834 = vmatpush.bf16.msra.mxu0 %v1777
          %1835 = vmatmul.bf16.gmra.mxu0 %v1709
          %v1836 = vpop.f32.mrf.mxu0
          %v1837 = vadd.f32 0.0, %v1836
          %v1838 = vpop.f32.mrf.mxu0
          %v1839 = vadd.f32 0.0, %v1838
          %1840 = vmatmul.bf16.gmra.mxu0 %v1710
          %v1841 = vpop.f32.mrf.mxu0
          %v1842 = vadd.f32 0.0, %v1841
          %v1843 = vpop.f32.mrf.mxu0
          %v1844 = vadd.f32 0.0, %v1843
          %1845 = vdwg.mxu0
          %v1862 = vunpack.c.l.b16 %v1655
          %v1863 = vunpack.c.h.b16 %v1655
          %v1864 = vunpack.c.l.b16 %v1656
          %v1865 = vunpack.c.h.b16 %v1656
          %v1866 = vunpack.c.l.b16 %v1657
          %v1867 = vunpack.c.h.b16 %v1657
          %v1868 = vunpack.c.l.b16 %v1658
          %v1869 = vunpack.c.h.b16 %v1658
          %v1870 = vunpack.c.l.b16 %v1659
          %v1871 = vunpack.c.h.b16 %v1659
          %v1872 = vunpack.c.l.b16 %v1660
          %v1873 = vunpack.c.h.b16 %v1660
          %v1874 = vunpack.c.l.b16 %v1661
          %v1875 = vunpack.c.h.b16 %v1661
          %v1876 = vunpack.c.l.b16 %v1662
          %v1877 = vunpack.c.h.b16 %v1662
          %v1878 = vunpack.c.l.b16 %v1663
          %v1879 = vunpack.c.h.b16 %v1663
          %v1880 = vunpack.c.l.b16 %v1664
          %v1881 = vunpack.c.h.b16 %v1664
          %v1882 = vunpack.c.l.b16 %v1665
          %v1883 = vunpack.c.h.b16 %v1665
          %v1884 = vunpack.c.l.b16 %v1666
          %v1885 = vunpack.c.h.b16 %v1666
          %v1886 = vunpack.c.l.b16 %v1667
          %v1887 = vunpack.c.h.b16 %v1667
          %v1888 = vunpack.c.l.b16 %v1668
          %v1889 = vunpack.c.h.b16 %v1668
          %v1890 = vunpack.c.l.b16 %v1669
          %v1891 = vunpack.c.h.b16 %v1669
          %v1892 = vunpack.c.l.b16 %v1670
          %v1893 = vunpack.c.h.b16 %v1670
          %v1894 = vpack.c.b16 %v1864, %v1862
          %v1895 = vpack.c.b16 %v1865, %v1863
          %v1896 = vpack.c.b16 %v1868, %v1866
          %v1897 = vpack.c.b16 %v1869, %v1867
          %v1898 = vpack.c.b16 %v1872, %v1870
          %v1899 = vpack.c.b16 %v1873, %v1871
          %v1900 = vpack.c.b16 %v1876, %v1874
          %v1901 = vpack.c.b16 %v1877, %v1875
          %v1902 = vpack.c.b16 %v1880, %v1878
          %v1903 = vpack.c.b16 %v1881, %v1879
          %v1904 = vpack.c.b16 %v1884, %v1882
          %v1905 = vpack.c.b16 %v1885, %v1883
          %v1906 = vpack.c.b16 %v1888, %v1886
          %v1907 = vpack.c.b16 %v1889, %v1887
          %v1908 = vpack.c.b16 %v1892, %v1890
          %v1909 = vpack.c.b16 %v1893, %v1891
          %1926 = vmatpush.bf16.msra.mxu0 %v1908
          %1927 = vmatpush.bf16.msra.mxu0 %v1906
          %1928 = vmatpush.bf16.msra.mxu0 %v1904
          %1929 = vmatpush.bf16.msra.mxu0 %v1902
          %1930 = vmatpush.bf16.msra.mxu0 %v1900
          %1931 = vmatpush.bf16.msra.mxu0 %v1898
          %1932 = vmatpush.bf16.msra.mxu0 %v1896
          %1933 = vmatpush.bf16.msra.mxu0 %v1894
          %1934 = vmatmul.bf16.gmra.mxu0 %v1653
          %v1935 = vpop.f32.mrf.mxu0
          %v1936 = vadd.f32 %v1818, %v1935
          %v1937 = vpop.f32.mrf.mxu0
          %v1938 = vadd.f32 %v1820, %v1937
          %1939 = vmatmul.bf16.gmra.mxu0 %v1654
          %v1940 = vpop.f32.mrf.mxu0
          %v1941 = vadd.f32 %v1823, %v1940
          %v1942 = vpop.f32.mrf.mxu0
          %v1943 = vadd.f32 %v1825, %v1942
          %1944 = vdwg.mxu0
          %1945 = vmatpush.bf16.msra.mxu0 %v1909
          %1946 = vmatpush.bf16.msra.mxu0 %v1907
          %1947 = vmatpush.bf16.msra.mxu0 %v1905
          %1948 = vmatpush.bf16.msra.mxu0 %v1903
          %1949 = vmatpush.bf16.msra.mxu0 %v1901
          %1950 = vmatpush.bf16.msra.mxu0 %v1899
          %1951 = vmatpush.bf16.msra.mxu0 %v1897
          %1952 = vmatpush.bf16.msra.mxu0 %v1895
          %1953 = vmatmul.bf16.gmra.mxu0 %v1653
          %v1954 = vpop.f32.mrf.mxu0
          %v1955 = vadd.f32 %v1837, %v1954
          %v1956 = vpop.f32.mrf.mxu0
          %v1957 = vadd.f32 %v1839, %v1956
          %1958 = vmatmul.bf16.gmra.mxu0 %v1654
          %v1959 = vpop.f32.mrf.mxu0
          %v1960 = vadd.f32 %v1842, %v1959
          %v1961 = vpop.f32.mrf.mxu0
          %v1962 = vadd.f32 %v1844, %v1961
          %1963 = vdwg.mxu0
          %v1964 = vld [vmem:[#allocation15] sm:$0x3]
          %v1966 = vperm.slane %v1964, 0
          %v1967 = vperm.slane %v1964, 1
          %v1970 = vadd.f32 %v1936, %v1966
          %v1971 = vadd.f32 %v1955, %v1967
          %v1972 = vadd.f32 %v1938, %v1966
          %v1973 = vadd.f32 %v1957, %v1967
          %v1974 = vadd.f32 %v1941, %v1966
          %v1975 = vadd.f32 %v1960, %v1967
          %v1976 = vadd.f32 %v1943, %v1966
          %v1977 = vadd.f32 %v1962, %v1967
          %v1978 = vld [vmem:[%s677] sm:$0xff]
          %v1979 = vld [vmem:[%s677 + $0x8] sm:$0xff]
          %v1980 = vld [vmem:[%s677 + $0x10] sm:$0xff]
          %v1981 = vld [vmem:[%s677 + $0x18] sm:$0xff]
          %v1982 = vld [vmem:[%s677 + $0x20] sm:$0xff]
          %v1983 = vld [vmem:[%s677 + $0x28] sm:$0xff]
          %v1984 = vld [vmem:[%s677 + $0x30] sm:$0xff]
          %v1985 = vld [vmem:[%s677 + $0x38] sm:$0xff]
          %v1986 = vadd.f32 %v1978, %v1970
          %v1987 = vadd.f32 %v1979, %v1971
          %v1988 = vadd.f32 %v1980, %v1972
          %v1989 = vadd.f32 %v1981, %v1973
          %v1990 = vadd.f32 %v1982, %v1974
          %v1991 = vadd.f32 %v1983, %v1975
          %v1992 = vadd.f32 %v1984, %v1976
          %v1993 = vadd.f32 %v1985, %v1977
          %v1994 = vld [vmem:[%s11] sm:$0x3]
          %v1995 = vld [vmem:[#allocation20] sm:$0x3]
          %v1996 = vadd.f32 %v1986, %v1987
          %1997 = vadd.xlane.f32.xlu0 %v1996
          %v1998 = vpop.xlane.xlu0 %1997
          %v1999 = vadd.f32 %v1988, %v1989
          %2000 = vadd.xlane.f32.xlu0 %v1999
          %v2001 = vpop.xlane.xlu0 %2000
          %v2002 = vadd.f32 %v1990, %v1991
          %2003 = vadd.xlane.f32.xlu0 %v2002
          %v2004 = vpop.xlane.xlu0 %2003
          %v2005 = vadd.f32 %v1992, %v1993
          %2006 = vadd.xlane.f32.xlu0 %v2005
          %v2007 = vpop.xlane.xlu0 %2006
          %v2008 = vrcp.pop 256.0
          %v2009 = vmul.f32 256.0, %v2008
          %v2010 = vsub.f32 1.0, %v2009
          %v2011 = vmul.f32 %v2008, %v2010
          %v2012 = vadd.f32 %v2008, %v2011
          %vm2013 = vweird.f32 %v2008
          %v2014 = vsel %vm2013, %v2008, %v2012
          %v2015 = vmul.f32 %v1998, %v2014
          %v2016 = vmul.f32 %v2001, %v2014
          %v2017 = vmul.f32 %v2004, %v2014
          %v2018 = vmul.f32 %v2007, %v2014
          %v2019 = vsub.f32 %v1986, %v2015
          %v2020 = vsub.f32 %v1987, %v2015
          %v2021 = vsub.f32 %v1988, %v2016
          %v2022 = vsub.f32 %v1989, %v2016
          %v2023 = vsub.f32 %v1990, %v2017
          %v2024 = vsub.f32 %v1991, %v2017
          %v2025 = vsub.f32 %v1992, %v2018
          %v2026 = vsub.f32 %v1993, %v2018
          %v2027 = vmul.f32 %v2019, %v2019
          %v2028 = vmul.f32 %v2020, %v2020
          %v2029 = vmul.f32 %v2021, %v2021
          %v2030 = vmul.f32 %v2022, %v2022
          %v2031 = vmul.f32 %v2023, %v2023
          %v2032 = vmul.f32 %v2024, %v2024
          %v2033 = vmul.f32 %v2025, %v2025
          %v2034 = vmul.f32 %v2026, %v2026
          %v2035 = vadd.f32 %v2027, %v2028
          %2036 = vadd.xlane.f32.xlu0 %v2035
          %v2037 = vpop.xlane.xlu0 %2036
          %v2038 = vadd.f32 %v2029, %v2030
          %2039 = vadd.xlane.f32.xlu0 %v2038
          %v2040 = vpop.xlane.xlu0 %2039
          %v2041 = vadd.f32 %v2031, %v2032
          %2042 = vadd.xlane.f32.xlu0 %v2041
          %v2043 = vpop.xlane.xlu0 %2042
          %v2044 = vadd.f32 %v2033, %v2034
          %2045 = vadd.xlane.f32.xlu0 %v2044
          %v2046 = vpop.xlane.xlu0 %2045
          %v2047 = vmul.f32 %v2037, %v2014
          %v2048 = vmul.f32 %v2040, %v2014
          %v2049 = vmul.f32 %v2043, %v2014
          %v2050 = vmul.f32 %v2046, %v2014
          %v2051 = vadd.f32 %v2047, 1e-05
          %v2052 = vadd.f32 %v2048, 1e-05
          %v2053 = vadd.f32 %v2049, 1e-05
          %v2054 = vadd.f32 %v2050, 1e-05
          %v2055 = vrsqrt.pop %v2051
          %v2056 = vmul.f32 %v2055, %v2051
          %v2057 = vmul.f32 %v2056, %v2055
          %v2058 = vmul.f32 0.5, %v2057
          %v2059 = vsub.f32 1.5, %v2058
          %v2060 = vmul.f32 %v2055, %v2059
          %vm2061 = vweird.f32 %v2051
          %vm2062 = vweird.f32 %v2055
          %vm2063 = vmor %vm2061, %vm2062
          %v2064 = vsel %vm2063, %v2055, %v2060
          %v2065 = vrsqrt.pop %v2052
          %v2066 = vmul.f32 %v2065, %v2052
          %v2067 = vmul.f32 %v2066, %v2065
          %v2068 = vmul.f32 0.5, %v2067
          %v2069 = vsub.f32 1.5, %v2068
          %v2070 = vmul.f32 %v2065, %v2069
          %vm2071 = vweird.f32 %v2052
          %vm2072 = vweird.f32 %v2065
          %vm2073 = vmor %vm2071, %vm2072
          %v2074 = vsel %vm2073, %v2065, %v2070
          %v2075 = vrsqrt.pop %v2053
          %v2076 = vmul.f32 %v2075, %v2053
          %v2077 = vmul.f32 %v2076, %v2075
          %v2078 = vmul.f32 0.5, %v2077
          %v2079 = vsub.f32 1.5, %v2078
          %v2080 = vmul.f32 %v2075, %v2079
          %vm2081 = vweird.f32 %v2053
          %vm2082 = vweird.f32 %v2075
          %vm2083 = vmor %vm2081, %vm2082
          %v2084 = vsel %vm2083, %v2075, %v2080
          %v2085 = vrsqrt.pop %v2054
          %v2086 = vmul.f32 %v2085, %v2054
          %v2087 = vmul.f32 %v2086, %v2085
          %v2088 = vmul.f32 0.5, %v2087
          %v2089 = vsub.f32 1.5, %v2088
          %v2090 = vmul.f32 %v2085, %v2089
          %vm2091 = vweird.f32 %v2054
          %vm2092 = vweird.f32 %v2085
          %vm2093 = vmor %vm2091, %vm2092
          %v2094 = vsel %vm2093, %v2085, %v2090
          %v2095 = vmul.f32 %v2019, %v2064
          %v2096 = vmul.f32 %v2020, %v2064
          %v2097 = vmul.f32 %v2021, %v2074
          %v2098 = vmul.f32 %v2022, %v2074
          %v2099 = vmul.f32 %v2023, %v2084
          %v2100 = vmul.f32 %v2024, %v2084
          %v2101 = vmul.f32 %v2025, %v2094
          %v2102 = vmul.f32 %v2026, %v2094
          %v2104 = vperm.slane %v1994, 0
          %v2105 = vperm.slane %v1994, 1
          %v2108 = vmul.f32 %v2095, %v2104
          %v2109 = vmul.f32 %v2096, %v2105
          %v2110 = vmul.f32 %v2097, %v2104
          %v2111 = vmul.f32 %v2098, %v2105
          %v2112 = vmul.f32 %v2099, %v2104
          %v2113 = vmul.f32 %v2100, %v2105
          %v2114 = vmul.f32 %v2101, %v2104
          %v2115 = vmul.f32 %v2102, %v2105
          %v2117 = vperm.slane %v1995, 0
          %v2118 = vperm.slane %v1995, 1
          %v2121 = vadd.f32 %v2108, %v2117
          %v2122 = vadd.f32 %v2109, %v2118
          %v2123 = vadd.f32 %v2110, %v2117
          %v2124 = vadd.f32 %v2111, %v2118
          %v2125 = vadd.f32 %v2112, %v2117
          %v2126 = vadd.f32 %v2113, %v2118
          %v2127 = vadd.f32 %v2114, %v2117
          %v2128 = vadd.f32 %v2115, %v2118
          %v2129 = vpack.c.bf16 %v2123, %v2121
          %v2130 = vpack.c.bf16 %v2124, %v2122
          %v2131 = vpack.c.bf16 %v2127, %v2125
          %v2132 = vpack.c.bf16 %v2128, %v2126
          %v2133 = vld [vmem:[#allocation17] sm:$0xff]
          %v2134 = vld [vmem:[#allocation17 + $0x8] sm:$0xff]
          %v2135 = vld [vmem:[#allocation17 + $0x10] sm:$0xff]
          %v2136 = vld [vmem:[#allocation17 + $0x18] sm:$0xff]
          %v2137 = vld [vmem:[#allocation17 + $0x20] sm:$0xff]
          %v2138 = vld [vmem:[#allocation17 + $0x28] sm:$0xff]
          %v2139 = vld [vmem:[#allocation17 + $0x30] sm:$0xff]
          %v2140 = vld [vmem:[#allocation17 + $0x38] sm:$0xff]
          %v2141 = vld [vmem:[#allocation17 + $0x40] sm:$0xff]
          %v2142 = vld [vmem:[#allocation17 + $0x48] sm:$0xff]
          %v2143 = vld [vmem:[#allocation17 + $0x50] sm:$0xff]
          %v2144 = vld [vmem:[#allocation17 + $0x58] sm:$0xff]
          %v2145 = vld [vmem:[#allocation17 + $0x60] sm:$0xff]
          %v2146 = vld [vmem:[#allocation17 + $0x68] sm:$0xff]
          %v2147 = vld [vmem:[#allocation17 + $0x70] sm:$0xff]
          %v2148 = vld [vmem:[#allocation17 + $0x78] sm:$0xff]
          %v2149 = vld [vmem:[#allocation17 + $0x80] sm:$0xff]
          %v2150 = vld [vmem:[#allocation17 + $0x88] sm:$0xff]
          %v2151 = vld [vmem:[#allocation17 + $0x90] sm:$0xff]
          %v2152 = vld [vmem:[#allocation17 + $0x98] sm:$0xff]
          %v2153 = vld [vmem:[#allocation17 + $0xa0] sm:$0xff]
          %v2154 = vld [vmem:[#allocation17 + $0xa8] sm:$0xff]
          %v2155 = vld [vmem:[#allocation17 + $0xb0] sm:$0xff]
          %v2156 = vld [vmem:[#allocation17 + $0xb8] sm:$0xff]
          %v2157 = vld [vmem:[#allocation17 + $0xc0] sm:$0xff]
          %v2158 = vld [vmem:[#allocation17 + $0xc8] sm:$0xff]
          %v2159 = vld [vmem:[#allocation17 + $0xd0] sm:$0xff]
          %v2160 = vld [vmem:[#allocation17 + $0xd8] sm:$0xff]
          %v2161 = vld [vmem:[#allocation17 + $0xe0] sm:$0xff]
          %v2162 = vld [vmem:[#allocation17 + $0xe8] sm:$0xff]
          %v2163 = vld [vmem:[#allocation17 + $0xf0] sm:$0xff]
          %v2164 = vld [vmem:[#allocation17 + $0xf8] sm:$0xff]
          %v2165 = vld [vmem:[#allocation17 + $0x100] sm:$0xff]
          %v2166 = vld [vmem:[#allocation17 + $0x108] sm:$0xff]
          %v2167 = vld [vmem:[#allocation17 + $0x110] sm:$0xff]
          %v2168 = vld [vmem:[#allocation17 + $0x118] sm:$0xff]
          %v2169 = vld [vmem:[#allocation17 + $0x120] sm:$0xff]
          %v2170 = vld [vmem:[#allocation17 + $0x128] sm:$0xff]
          %v2171 = vld [vmem:[#allocation17 + $0x130] sm:$0xff]
          %v2172 = vld [vmem:[#allocation17 + $0x138] sm:$0xff]
          %v2173 = vld [vmem:[#allocation17 + $0x140] sm:$0xff]
          %v2174 = vld [vmem:[#allocation17 + $0x148] sm:$0xff]
          %v2175 = vld [vmem:[#allocation17 + $0x150] sm:$0xff]
          %v2176 = vld [vmem:[#allocation17 + $0x158] sm:$0xff]
          %v2177 = vld [vmem:[#allocation17 + $0x160] sm:$0xff]
          %v2178 = vld [vmem:[#allocation17 + $0x168] sm:$0xff]
          %v2179 = vld [vmem:[#allocation17 + $0x170] sm:$0xff]
          %v2180 = vld [vmem:[#allocation17 + $0x178] sm:$0xff]
          %v2181 = vld [vmem:[#allocation17 + $0x180] sm:$0xff]
          %v2182 = vld [vmem:[#allocation17 + $0x188] sm:$0xff]
          %v2183 = vld [vmem:[#allocation17 + $0x190] sm:$0xff]
          %v2184 = vld [vmem:[#allocation17 + $0x198] sm:$0xff]
          %v2185 = vld [vmem:[#allocation17 + $0x1a0] sm:$0xff]
          %v2186 = vld [vmem:[#allocation17 + $0x1a8] sm:$0xff]
          %v2187 = vld [vmem:[#allocation17 + $0x1b0] sm:$0xff]
          %v2188 = vld [vmem:[#allocation17 + $0x1b8] sm:$0xff]
          %v2189 = vld [vmem:[#allocation17 + $0x1c0] sm:$0xff]
          %v2190 = vld [vmem:[#allocation17 + $0x1c8] sm:$0xff]
          %v2191 = vld [vmem:[#allocation17 + $0x1d0] sm:$0xff]
          %v2192 = vld [vmem:[#allocation17 + $0x1d8] sm:$0xff]
          %v2193 = vld [vmem:[#allocation17 + $0x1e0] sm:$0xff]
          %v2194 = vld [vmem:[#allocation17 + $0x1e8] sm:$0xff]
          %v2195 = vld [vmem:[#allocation17 + $0x1f0] sm:$0xff]
          %v2196 = vld [vmem:[#allocation17 + $0x1f8] sm:$0xff]
          %v2197 = vld [vmem:[%s8] sm:$0xf]
          %v2199 = vperm.slane %v2197, 0
          %v2200 = vperm.slane %v2197, 1
          %v2201 = vperm.slane %v2197, 2
          %v2202 = vperm.slane %v2197, 3
          %v2271 = vunpack.c.l.b16 %v2133
          %v2272 = vunpack.c.h.b16 %v2133
          %v2273 = vunpack.c.l.b16 %v2134
          %v2274 = vunpack.c.h.b16 %v2134
          %v2275 = vunpack.c.l.b16 %v2135
          %v2276 = vunpack.c.h.b16 %v2135
          %v2277 = vunpack.c.l.b16 %v2136
          %v2278 = vunpack.c.h.b16 %v2136
          %v2279 = vunpack.c.l.b16 %v2137
          %v2280 = vunpack.c.h.b16 %v2137
          %v2281 = vunpack.c.l.b16 %v2138
          %v2282 = vunpack.c.h.b16 %v2138
          %v2283 = vunpack.c.l.b16 %v2139
          %v2284 = vunpack.c.h.b16 %v2139
          %v2285 = vunpack.c.l.b16 %v2140
          %v2286 = vunpack.c.h.b16 %v2140
          %v2287 = vunpack.c.l.b16 %v2141
          %v2288 = vunpack.c.h.b16 %v2141
          %v2289 = vunpack.c.l.b16 %v2142
          %v2290 = vunpack.c.h.b16 %v2142
          %v2291 = vunpack.c.l.b16 %v2143
          %v2292 = vunpack.c.h.b16 %v2143
          %v2293 = vunpack.c.l.b16 %v2144
          %v2294 = vunpack.c.h.b16 %v2144
          %v2295 = vunpack.c.l.b16 %v2145
          %v2296 = vunpack.c.h.b16 %v2145
          %v2297 = vunpack.c.l.b16 %v2146
          %v2298 = vunpack.c.h.b16 %v2146
          %v2299 = vunpack.c.l.b16 %v2147
          %v2300 = vunpack.c.h.b16 %v2147
          %v2301 = vunpack.c.l.b16 %v2148
          %v2302 = vunpack.c.h.b16 %v2148
          %v2303 = vunpack.c.l.b16 %v2149
          %v2304 = vunpack.c.h.b16 %v2149
          %v2305 = vunpack.c.l.b16 %v2150
          %v2306 = vunpack.c.h.b16 %v2150
          %v2307 = vunpack.c.l.b16 %v2151
          %v2308 = vunpack.c.h.b16 %v2151
          %v2309 = vunpack.c.l.b16 %v2152
          %v2310 = vunpack.c.h.b16 %v2152
          %v2311 = vunpack.c.l.b16 %v2153
          %v2312 = vunpack.c.h.b16 %v2153
          %v2313 = vunpack.c.l.b16 %v2154
          %v2314 = vunpack.c.h.b16 %v2154
          %v2315 = vunpack.c.l.b16 %v2155
          %v2316 = vunpack.c.h.b16 %v2155
          %v2317 = vunpack.c.l.b16 %v2156
          %v2318 = vunpack.c.h.b16 %v2156
          %v2319 = vunpack.c.l.b16 %v2157
          %v2320 = vunpack.c.h.b16 %v2157
          %v2321 = vunpack.c.l.b16 %v2158
          %v2322 = vunpack.c.h.b16 %v2158
          %v2323 = vunpack.c.l.b16 %v2159
          %v2324 = vunpack.c.h.b16 %v2159
          %v2325 = vunpack.c.l.b16 %v2160
          %v2326 = vunpack.c.h.b16 %v2160
          %v2327 = vunpack.c.l.b16 %v2161
          %v2328 = vunpack.c.h.b16 %v2161
          %v2329 = vunpack.c.l.b16 %v2162
          %v2330 = vunpack.c.h.b16 %v2162
          %v2331 = vunpack.c.l.b16 %v2163
          %v2332 = vunpack.c.h.b16 %v2163
          %v2333 = vunpack.c.l.b16 %v2164
          %v2334 = vunpack.c.h.b16 %v2164
          %v2335 = vunpack.c.l.b16 %v2165
          %v2336 = vunpack.c.h.b16 %v2165
          %v2337 = vunpack.c.l.b16 %v2166
          %v2338 = vunpack.c.h.b16 %v2166
          %v2339 = vunpack.c.l.b16 %v2167
          %v2340 = vunpack.c.h.b16 %v2167
          %v2341 = vunpack.c.l.b16 %v2168
          %v2342 = vunpack.c.h.b16 %v2168
          %v2343 = vunpack.c.l.b16 %v2169
          %v2344 = vunpack.c.h.b16 %v2169
          %v2345 = vunpack.c.l.b16 %v2170
          %v2346 = vunpack.c.h.b16 %v2170
          %v2347 = vunpack.c.l.b16 %v2171
          %v2348 = vunpack.c.h.b16 %v2171
          %v2349 = vunpack.c.l.b16 %v2172
          %v2350 = vunpack.c.h.b16 %v2172
          %v2351 = vunpack.c.l.b16 %v2173
          %v2352 = vunpack.c.h.b16 %v2173
          %v2353 = vunpack.c.l.b16 %v2174
          %v2354 = vunpack.c.h.b16 %v2174
          %v2355 = vunpack.c.l.b16 %v2175
          %v2356 = vunpack.c.h.b16 %v2175
          %v2357 = vunpack.c.l.b16 %v2176
          %v2358 = vunpack.c.h.b16 %v2176
          %v2359 = vunpack.c.l.b16 %v2177
          %v2360 = vunpack.c.h.b16 %v2177
          %v2361 = vunpack.c.l.b16 %v2178
          %v2362 = vunpack.c.h.b16 %v2178
          %v2363 = vunpack.c.l.b16 %v2179
          %v2364 = vunpack.c.h.b16 %v2179
          %v2365 = vunpack.c.l.b16 %v2180
          %v2366 = vunpack.c.h.b16 %v2180
          %v2367 = vunpack.c.l.b16 %v2181
          %v2368 = vunpack.c.h.b16 %v2181
          %v2369 = vunpack.c.l.b16 %v2182
          %v2370 = vunpack.c.h.b16 %v2182
          %v2371 = vunpack.c.l.b16 %v2183
          %v2372 = vunpack.c.h.b16 %v2183
          %v2373 = vunpack.c.l.b16 %v2184
          %v2374 = vunpack.c.h.b16 %v2184
          %v2375 = vunpack.c.l.b16 %v2185
          %v2376 = vunpack.c.h.b16 %v2185
          %v2377 = vunpack.c.l.b16 %v2186
          %v2378 = vunpack.c.h.b16 %v2186
          %v2379 = vunpack.c.l.b16 %v2187
          %v2380 = vunpack.c.h.b16 %v2187
          %v2381 = vunpack.c.l.b16 %v2188
          %v2382 = vunpack.c.h.b16 %v2188
          %v2383 = vunpack.c.l.b16 %v2189
          %v2384 = vunpack.c.h.b16 %v2189
          %v2385 = vunpack.c.l.b16 %v2190
          %v2386 = vunpack.c.h.b16 %v2190
          %v2387 = vunpack.c.l.b16 %v2191
          %v2388 = vunpack.c.h.b16 %v2191
          %v2389 = vunpack.c.l.b16 %v2192
          %v2390 = vunpack.c.h.b16 %v2192
          %v2391 = vunpack.c.l.b16 %v2193
          %v2392 = vunpack.c.h.b16 %v2193
          %v2393 = vunpack.c.l.b16 %v2194
          %v2394 = vunpack.c.h.b16 %v2194
          %v2395 = vunpack.c.l.b16 %v2195
          %v2396 = vunpack.c.h.b16 %v2195
          %v2397 = vunpack.c.l.b16 %v2196
          %v2398 = vunpack.c.h.b16 %v2196
          %v2399 = vpack.c.b16 %v2275, %v2271
          %v2400 = vpack.c.b16 %v2276, %v2272
          %v2401 = vpack.c.b16 %v2277, %v2273
          %v2402 = vpack.c.b16 %v2278, %v2274
          %v2403 = vpack.c.b16 %v2283, %v2279
          %v2404 = vpack.c.b16 %v2284, %v2280
          %v2405 = vpack.c.b16 %v2285, %v2281
          %v2406 = vpack.c.b16 %v2286, %v2282
          %v2407 = vpack.c.b16 %v2291, %v2287
          %v2408 = vpack.c.b16 %v2292, %v2288
          %v2409 = vpack.c.b16 %v2293, %v2289
          %v2410 = vpack.c.b16 %v2294, %v2290
          %v2411 = vpack.c.b16 %v2299, %v2295
          %v2412 = vpack.c.b16 %v2300, %v2296
          %v2413 = vpack.c.b16 %v2301, %v2297
          %v2414 = vpack.c.b16 %v2302, %v2298
          %v2415 = vpack.c.b16 %v2307, %v2303
          %v2416 = vpack.c.b16 %v2308, %v2304
          %v2417 = vpack.c.b16 %v2309, %v2305
          %v2418 = vpack.c.b16 %v2310, %v2306
          %v2419 = vpack.c.b16 %v2315, %v2311
          %v2420 = vpack.c.b16 %v2316, %v2312
          %v2421 = vpack.c.b16 %v2317, %v2313
          %v2422 = vpack.c.b16 %v2318, %v2314
          %v2423 = vpack.c.b16 %v2323, %v2319
          %v2424 = vpack.c.b16 %v2324, %v2320
          %v2425 = vpack.c.b16 %v2325, %v2321
          %v2426 = vpack.c.b16 %v2326, %v2322
          %v2427 = vpack.c.b16 %v2331, %v2327
          %v2428 = vpack.c.b16 %v2332, %v2328
          %v2429 = vpack.c.b16 %v2333, %v2329
          %v2430 = vpack.c.b16 %v2334, %v2330
          %v2431 = vpack.c.b16 %v2339, %v2335
          %v2432 = vpack.c.b16 %v2340, %v2336
          %v2433 = vpack.c.b16 %v2341, %v2337
          %v2434 = vpack.c.b16 %v2342, %v2338
          %v2435 = vpack.c.b16 %v2347, %v2343
          %v2436 = vpack.c.b16 %v2348, %v2344
          %v2437 = vpack.c.b16 %v2349, %v2345
          %v2438 = vpack.c.b16 %v2350, %v2346
          %v2439 = vpack.c.b16 %v2355, %v2351
          %v2440 = vpack.c.b16 %v2356, %v2352
          %v2441 = vpack.c.b16 %v2357, %v2353
          %v2442 = vpack.c.b16 %v2358, %v2354
          %v2443 = vpack.c.b16 %v2363, %v2359
          %v2444 = vpack.c.b16 %v2364, %v2360
          %v2445 = vpack.c.b16 %v2365, %v2361
          %v2446 = vpack.c.b16 %v2366, %v2362
          %v2447 = vpack.c.b16 %v2371, %v2367
          %v2448 = vpack.c.b16 %v2372, %v2368
          %v2449 = vpack.c.b16 %v2373, %v2369
          %v2450 = vpack.c.b16 %v2374, %v2370
          %v2451 = vpack.c.b16 %v2379, %v2375
          %v2452 = vpack.c.b16 %v2380, %v2376
          %v2453 = vpack.c.b16 %v2381, %v2377
          %v2454 = vpack.c.b16 %v2382, %v2378
          %v2455 = vpack.c.b16 %v2387, %v2383
          %v2456 = vpack.c.b16 %v2388, %v2384
          %v2457 = vpack.c.b16 %v2389, %v2385
          %v2458 = vpack.c.b16 %v2390, %v2386
          %v2459 = vpack.c.b16 %v2395, %v2391
          %v2460 = vpack.c.b16 %v2396, %v2392
          %v2461 = vpack.c.b16 %v2397, %v2393
          %v2462 = vpack.c.b16 %v2398, %v2394
          %2527 = vmatpush.bf16.msra.mxu0 %v2427
          %2528 = vmatpush.bf16.msra.mxu0 %v2423
          %2529 = vmatpush.bf16.msra.mxu0 %v2419
          %2530 = vmatpush.bf16.msra.mxu0 %v2415
          %2531 = vmatpush.bf16.msra.mxu0 %v2411
          %2532 = vmatpush.bf16.msra.mxu0 %v2407
          %2533 = vmatpush.bf16.msra.mxu0 %v2403
          %2534 = vmatpush.bf16.msra.mxu0 %v2399
          %2535 = vmatmul.bf16.gmra.mxu0 %v2129
          %v2536 = vpop.f32.mrf.mxu0
          %v2537 = vadd.f32 %v2199, %v2536
          %v2538 = vpop.f32.mrf.mxu0
          %v2539 = vadd.f32 %v2199, %v2538
          %2540 = vmatmul.bf16.gmra.mxu0 %v2131
          %v2541 = vpop.f32.mrf.mxu0
          %v2542 = vadd.f32 %v2199, %v2541
          %v2543 = vpop.f32.mrf.mxu0
          %v2544 = vadd.f32 %v2199, %v2543
          %2545 = vdwg.mxu0
          %2546 = vmatpush.bf16.msra.mxu0 %v2459
          %2547 = vmatpush.bf16.msra.mxu0 %v2455
          %2548 = vmatpush.bf16.msra.mxu0 %v2451
          %2549 = vmatpush.bf16.msra.mxu0 %v2447
          %2550 = vmatpush.bf16.msra.mxu0 %v2443
          %2551 = vmatpush.bf16.msra.mxu0 %v2439
          %2552 = vmatpush.bf16.msra.mxu0 %v2435
          %2553 = vmatpush.bf16.msra.mxu0 %v2431
          %2554 = vmatmul.bf16.gmra.mxu0 %v2130
          %v2555 = vpop.f32.mrf.mxu0
          %v2556 = vadd.f32 %v2537, %v2555
          %v2557 = vpop.f32.mrf.mxu0
          %v2558 = vadd.f32 %v2539, %v2557
          %2559 = vmatmul.bf16.gmra.mxu0 %v2132
          %v2560 = vpop.f32.mrf.mxu0
          %v2561 = vadd.f32 %v2542, %v2560
          %v2562 = vpop.f32.mrf.mxu0
          %v2563 = vadd.f32 %v2544, %v2562
          %2564 = vdwg.mxu0
          %2565 = vmatpush.bf16.msra.mxu0 %v2428
          %2566 = vmatpush.bf16.msra.mxu0 %v2424
          %2567 = vmatpush.bf16.msra.mxu0 %v2420
          %2568 = vmatpush.bf16.msra.mxu0 %v2416
          %2569 = vmatpush.bf16.msra.mxu0 %v2412
          %2570 = vmatpush.bf16.msra.mxu0 %v2408
          %2571 = vmatpush.bf16.msra.mxu0 %v2404
          %2572 = vmatpush.bf16.msra.mxu0 %v2400
          %2573 = vmatmul.bf16.gmra.mxu0 %v2129
          %v2574 = vpop.f32.mrf.mxu0
          %v2575 = vadd.f32 %v2200, %v2574
          %v2576 = vpop.f32.mrf.mxu0
          %v2577 = vadd.f32 %v2200, %v2576
          %2578 = vmatmul.bf16.gmra.mxu0 %v2131
          %v2579 = vpop.f32.mrf.mxu0
          %v2580 = vadd.f32 %v2200, %v2579
          %v2581 = vpop.f32.mrf.mxu0
          %v2582 = vadd.f32 %v2200, %v2581
          %2583 = vdwg.mxu0
          %2584 = vmatpush.bf16.msra.mxu0 %v2460
          %2585 = vmatpush.bf16.msra.mxu0 %v2456
          %2586 = vmatpush.bf16.msra.mxu0 %v2452
          %2587 = vmatpush.bf16.msra.mxu0 %v2448
          %2588 = vmatpush.bf16.msra.mxu0 %v2444
          %2589 = vmatpush.bf16.msra.mxu0 %v2440
          %2590 = vmatpush.bf16.msra.mxu0 %v2436
          %2591 = vmatpush.bf16.msra.mxu0 %v2432
          %2592 = vmatmul.bf16.gmra.mxu0 %v2130
          %v2593 = vpop.f32.mrf.mxu0
          %v2594 = vadd.f32 %v2575, %v2593
          %v2595 = vpop.f32.mrf.mxu0
          %v2596 = vadd.f32 %v2577, %v2595
          %2597 = vmatmul.bf16.gmra.mxu0 %v2132
          %v2598 = vpop.f32.mrf.mxu0
          %v2599 = vadd.f32 %v2580, %v2598
          %v2600 = vpop.f32.mrf.mxu0
          %v2601 = vadd.f32 %v2582, %v2600
          %2602 = vdwg.mxu0
          %2603 = vmatpush.bf16.msra.mxu0 %v2429
          %2604 = vmatpush.bf16.msra.mxu0 %v2425
          %2605 = vmatpush.bf16.msra.mxu0 %v2421
          %2606 = vmatpush.bf16.msra.mxu0 %v2417
          %2607 = vmatpush.bf16.msra.mxu0 %v2413
          %2608 = vmatpush.bf16.msra.mxu0 %v2409
          %2609 = vmatpush.bf16.msra.mxu0 %v2405
          %2610 = vmatpush.bf16.msra.mxu0 %v2401
          %2611 = vmatmul.bf16.gmra.mxu0 %v2129
          %v2612 = vpop.f32.mrf.mxu0
          %v2613 = vadd.f32 %v2201, %v2612
          %v2614 = vpop.f32.mrf.mxu0
          %v2615 = vadd.f32 %v2201, %v2614
          %2616 = vmatmul.bf16.gmra.mxu0 %v2131
          %v2617 = vpop.f32.mrf.mxu0
          %v2618 = vadd.f32 %v2201, %v2617
          %v2619 = vpop.f32.mrf.mxu0
          %v2620 = vadd.f32 %v2201, %v2619
          %2621 = vdwg.mxu0
          %2622 = vmatpush.bf16.msra.mxu0 %v2461
          %2623 = vmatpush.bf16.msra.mxu0 %v2457
          %2624 = vmatpush.bf16.msra.mxu0 %v2453
          %2625 = vmatpush.bf16.msra.mxu0 %v2449
          %2626 = vmatpush.bf16.msra.mxu0 %v2445
          %2627 = vmatpush.bf16.msra.mxu0 %v2441
          %2628 = vmatpush.bf16.msra.mxu0 %v2437
          %2629 = vmatpush.bf16.msra.mxu0 %v2433
          %2630 = vmatmul.bf16.gmra.mxu0 %v2130
          %v2631 = vpop.f32.mrf.mxu0
          %v2632 = vadd.f32 %v2613, %v2631
          %v2633 = vpop.f32.mrf.mxu0
          %v2634 = vadd.f32 %v2615, %v2633
          %2635 = vmatmul.bf16.gmra.mxu0 %v2132
          %v2636 = vpop.f32.mrf.mxu0
          %v2637 = vadd.f32 %v2618, %v2636
          %v2638 = vpop.f32.mrf.mxu0
          %v2639 = vadd.f32 %v2620, %v2638
          %2640 = vdwg.mxu0
          %2641 = vmatpush.bf16.msra.mxu0 %v2430
          %2642 = vmatpush.bf16.msra.mxu0 %v2426
          %2643 = vmatpush.bf16.msra.mxu0 %v2422
          %2644 = vmatpush.bf16.msra.mxu0 %v2418
          %2645 = vmatpush.bf16.msra.mxu0 %v2414
          %2646 = vmatpush.bf16.msra.mxu0 %v2410
          %2647 = vmatpush.bf16.msra.mxu0 %v2406
          %2648 = vmatpush.bf16.msra.mxu0 %v2402
          %2649 = vmatmul.bf16.gmra.mxu0 %v2129
          %v2650 = vpop.f32.mrf.mxu0
          %v2651 = vadd.f32 %v2202, %v2650
          %v2652 = vpop.f32.mrf.mxu0
          %v2653 = vadd.f32 %v2202, %v2652
          %2654 = vmatmul.bf16.gmra.mxu0 %v2131
          %v2655 = vpop.f32.mrf.mxu0
          %v2656 = vadd.f32 %v2202, %v2655
          %v2657 = vpop.f32.mrf.mxu0
          %v2658 = vadd.f32 %v2202, %v2657
          %2659 = vdwg.mxu0
          %2660 = vmatpush.bf16.msra.mxu0 %v2462
          %2661 = vmatpush.bf16.msra.mxu0 %v2458
          %2662 = vmatpush.bf16.msra.mxu0 %v2454
          %2663 = vmatpush.bf16.msra.mxu0 %v2450
          %2664 = vmatpush.bf16.msra.mxu0 %v2446
          %2665 = vmatpush.bf16.msra.mxu0 %v2442
          %2666 = vmatpush.bf16.msra.mxu0 %v2438
          %2667 = vmatpush.bf16.msra.mxu0 %v2434
          %2668 = vmatmul.bf16.gmra.mxu0 %v2130
          %v2669 = vpop.f32.mrf.mxu0
          %v2670 = vadd.f32 %v2651, %v2669
          %v2671 = vpop.f32.mrf.mxu0
          %v2672 = vadd.f32 %v2653, %v2671
          %2673 = vmatmul.bf16.gmra.mxu0 %v2132
          %v2674 = vpop.f32.mrf.mxu0
          %v2675 = vadd.f32 %v2656, %v2674
          %v2676 = vpop.f32.mrf.mxu0
          %v2677 = vadd.f32 %v2658, %v2676
          %2678 = vdwg.mxu0
          %v2679 = vmax.f32 %v2556, 0.0
          %v2680 = vmax.f32 %v2594, 0.0
          %v2681 = vmax.f32 %v2632, 0.0
          %v2682 = vmax.f32 %v2670, 0.0
          %v2683 = vmax.f32 %v2558, 0.0
          %v2684 = vmax.f32 %v2596, 0.0
          %v2685 = vmax.f32 %v2634, 0.0
          %v2686 = vmax.f32 %v2672, 0.0
          %v2687 = vmax.f32 %v2561, 0.0
          %v2688 = vmax.f32 %v2599, 0.0
          %v2689 = vmax.f32 %v2637, 0.0
          %v2690 = vmax.f32 %v2675, 0.0
          %v2691 = vmax.f32 %v2563, 0.0
          %v2692 = vmax.f32 %v2601, 0.0
          %v2693 = vmax.f32 %v2639, 0.0
          %v2694 = vmax.f32 %v2677, 0.0
          %v2695 = vpack.c.bf16 %v2683, %v2679
          %v2696 = vpack.c.bf16 %v2684, %v2680
          %v2697 = vpack.c.bf16 %v2685, %v2681
          %v2698 = vpack.c.bf16 %v2686, %v2682
          %v2699 = vpack.c.bf16 %v2691, %v2687
          %v2700 = vpack.c.bf16 %v2692, %v2688
          %v2701 = vpack.c.bf16 %v2693, %v2689
          %v2702 = vpack.c.bf16 %v2694, %v2690
          %v2703 = vld [vmem:[#allocation18] sm:$0xff]
          %v2704 = vld [vmem:[#allocation18 + $0x8] sm:$0xff]
          %v2705 = vld [vmem:[#allocation18 + $0x10] sm:$0xff]
          %v2706 = vld [vmem:[#allocation18 + $0x18] sm:$0xff]
          %v2707 = vld [vmem:[#allocation18 + $0x20] sm:$0xff]
          %v2708 = vld [vmem:[#allocation18 + $0x28] sm:$0xff]
          %v2709 = vld [vmem:[#allocation18 + $0x30] sm:$0xff]
          %v2710 = vld [vmem:[#allocation18 + $0x38] sm:$0xff]
          %v2711 = vld [vmem:[#allocation18 + $0x40] sm:$0xff]
          %v2712 = vld [vmem:[#allocation18 + $0x48] sm:$0xff]
          %v2713 = vld [vmem:[#allocation18 + $0x50] sm:$0xff]
          %v2714 = vld [vmem:[#allocation18 + $0x58] sm:$0xff]
          %v2715 = vld [vmem:[#allocation18 + $0x60] sm:$0xff]
          %v2716 = vld [vmem:[#allocation18 + $0x68] sm:$0xff]
          %v2717 = vld [vmem:[#allocation18 + $0x70] sm:$0xff]
          %v2718 = vld [vmem:[#allocation18 + $0x78] sm:$0xff]
          %v2719 = vld [vmem:[#allocation18 + $0x80] sm:$0xff]
          %v2720 = vld [vmem:[#allocation18 + $0x88] sm:$0xff]
          %v2721 = vld [vmem:[#allocation18 + $0x90] sm:$0xff]
          %v2722 = vld [vmem:[#allocation18 + $0x98] sm:$0xff]
          %v2723 = vld [vmem:[#allocation18 + $0xa0] sm:$0xff]
          %v2724 = vld [vmem:[#allocation18 + $0xa8] sm:$0xff]
          %v2725 = vld [vmem:[#allocation18 + $0xb0] sm:$0xff]
          %v2726 = vld [vmem:[#allocation18 + $0xb8] sm:$0xff]
          %v2727 = vld [vmem:[#allocation18 + $0xc0] sm:$0xff]
          %v2728 = vld [vmem:[#allocation18 + $0xc8] sm:$0xff]
          %v2729 = vld [vmem:[#allocation18 + $0xd0] sm:$0xff]
          %v2730 = vld [vmem:[#allocation18 + $0xd8] sm:$0xff]
          %v2731 = vld [vmem:[#allocation18 + $0xe0] sm:$0xff]
          %v2732 = vld [vmem:[#allocation18 + $0xe8] sm:$0xff]
          %v2733 = vld [vmem:[#allocation18 + $0xf0] sm:$0xff]
          %v2734 = vld [vmem:[#allocation18 + $0xf8] sm:$0xff]
          %v2735 = vld [vmem:[#allocation18 + $0x100] sm:$0xff]
          %v2736 = vld [vmem:[#allocation18 + $0x108] sm:$0xff]
          %v2737 = vld [vmem:[#allocation18 + $0x110] sm:$0xff]
          %v2738 = vld [vmem:[#allocation18 + $0x118] sm:$0xff]
          %v2739 = vld [vmem:[#allocation18 + $0x120] sm:$0xff]
          %v2740 = vld [vmem:[#allocation18 + $0x128] sm:$0xff]
          %v2741 = vld [vmem:[#allocation18 + $0x130] sm:$0xff]
          %v2742 = vld [vmem:[#allocation18 + $0x138] sm:$0xff]
          %v2743 = vld [vmem:[#allocation18 + $0x140] sm:$0xff]
          %v2744 = vld [vmem:[#allocation18 + $0x148] sm:$0xff]
          %v2745 = vld [vmem:[#allocation18 + $0x150] sm:$0xff]
          %v2746 = vld [vmem:[#allocation18 + $0x158] sm:$0xff]
          %v2747 = vld [vmem:[#allocation18 + $0x160] sm:$0xff]
          %v2748 = vld [vmem:[#allocation18 + $0x168] sm:$0xff]
          %v2749 = vld [vmem:[#allocation18 + $0x170] sm:$0xff]
          %v2750 = vld [vmem:[#allocation18 + $0x178] sm:$0xff]
          %v2751 = vld [vmem:[#allocation18 + $0x180] sm:$0xff]
          %v2752 = vld [vmem:[#allocation18 + $0x188] sm:$0xff]
          %v2753 = vld [vmem:[#allocation18 + $0x190] sm:$0xff]
          %v2754 = vld [vmem:[#allocation18 + $0x198] sm:$0xff]
          %v2755 = vld [vmem:[#allocation18 + $0x1a0] sm:$0xff]
          %v2756 = vld [vmem:[#allocation18 + $0x1a8] sm:$0xff]
          %v2757 = vld [vmem:[#allocation18 + $0x1b0] sm:$0xff]
          %v2758 = vld [vmem:[#allocation18 + $0x1b8] sm:$0xff]
          %v2759 = vld [vmem:[#allocation18 + $0x1c0] sm:$0xff]
          %v2760 = vld [vmem:[#allocation18 + $0x1c8] sm:$0xff]
          %v2761 = vld [vmem:[#allocation18 + $0x1d0] sm:$0xff]
          %v2762 = vld [vmem:[#allocation18 + $0x1d8] sm:$0xff]
          %v2763 = vld [vmem:[#allocation18 + $0x1e0] sm:$0xff]
          %v2764 = vld [vmem:[#allocation18 + $0x1e8] sm:$0xff]
          %v2765 = vld [vmem:[#allocation18 + $0x1f0] sm:$0xff]
          %v2766 = vld [vmem:[#allocation18 + $0x1f8] sm:$0xff]
          %v2767 = vld [vmem:[%s10] sm:$0x3]
          %v2769 = vperm.slane %v2767, 0
          %v2770 = vperm.slane %v2767, 1
          %v2837 = vunpack.c.l.b16 %v2703
          %v2838 = vunpack.c.h.b16 %v2703
          %v2839 = vunpack.c.l.b16 %v2704
          %v2840 = vunpack.c.h.b16 %v2704
          %v2841 = vunpack.c.l.b16 %v2705
          %v2842 = vunpack.c.h.b16 %v2705
          %v2843 = vunpack.c.l.b16 %v2706
          %v2844 = vunpack.c.h.b16 %v2706
          %v2845 = vunpack.c.l.b16 %v2707
          %v2846 = vunpack.c.h.b16 %v2707
          %v2847 = vunpack.c.l.b16 %v2708
          %v2848 = vunpack.c.h.b16 %v2708
          %v2849 = vunpack.c.l.b16 %v2709
          %v2850 = vunpack.c.h.b16 %v2709
          %v2851 = vunpack.c.l.b16 %v2710
          %v2852 = vunpack.c.h.b16 %v2710
          %v2853 = vunpack.c.l.b16 %v2711
          %v2854 = vunpack.c.h.b16 %v2711
          %v2855 = vunpack.c.l.b16 %v2712
          %v2856 = vunpack.c.h.b16 %v2712
          %v2857 = vunpack.c.l.b16 %v2713
          %v2858 = vunpack.c.h.b16 %v2713
          %v2859 = vunpack.c.l.b16 %v2714
          %v2860 = vunpack.c.h.b16 %v2714
          %v2861 = vunpack.c.l.b16 %v2715
          %v2862 = vunpack.c.h.b16 %v2715
          %v2863 = vunpack.c.l.b16 %v2716
          %v2864 = vunpack.c.h.b16 %v2716
          %v2865 = vunpack.c.l.b16 %v2717
          %v2866 = vunpack.c.h.b16 %v2717
          %v2867 = vunpack.c.l.b16 %v2718
          %v2868 = vunpack.c.h.b16 %v2718
          %v2869 = vunpack.c.l.b16 %v2719
          %v2870 = vunpack.c.h.b16 %v2719
          %v2871 = vunpack.c.l.b16 %v2720
          %v2872 = vunpack.c.h.b16 %v2720
          %v2873 = vunpack.c.l.b16 %v2721
          %v2874 = vunpack.c.h.b16 %v2721
          %v2875 = vunpack.c.l.b16 %v2722
          %v2876 = vunpack.c.h.b16 %v2722
          %v2877 = vunpack.c.l.b16 %v2723
          %v2878 = vunpack.c.h.b16 %v2723
          %v2879 = vunpack.c.l.b16 %v2724
          %v2880 = vunpack.c.h.b16 %v2724
          %v2881 = vunpack.c.l.b16 %v2725
          %v2882 = vunpack.c.h.b16 %v2725
          %v2883 = vunpack.c.l.b16 %v2726
          %v2884 = vunpack.c.h.b16 %v2726
          %v2885 = vunpack.c.l.b16 %v2727
          %v2886 = vunpack.c.h.b16 %v2727
          %v2887 = vunpack.c.l.b16 %v2728
          %v2888 = vunpack.c.h.b16 %v2728
          %v2889 = vunpack.c.l.b16 %v2729
          %v2890 = vunpack.c.h.b16 %v2729
          %v2891 = vunpack.c.l.b16 %v2730
          %v2892 = vunpack.c.h.b16 %v2730
          %v2893 = vunpack.c.l.b16 %v2731
          %v2894 = vunpack.c.h.b16 %v2731
          %v2895 = vunpack.c.l.b16 %v2732
          %v2896 = vunpack.c.h.b16 %v2732
          %v2897 = vunpack.c.l.b16 %v2733
          %v2898 = vunpack.c.h.b16 %v2733
          %v2899 = vunpack.c.l.b16 %v2734
          %v2900 = vunpack.c.h.b16 %v2734
          %v2901 = vunpack.c.l.b16 %v2735
          %v2902 = vunpack.c.h.b16 %v2735
          %v2903 = vunpack.c.l.b16 %v2736
          %v2904 = vunpack.c.h.b16 %v2736
          %v2905 = vunpack.c.l.b16 %v2737
          %v2906 = vunpack.c.h.b16 %v2737
          %v2907 = vunpack.c.l.b16 %v2738
          %v2908 = vunpack.c.h.b16 %v2738
          %v2909 = vunpack.c.l.b16 %v2739
          %v2910 = vunpack.c.h.b16 %v2739
          %v2911 = vunpack.c.l.b16 %v2740
          %v2912 = vunpack.c.h.b16 %v2740
          %v2913 = vunpack.c.l.b16 %v2741
          %v2914 = vunpack.c.h.b16 %v2741
          %v2915 = vunpack.c.l.b16 %v2742
          %v2916 = vunpack.c.h.b16 %v2742
          %v2917 = vunpack.c.l.b16 %v2743
          %v2918 = vunpack.c.h.b16 %v2743
          %v2919 = vunpack.c.l.b16 %v2744
          %v2920 = vunpack.c.h.b16 %v2744
          %v2921 = vunpack.c.l.b16 %v2745
          %v2922 = vunpack.c.h.b16 %v2745
          %v2923 = vunpack.c.l.b16 %v2746
          %v2924 = vunpack.c.h.b16 %v2746
          %v2925 = vunpack.c.l.b16 %v2747
          %v2926 = vunpack.c.h.b16 %v2747
          %v2927 = vunpack.c.l.b16 %v2748
          %v2928 = vunpack.c.h.b16 %v2748
          %v2929 = vunpack.c.l.b16 %v2749
          %v2930 = vunpack.c.h.b16 %v2749
          %v2931 = vunpack.c.l.b16 %v2750
          %v2932 = vunpack.c.h.b16 %v2750
          %v2933 = vunpack.c.l.b16 %v2751
          %v2934 = vunpack.c.h.b16 %v2751
          %v2935 = vunpack.c.l.b16 %v2752
          %v2936 = vunpack.c.h.b16 %v2752
          %v2937 = vunpack.c.l.b16 %v2753
          %v2938 = vunpack.c.h.b16 %v2753
          %v2939 = vunpack.c.l.b16 %v2754
          %v2940 = vunpack.c.h.b16 %v2754
          %v2941 = vunpack.c.l.b16 %v2755
          %v2942 = vunpack.c.h.b16 %v2755
          %v2943 = vunpack.c.l.b16 %v2756
          %v2944 = vunpack.c.h.b16 %v2756
          %v2945 = vunpack.c.l.b16 %v2757
          %v2946 = vunpack.c.h.b16 %v2757
          %v2947 = vunpack.c.l.b16 %v2758
          %v2948 = vunpack.c.h.b16 %v2758
          %v2949 = vunpack.c.l.b16 %v2759
          %v2950 = vunpack.c.h.b16 %v2759
          %v2951 = vunpack.c.l.b16 %v2760
          %v2952 = vunpack.c.h.b16 %v2760
          %v2953 = vunpack.c.l.b16 %v2761
          %v2954 = vunpack.c.h.b16 %v2761
          %v2955 = vunpack.c.l.b16 %v2762
          %v2956 = vunpack.c.h.b16 %v2762
          %v2957 = vunpack.c.l.b16 %v2763
          %v2958 = vunpack.c.h.b16 %v2763
          %v2959 = vunpack.c.l.b16 %v2764
          %v2960 = vunpack.c.h.b16 %v2764
          %v2961 = vunpack.c.l.b16 %v2765
          %v2962 = vunpack.c.h.b16 %v2765
          %v2963 = vunpack.c.l.b16 %v2766
          %v2964 = vunpack.c.h.b16 %v2766
          %v2965 = vpack.c.b16 %v2839, %v2837
          %v2966 = vpack.c.b16 %v2840, %v2838
          %v2967 = vpack.c.b16 %v2843, %v2841
          %v2968 = vpack.c.b16 %v2844, %v2842
          %v2969 = vpack.c.b16 %v2847, %v2845
          %v2970 = vpack.c.b16 %v2848, %v2846
          %v2971 = vpack.c.b16 %v2851, %v2849
          %v2972 = vpack.c.b16 %v2852, %v2850
          %v2973 = vpack.c.b16 %v2855, %v2853
          %v2974 = vpack.c.b16 %v2856, %v2854
          %v2975 = vpack.c.b16 %v2859, %v2857
          %v2976 = vpack.c.b16 %v2860, %v2858
          %v2977 = vpack.c.b16 %v2863, %v2861
          %v2978 = vpack.c.b16 %v2864, %v2862
          %v2979 = vpack.c.b16 %v2867, %v2865
          %v2980 = vpack.c.b16 %v2868, %v2866
          %v2981 = vpack.c.b16 %v2871, %v2869
          %v2982 = vpack.c.b16 %v2872, %v2870
          %v2983 = vpack.c.b16 %v2875, %v2873
          %v2984 = vpack.c.b16 %v2876, %v2874
          %v2985 = vpack.c.b16 %v2879, %v2877
          %v2986 = vpack.c.b16 %v2880, %v2878
          %v2987 = vpack.c.b16 %v2883, %v2881
          %v2988 = vpack.c.b16 %v2884, %v2882
          %v2989 = vpack.c.b16 %v2887, %v2885
          %v2990 = vpack.c.b16 %v2888, %v2886
          %v2991 = vpack.c.b16 %v2891, %v2889
          %v2992 = vpack.c.b16 %v2892, %v2890
          %v2993 = vpack.c.b16 %v2895, %v2893
          %v2994 = vpack.c.b16 %v2896, %v2894
          %v2995 = vpack.c.b16 %v2899, %v2897
          %v2996 = vpack.c.b16 %v2900, %v2898
          %v2997 = vpack.c.b16 %v2903, %v2901
          %v2998 = vpack.c.b16 %v2904, %v2902
          %v2999 = vpack.c.b16 %v2907, %v2905
          %v3000 = vpack.c.b16 %v2908, %v2906
          %v3001 = vpack.c.b16 %v2911, %v2909
          %v3002 = vpack.c.b16 %v2912, %v2910
          %v3003 = vpack.c.b16 %v2915, %v2913
          %v3004 = vpack.c.b16 %v2916, %v2914
          %v3005 = vpack.c.b16 %v2919, %v2917
          %v3006 = vpack.c.b16 %v2920, %v2918
          %v3007 = vpack.c.b16 %v2923, %v2921
          %v3008 = vpack.c.b16 %v2924, %v2922
          %v3009 = vpack.c.b16 %v2927, %v2925
          %v3010 = vpack.c.b16 %v2928, %v2926
          %v3011 = vpack.c.b16 %v2931, %v2929
          %v3012 = vpack.c.b16 %v2932, %v2930
          %v3013 = vpack.c.b16 %v2935, %v2933
          %v3014 = vpack.c.b16 %v2936, %v2934
          %v3015 = vpack.c.b16 %v2939, %v2937
          %v3016 = vpack.c.b16 %v2940, %v2938
          %v3017 = vpack.c.b16 %v2943, %v2941
          %v3018 = vpack.c.b16 %v2944, %v2942
          %v3019 = vpack.c.b16 %v2947, %v2945
          %v3020 = vpack.c.b16 %v2948, %v2946
          %v3021 = vpack.c.b16 %v2951, %v2949
          %v3022 = vpack.c.b16 %v2952, %v2950
          %v3023 = vpack.c.b16 %v2955, %v2953
          %v3024 = vpack.c.b16 %v2956, %v2954
          %v3025 = vpack.c.b16 %v2959, %v2957
          %v3026 = vpack.c.b16 %v2960, %v2958
          %v3027 = vpack.c.b16 %v2963, %v2961
          %v3028 = vpack.c.b16 %v2964, %v2962
          %3093 = vmatpush.bf16.msra.mxu0 %v2979
          %3094 = vmatpush.bf16.msra.mxu0 %v2977
          %3095 = vmatpush.bf16.msra.mxu0 %v2975
          %3096 = vmatpush.bf16.msra.mxu0 %v2973
          %3097 = vmatpush.bf16.msra.mxu0 %v2971
          %3098 = vmatpush.bf16.msra.mxu0 %v2969
          %3099 = vmatpush.bf16.msra.mxu0 %v2967
          %3100 = vmatpush.bf16.msra.mxu0 %v2965
          %3101 = vmatmul.bf16.gmra.mxu0 %v2695
          %v3102 = vpop.f32.mrf.mxu0
          %v3103 = vadd.f32 %v2769, %v3102
          %v3104 = vpop.f32.mrf.mxu0
          %v3105 = vadd.f32 %v2769, %v3104
          %3106 = vmatmul.bf16.gmra.mxu0 %v2699
          %v3107 = vpop.f32.mrf.mxu0
          %v3108 = vadd.f32 %v2769, %v3107
          %v3109 = vpop.f32.mrf.mxu0
          %v3110 = vadd.f32 %v2769, %v3109
          %3111 = vdwg.mxu0
          %3112 = vmatpush.bf16.msra.mxu0 %v2995
          %3113 = vmatpush.bf16.msra.mxu0 %v2993
          %3114 = vmatpush.bf16.msra.mxu0 %v2991
          %3115 = vmatpush.bf16.msra.mxu0 %v2989
          %3116 = vmatpush.bf16.msra.mxu0 %v2987
          %3117 = vmatpush.bf16.msra.mxu0 %v2985
          %3118 = vmatpush.bf16.msra.mxu0 %v2983
          %3119 = vmatpush.bf16.msra.mxu0 %v2981
          %3120 = vmatmul.bf16.gmra.mxu0 %v2696
          %v3121 = vpop.f32.mrf.mxu0
          %v3122 = vadd.f32 %v3103, %v3121
          %v3123 = vpop.f32.mrf.mxu0
          %v3124 = vadd.f32 %v3105, %v3123
          %3125 = vmatmul.bf16.gmra.mxu0 %v2700
          %v3126 = vpop.f32.mrf.mxu0
          %v3127 = vadd.f32 %v3108, %v3126
          %v3128 = vpop.f32.mrf.mxu0
          %v3129 = vadd.f32 %v3110, %v3128
          %3130 = vdwg.mxu0
          %3131 = vmatpush.bf16.msra.mxu0 %v3011
          %3132 = vmatpush.bf16.msra.mxu0 %v3009
          %3133 = vmatpush.bf16.msra.mxu0 %v3007
          %3134 = vmatpush.bf16.msra.mxu0 %v3005
          %3135 = vmatpush.bf16.msra.mxu0 %v3003
          %3136 = vmatpush.bf16.msra.mxu0 %v3001
          %3137 = vmatpush.bf16.msra.mxu0 %v2999
          %3138 = vmatpush.bf16.msra.mxu0 %v2997
          %3139 = vmatmul.bf16.gmra.mxu0 %v2697
          %v3140 = vpop.f32.mrf.mxu0
          %v3141 = vadd.f32 %v3122, %v3140
          %v3142 = vpop.f32.mrf.mxu0
          %v3143 = vadd.f32 %v3124, %v3142
          %3144 = vmatmul.bf16.gmra.mxu0 %v2701
          %v3145 = vpop.f32.mrf.mxu0
          %v3146 = vadd.f32 %v3127, %v3145
          %v3147 = vpop.f32.mrf.mxu0
          %v3148 = vadd.f32 %v3129, %v3147
          %3149 = vdwg.mxu0
          %3150 = vmatpush.bf16.msra.mxu0 %v3027
          %3151 = vmatpush.bf16.msra.mxu0 %v3025
          %3152 = vmatpush.bf16.msra.mxu0 %v3023
          %3153 = vmatpush.bf16.msra.mxu0 %v3021
          %3154 = vmatpush.bf16.msra.mxu0 %v3019
          %3155 = vmatpush.bf16.msra.mxu0 %v3017
          %3156 = vmatpush.bf16.msra.mxu0 %v3015
          %3157 = vmatpush.bf16.msra.mxu0 %v3013
          %3158 = vmatmul.bf16.gmra.mxu0 %v2698
          %v3159 = vpop.f32.mrf.mxu0
          %v3160 = vadd.f32 %v3141, %v3159
          %v3161 = vpop.f32.mrf.mxu0
          %v3162 = vadd.f32 %v3143, %v3161
          %3163 = vmatmul.bf16.gmra.mxu0 %v2702
          %v3164 = vpop.f32.mrf.mxu0
          %v3165 = vadd.f32 %v3146, %v3164
          %v3166 = vpop.f32.mrf.mxu0
          %v3167 = vadd.f32 %v3148, %v3166
          %3168 = vdwg.mxu0
          %3169 = vmatpush.bf16.msra.mxu0 %v2980
          %3170 = vmatpush.bf16.msra.mxu0 %v2978
          %3171 = vmatpush.bf16.msra.mxu0 %v2976
          %3172 = vmatpush.bf16.msra.mxu0 %v2974
          %3173 = vmatpush.bf16.msra.mxu0 %v2972
          %3174 = vmatpush.bf16.msra.mxu0 %v2970
          %3175 = vmatpush.bf16.msra.mxu0 %v2968
          %3176 = vmatpush.bf16.msra.mxu0 %v2966
          %3177 = vmatmul.bf16.gmra.mxu0 %v2695
          %v3178 = vpop.f32.mrf.mxu0
          %v3179 = vadd.f32 %v2770, %v3178
          %v3180 = vpop.f32.mrf.mxu0
          %v3181 = vadd.f32 %v2770, %v3180
          %3182 = vmatmul.bf16.gmra.mxu0 %v2699
          %v3183 = vpop.f32.mrf.mxu0
          %v3184 = vadd.f32 %v2770, %v3183
          %v3185 = vpop.f32.mrf.mxu0
          %v3186 = vadd.f32 %v2770, %v3185
          %3187 = vdwg.mxu0
          %3188 = vmatpush.bf16.msra.mxu0 %v2996
          %3189 = vmatpush.bf16.msra.mxu0 %v2994
          %3190 = vmatpush.bf16.msra.mxu0 %v2992
          %3191 = vmatpush.bf16.msra.mxu0 %v2990
          %3192 = vmatpush.bf16.msra.mxu0 %v2988
          %3193 = vmatpush.bf16.msra.mxu0 %v2986
          %3194 = vmatpush.bf16.msra.mxu0 %v2984
          %3195 = vmatpush.bf16.msra.mxu0 %v2982
          %3196 = vmatmul.bf16.gmra.mxu0 %v2696
          %v3197 = vpop.f32.mrf.mxu0
          %v3198 = vadd.f32 %v3179, %v3197
          %v3199 = vpop.f32.mrf.mxu0
          %v3200 = vadd.f32 %v3181, %v3199
          %3201 = vmatmul.bf16.gmra.mxu0 %v2700
          %v3202 = vpop.f32.mrf.mxu0
          %v3203 = vadd.f32 %v3184, %v3202
          %v3204 = vpop.f32.mrf.mxu0
          %v3205 = vadd.f32 %v3186, %v3204
          %3206 = vdwg.mxu0
          %3207 = vmatpush.bf16.msra.mxu0 %v3012
          %3208 = vmatpush.bf16.msra.mxu0 %v3010
          %3209 = vmatpush.bf16.msra.mxu0 %v3008
          %3210 = vmatpush.bf16.msra.mxu0 %v3006
          %3211 = vmatpush.bf16.msra.mxu0 %v3004
          %3212 = vmatpush.bf16.msra.mxu0 %v3002
          %3213 = vmatpush.bf16.msra.mxu0 %v3000
          %3214 = vmatpush.bf16.msra.mxu0 %v2998
          %3215 = vmatmul.bf16.gmra.mxu0 %v2697
          %v3216 = vpop.f32.mrf.mxu0
          %v3217 = vadd.f32 %v3198, %v3216
          %v3218 = vpop.f32.mrf.mxu0
          %v3219 = vadd.f32 %v3200, %v3218
          %3220 = vmatmul.bf16.gmra.mxu0 %v2701
          %v3221 = vpop.f32.mrf.mxu0
          %v3222 = vadd.f32 %v3203, %v3221
          %v3223 = vpop.f32.mrf.mxu0
          %v3224 = vadd.f32 %v3205, %v3223
          %3225 = vdwg.mxu0
          %3226 = vmatpush.bf16.msra.mxu0 %v3028
          %3227 = vmatpush.bf16.msra.mxu0 %v3026
          %3228 = vmatpush.bf16.msra.mxu0 %v3024
          %3229 = vmatpush.bf16.msra.mxu0 %v3022
          %3230 = vmatpush.bf16.msra.mxu0 %v3020
          %3231 = vmatpush.bf16.msra.mxu0 %v3018
          %3232 = vmatpush.bf16.msra.mxu0 %v3016
          %3233 = vmatpush.bf16.msra.mxu0 %v3014
          %3234 = vmatmul.bf16.gmra.mxu0 %v2698
          %v3235 = vpop.f32.mrf.mxu0
          %v3236 = vadd.f32 %v3217, %v3235
          %v3237 = vpop.f32.mrf.mxu0
          %v3238 = vadd.f32 %v3219, %v3237
          %3239 = vmatmul.bf16.gmra.mxu0 %v2702
          %v3240 = vpop.f32.mrf.mxu0
          %v3241 = vadd.f32 %v3222, %v3240
          %v3242 = vpop.f32.mrf.mxu0
          %v3243 = vadd.f32 %v3224, %v3242
          %3244 = vdwg.mxu0
          %v3245 = vadd.f32 %v2121, %v3160
          %v3246 = vadd.f32 %v2122, %v3236
          %v3247 = vadd.f32 %v2123, %v3162
          %v3248 = vadd.f32 %v2124, %v3238
          %v3249 = vadd.f32 %v2125, %v3165
          %v3250 = vadd.f32 %v2126, %v3241
          %v3251 = vadd.f32 %v2127, %v3167
          %v3252 = vadd.f32 %v2128, %v3243
          %v3253 = vld [vmem:[%s13] sm:$0x3]
          %v3254 = vld [vmem:[#allocation21] sm:$0x3]
          %v3255 = vadd.f32 %v3245, %v3246
          %3256 = vadd.xlane.f32.xlu0 %v3255
          %v3257 = vpop.xlane.xlu0 %3256
          %v3258 = vadd.f32 %v3247, %v3248
          %3259 = vadd.xlane.f32.xlu0 %v3258
          %v3260 = vpop.xlane.xlu0 %3259
          %v3261 = vadd.f32 %v3249, %v3250
          %3262 = vadd.xlane.f32.xlu0 %v3261
          %v3263 = vpop.xlane.xlu0 %3262
          %v3264 = vadd.f32 %v3251, %v3252
          %3265 = vadd.xlane.f32.xlu0 %v3264
          %v3266 = vpop.xlane.xlu0 %3265
          %v3267 = vmul.f32 %v3257, %v2014
          %v3268 = vmul.f32 %v3260, %v2014
          %v3269 = vmul.f32 %v3263, %v2014
          %v3270 = vmul.f32 %v3266, %v2014
          %v3271 = vsub.f32 %v3245, %v3267
          %v3272 = vsub.f32 %v3246, %v3267
          %v3273 = vsub.f32 %v3247, %v3268
          %v3274 = vsub.f32 %v3248, %v3268
          %v3275 = vsub.f32 %v3249, %v3269
          %v3276 = vsub.f32 %v3250, %v3269
          %v3277 = vsub.f32 %v3251, %v3270
          %v3278 = vsub.f32 %v3252, %v3270
          %v3279 = vmul.f32 %v3271, %v3271
          %v3280 = vmul.f32 %v3272, %v3272
          %v3281 = vmul.f32 %v3273, %v3273
          %v3282 = vmul.f32 %v3274, %v3274
          %v3283 = vmul.f32 %v3275, %v3275
          %v3284 = vmul.f32 %v3276, %v3276
          %v3285 = vmul.f32 %v3277, %v3277
          %v3286 = vmul.f32 %v3278, %v3278
          %v3287 = vadd.f32 %v3279, %v3280
          %3288 = vadd.xlane.f32.xlu0 %v3287
          %v3289 = vpop.xlane.xlu0 %3288
          %v3290 = vadd.f32 %v3281, %v3282
          %3291 = vadd.xlane.f32.xlu0 %v3290
          %v3292 = vpop.xlane.xlu0 %3291
          %v3293 = vadd.f32 %v3283, %v3284
          %3294 = vadd.xlane.f32.xlu0 %v3293
          %v3295 = vpop.xlane.xlu0 %3294
          %v3296 = vadd.f32 %v3285, %v3286
          %3297 = vadd.xlane.f32.xlu0 %v3296
          %v3298 = vpop.xlane.xlu0 %3297
          %v3299 = vmul.f32 %v3289, %v2014
          %v3300 = vmul.f32 %v3292, %v2014
          %v3301 = vmul.f32 %v3295, %v2014
          %v3302 = vmul.f32 %v3298, %v2014
          %v3303 = vadd.f32 %v3299, 1e-05
          %v3304 = vadd.f32 %v3300, 1e-05
          %v3305 = vadd.f32 %v3301, 1e-05
          %v3306 = vadd.f32 %v3302, 1e-05
          %v3307 = vrsqrt.pop %v3303
          %v3308 = vmul.f32 %v3307, %v3303
          %v3309 = vmul.f32 %v3308, %v3307
          %v3310 = vmul.f32 0.5, %v3309
          %v3311 = vsub.f32 1.5, %v3310
          %v3312 = vmul.f32 %v3307, %v3311
          %vm3313 = vweird.f32 %v3303
          %vm3314 = vweird.f32 %v3307
          %vm3315 = vmor %vm3313, %vm3314
          %v3316 = vsel %vm3315, %v3307, %v3312
          %v3317 = vrsqrt.pop %v3304
          %v3318 = vmul.f32 %v3317, %v3304
          %v3319 = vmul.f32 %v3318, %v3317
          %v3320 = vmul.f32 0.5, %v3319
          %v3321 = vsub.f32 1.5, %v3320
          %v3322 = vmul.f32 %v3317, %v3321
          %vm3323 = vweird.f32 %v3304
          %vm3324 = vweird.f32 %v3317
          %vm3325 = vmor %vm3323, %vm3324
          %v3326 = vsel %vm3325, %v3317, %v3322
          %v3327 = vrsqrt.pop %v3305
          %v3328 = vmul.f32 %v3327, %v3305
          %v3329 = vmul.f32 %v3328, %v3327
          %v3330 = vmul.f32 0.5, %v3329
          %v3331 = vsub.f32 1.5, %v3330
          %v3332 = vmul.f32 %v3327, %v3331
          %vm3333 = vweird.f32 %v3305
          %vm3334 = vweird.f32 %v3327
          %vm3335 = vmor %vm3333, %vm3334
          %v3336 = vsel %vm3335, %v3327, %v3332
          %v3337 = vrsqrt.pop %v3306
          %v3338 = vmul.f32 %v3337, %v3306
          %v3339 = vmul.f32 %v3338, %v3337
          %v3340 = vmul.f32 0.5, %v3339
          %v3341 = vsub.f32 1.5, %v3340
          %v3342 = vmul.f32 %v3337, %v3341
          %vm3343 = vweird.f32 %v3306
          %vm3344 = vweird.f32 %v3337
          %vm3345 = vmor %vm3343, %vm3344
          %v3346 = vsel %vm3345, %v3337, %v3342
          %v3347 = vmul.f32 %v3271, %v3316
          %v3348 = vmul.f32 %v3272, %v3316
          %v3349 = vmul.f32 %v3273, %v3326
          %v3350 = vmul.f32 %v3274, %v3326
          %v3351 = vmul.f32 %v3275, %v3336
          %v3352 = vmul.f32 %v3276, %v3336
          %v3353 = vmul.f32 %v3277, %v3346
          %v3354 = vmul.f32 %v3278, %v3346
          %v3356 = vperm.slane %v3253, 0
          %v3357 = vperm.slane %v3253, 1
          %v3360 = vmul.f32 %v3347, %v3356
          %v3361 = vmul.f32 %v3348, %v3357
          %v3362 = vmul.f32 %v3349, %v3356
          %v3363 = vmul.f32 %v3350, %v3357
          %v3364 = vmul.f32 %v3351, %v3356
          %v3365 = vmul.f32 %v3352, %v3357
          %v3366 = vmul.f32 %v3353, %v3356
          %v3367 = vmul.f32 %v3354, %v3357
          %v3369 = vperm.slane %v3254, 0
          %v3370 = vperm.slane %v3254, 1
          %v3373 = vadd.f32 %v3360, %v3369
          %v3374 = vadd.f32 %v3361, %v3370
          %v3375 = vadd.f32 %v3362, %v3369
          %v3376 = vadd.f32 %v3363, %v3370
          %v3377 = vadd.f32 %v3364, %v3369
          %v3378 = vadd.f32 %v3365, %v3370
          %v3379 = vadd.f32 %v3366, %v3369
          %v3380 = vadd.f32 %v3367, %v3370
          %3381 = vst [vmem:[%s789] sm:$0xff] %v3373
          %3382 = vst [vmem:[%s789 + $0x8] sm:$0xff] %v3374
          %3383 = vst [vmem:[%s789 + $0x10] sm:$0xff] %v3375
          %3384 = vst [vmem:[%s789 + $0x18] sm:$0xff] %v3376
          %3385 = vst [vmem:[%s789 + $0x20] sm:$0xff] %v3377
          %3386 = vst [vmem:[%s789 + $0x28] sm:$0xff] %v3378
          %3387 = vst [vmem:[%s789 + $0x30] sm:$0xff] %v3379
          %3388 = vst [vmem:[%s789 + $0x38] sm:$0xff] %v3380
        $region128: #{tpu_custom_call.1} parent=79 // pred_fallthru
          _
        %s3389 = sand.u32 %s404, 1
        %s3390 = scalar_lea.sflag [#allocation8], %s3389
        %s3391 = sand.u32 %s404, 1
        %s3392 = smul.addr %s3391, 64
        %s3393 = scalar_lea.vmem [#allocation23], %s3392
        // Predicated region
        $region129: #{tpu_custom_call.1} parent=79 // pred_check
          %p3394 = pneg %p414
        $region130: #{tpu_custom_call.1} parent=79 // pred_check_branch
          %3396 = sbr.rel (%p3394) target = $region132
        $region131: #{tpu_custom_call.1} parent=79 // pred_region
          %s3397 = smul.u32 4, %s45
          %3399 = vsyncadd %s3390, 0
          %s3400 = smul.addr %s3397, 2
          %s3401 = smul.addr %s44, 16
          %s3402 = sadd.s32 %s3400, %s3401
          %s3403 = smul.addr %s3402, 8
          %s3404 = scalar_lea.hbm %s15, %s3403
          %s3405 = sshll.u32 %s3393, 4
          %s3406 = int_to_ptr.vmem [resolvable:$true] %s3405
          %s3407 = sshll.u32 %s3404, 4
          %s3408 = int_to_ptr.hbm [resolvable:$true] %s3407
          %3413 = dma.vmem_to_hbm [thread:$0]  %s3406, 1024, %s3408, %s3390, 256, 256, 16
        $region132: #{tpu_custom_call.1} parent=79 // pred_fallthru
          _
      $region80: #{tpu_custom_call.1} parent=5 // pred_fallthru
        _
      %p3414 = scmp.le.s32.totalorder 2, %s34
      // Predicated region
      $region133: #{tpu_custom_call.1} parent=5 // pred_check
        %p3415 = pneg %p3414
      $region134: #{tpu_custom_call.1} parent=5 // pred_check_branch
        %3417 = sbr.rel (%p3415) target = $region136
      $region135: #{tpu_custom_call.1} parent=5 // pred_region
        %s3418 = ssub.s32 %s34, 2
        // Predicated region
        $region137: #{tpu_custom_call.1} parent=135 // pred_check
          %p3419 = pneg %p420
        $region138: #{tpu_custom_call.1} parent=135 // pred_check_branch
          %3421 = sbr.rel (%p3419) target = $region140
        $region139: #{tpu_custom_call.1} parent=135 // pred_region
          %s3422 = sand.u32 %s405, 1
          %s3423 = scalar_lea.sflag [#allocation8], %s3422
          %s3424 = sand.u32 %s405, 1
          %s3425 = smul.addr %s3424, 64
          %s3426 = scalar_lea.vmem [#allocation23], %s3425
          %3428 = dma.done %s3423, 1024
        $region140: #{tpu_custom_call.1} parent=135 // pred_fallthru
          _
      $region136: #{tpu_custom_call.1} parent=5 // pred_fallthru
        _
    $region6: #{tpu_custom_call.1} parent=1 // loop_footer
      %s38 = sadd.s32 1, %s34
    $region7: #{tpu_custom_call.1} parent=1 // loop_footer_branch
      %33 = sbr.rel target = $region3
    $region8: #{tpu_custom_call.1} parent=1 // loop_exit
      _
    %3429 = vsyncpa [#allocation7], 1
    %s3430 = scalar_lea.sflag [#allocation7], 1
    %3431 = vsyncpa %s3430, 1
    %3432 = vsyncpa [#allocation10], 1
    %s3433 = scalar_lea.sflag [#allocation10], 1
    %3434 = vsyncpa %s3433, 1
    %3435 = vsyncpa [#allocation13], 1
    %3436 = vsyncpa [#allocation16], 1
    %3437 = vsyncpa [#allocation19], 1
    %3438 = vsyncpa [#allocation22], 1
    %3439 = vsyncpa [#allocation8], 1
    %s3440 = scalar_lea.sflag [#allocation8], 1
    %3441 = vsyncpa %s3440, 1

</llo_original>
